<compile_context>
chip_gen: v7x
topology: tpu7x:2x2x1
jax: 0.10.0
libtpu: 0.0.40
codegen_flags: <defaults>
</compile_context>

<pallas_src>
import jax
import jax.numpy as jnp
from jax.experimental import pallas as pl
from jax.experimental.pallas import tpu as pltpu

KERNEL_SIZE = 11
PAD = KERNEL_SIZE // 2  # int(11 / 2) == 5, as in the PyTorch module


def _toeplitz_weights(w, b, W, dtype):
    """Repack Conv2d weights into one fused banded-matmul operand per layer.

    Horizontal zero padding is folded into the matrix, so the activation
    operand is the UNPADDED-width (B*H, C_in*W) slab:

      T[(ky*C_in + c)*W + p, o*W + x] = w[o, c, ky, p - x + pad]
                                        if 0 <= p - x + pad < K else 0
      bias_row[0, o*W + x]            = b[o]
    """
    c_out, c_in, K, _ = w.shape
    pad = K // 2
    p = jnp.arange(W)[:, None]       # input column
    x = jnp.arange(W)[None, :]       # output column
    kx = p - x + pad                 # horizontal tap index, (W, W)
    valid = (kx >= 0) & (kx < K)
    kx_c = jnp.clip(kx, 0, K - 1)
    wt = jnp.transpose(w, (2, 1, 0, 3))              # (K, C_in, C_out, Kx)
    band = jnp.take(wt, kx_c, axis=3)                # (K, C_in, C_out, W_p, W_x)
    band = band * valid[None, None, None].astype(w.dtype)
    band = jnp.transpose(band, (0, 1, 3, 2, 4))      # (K, C_in, W_p, C_out, W_x)
    t = band.reshape(K * c_in * W, c_out * W).astype(dtype)
    bias_row = jnp.broadcast_to(b[:, None], (c_out, W)).reshape(1, c_out * W)
    return t, bias_row.astype(jnp.float32)


def _make_fused_kernel(B, H, W, K, c_ins, c_outs):
    """Fused 4-layer 'same' conv stack for B batch samples per grid step."""
    pad = K // 2
    hp = H + 2 * pad
    bh = B * H
    n_layers = len(c_ins)

    def kernel(*refs):
        x_ref = refs[0]                              # (B*H, W)            f32
        t_refs = refs[1:1 + 2 * n_layers:2]          # (K*Cin*W, Cout*W)   compute dtype
        b_refs = refs[2:2 + 2 * n_layers:2]          # (1, Cout*W)         f32
        o_ref = refs[1 + 2 * n_layers]               # (B*H, Clast*W)      f32
        buf = refs[2 + 2 * n_layers]                 # (B*Hp, Cmax*W)      compute dtype
        lhs = refs[3 + 2 * n_layers]                 # (B*H, K*Cmax*W)     compute dtype

        # Zero ONLY the vertical pad-row border, once per step (interior rows
        # are always fully overwritten; pad rows are never written afterwards).
        for s in range(B):
            buf[s * hp:s * hp + pad, :] = jnp.zeros((pad, buf.shape[1]), buf.dtype)
            buf[s * hp + pad + H:(s + 1) * hp, :] = (
                jnp.zeros((pad, buf.shape[1]), buf.dtype))

        # Load the single-channel input block into the interior rows, lanes [0, W).
        for s in range(B):
            buf[s * hp + pad:s * hp + pad + H, 0:W] = (
                x_ref[s * H:(s + 1) * H, :].astype(buf.dtype))

        for l in range(n_layers):
            c_in, c_out = c_ins[l], c_outs[l]
            cin_w = c_in * W
            depth = K * cin_w
            # Pack the K row-shifted views into one deep-contraction LHS:
            #   lhs[s*H + y, (ky*C_in + c)*W + p] = buf[s*hp + y + ky, c*W + p]
            for s in range(B):
                for ky in range(K):
                    lhs[s * H:(s + 1) * H, ky * cin_w:(ky + 1) * cin_w] = (
                        buf[s * hp + ky:s * hp + ky + H, 0:cin_w])
            # One MXU matmul per layer; f32 accumulation, f32 bias add.
            act = jnp.dot(lhs[0:bh, 0:depth], t_refs[l][...],
                          preferred_element_type=jnp.float32)
            act = act + b_refs[l][...]
            if l + 1 < n_layers:
                # Lane-dense channel-slab write-back of the unpadded activations.
                for s in range(B):
                    buf[s * hp + pad:s * hp + pad + H, 0:c_out * W] = (
                        act[s * H:(s + 1) * H, :].astype(buf.dtype))
            else:
                # Single whole-block store of the (B*H, Clast*W) output slab.
                o_ref[...] = act.astype(o_ref.dtype)

    return kernel


def base_net_detect_forward(x, params, compute_dtype=jnp.bfloat16):
    """x: (N, X, Y) -> pred: (N, 2, X, Y). Matches PyTorch forward (no final ReLU)."""
    x = jnp.asarray(x, jnp.float32)
    N, H, W = x.shape
    layers = list(params["hidden"]) + [params["preoutput"]]
    K = layers[0][0].shape[-1]
    pad = K // 2
    c_ins = [w.shape[1] for w, _ in layers]
    c_outs = [w.shape[0] for w, _ in layers]
    c_last = c_outs[-1]
    c_max = max(c_ins)

    # Batch B samples per grid step so the MXU M dimension is ~B*H (target ~256
    # rows) and per-grid-step pipeline overhead is amortized.
    B = max(1, min(N, -(-256 // H)))
    n_pad = -(-N // B) * B
    if n_pad != N:
        x = jnp.concatenate([x, jnp.zeros((n_pad - N, H, W), x.dtype)], axis=0)
    grid = (n_pad // B,)

    operands = [x.reshape(n_pad * H, W)]
    in_specs = [pl.BlockSpec((B * H, W), lambda g: (g, 0))]
    for w, b in layers:
        t, brow = _toeplitz_weights(w.astype(jnp.float32), b.astype(jnp.float32),
                                    W, compute_dtype)
        operands += [t, brow]
        # Constant index_map across the grid -> Mosaic skips re-DMA after step 0.
        # TODO(synk): on v7x add pipeline_mode=pl.Buffered(1) so these constant
        #             (largest resident) operands are single-buffered.
        in_specs += [pl.BlockSpec(t.shape, lambda g: (0, 0)),
                     pl.BlockSpec(brow.shape, lambda g: (0, 0))]

    kernel = _make_fused_kernel(B, H, W, K, c_ins, c_outs)
    out = pl.pallas_call(
        kernel,
        out_shape=jax.ShapeDtypeStruct((n_pad * H, c_last * W), jnp.float32),
        grid=grid,
        in_specs=in_specs,
        out_specs=pl.BlockSpec((B * H, c_last * W), lambda g: (g, 0)),
        scratch_shapes=[pltpu.VMEM((B * (H + 2 * pad), c_max * W), compute_dtype),
                        pltpu.VMEM((B * H, K * c_max * W), compute_dtype)],
        compiler_params=pltpu.CompilerParams(
            dimension_semantics=("parallel",)),   # batch blocks shard across TCs
    )(*operands)

    # (n_pad*H, c_last*W) lane-dense slab -> (N, 2, H, W): layout plumbing only.
    pred = out.reshape(n_pad, H, c_last, W)[:N].transpose(0, 2, 1, 3)
    return pred


def init_params(key, n_in_channels=1, n_hidden_layers=3, n_kernels=3,
                kernel_size=KERNEL_SIZE):
    """Deterministic PyTorch-default-style (uniform +/- 1/sqrt(fan_in)) init."""
    params = {"hidden": [], "preoutput": None}
    c_in = n_in_channels
    for _ in range(n_hidden_layers):
        key, kw, kb = jax.random.split(key, 3)
        fan_in = c_in * kernel_size * kernel_size
        bound = 1.0 / (fan_in ** 0.5)
        w = jax.random.uniform(kw, (n_kernels, c_in, kernel_size, kernel_size),
                               minval=-bound, maxval=bound, dtype=jnp.float32)
        b = jax.random.uniform(kb, (n_kernels,), minval=-bound, maxval=bound,
                               dtype=jnp.float32)
        params["hidden"].append((w, b))
        c_in = n_kernels
    key, kw, kb = jax.random.split(key, 3)
    fan_in = c_in * kernel_size * kernel_size
    bound = 1.0 / (fan_in ** 0.5)
    w = jax.random.uniform(kw, (2, c_in, kernel_size, kernel_size),
                           minval=-bound, maxval=bound, dtype=jnp.float32)
    b = jax.random.uniform(kb, (2,), minval=-bound, maxval=bound,
                           dtype=jnp.float32)
    params["preoutput"] = (w, b)
    return params


def _ref_conv(x, w, b):
    y = jax.lax.conv_general_dilated(
        x, w, window_strides=(1, 1), padding=[(PAD, PAD), (PAD, PAD)],
        dimension_numbers=("NCHW", "OIHW", "NCHW"),
        precision=jax.lax.Precision.HIGHEST)
    return y + b.reshape(1, -1, 1, 1)


def _reference_forward(x, params):
    x = x.astype(jnp.float32)[:, None, :, :]
    for w, b in params["hidden"]:
        x = _ref_conv(x, w, b)
    w, b = params["preoutput"]
    return _ref_conv(x, w, b)


if __name__ == "__main__":
    key = jax.random.PRNGKey(0)
    k_x, k_p = jax.random.split(key)

    N, H, W = 2, 16, 16
    x = jax.random.normal(k_x, (N, H, W), dtype=jnp.float32)
    params = init_params(k_p)

    ref = jax.block_until_ready(_reference_forward(x, params))

    # Exact-path check (f32 compute) proves the Toeplitz / padding mapping.
    pred_f32 = jax.block_until_ready(
        base_net_detect_forward(x, params, compute_dtype=jnp.float32))
    assert pred_f32.shape == (N, 2, H, W), pred_f32.shape
    assert jnp.allclose(pred_f32, ref, atol=5e-3, rtol=5e-3), (
        "f32 path mismatch vs lax.conv reference; max abs err = "
        f"{float(jnp.max(jnp.abs(pred_f32 - ref)))}")

    # Default fast path: bf16 operands / f32 accumulation. Looser tolerance for
    # bf16 quantization; a tap/padding bug would be O(0.1) off, far above it.
    pred = jax.block_until_ready(base_net_detect_forward(x, params))
    assert pred.shape == (N, 2, H, W), pred.shape
    assert jnp.allclose(pred, ref, atol=2e-2, rtol=2e-2), (
        "bf16 path mismatch vs lax.conv reference; max abs err = "
        f"{float(jnp.max(jnp.abs(pred - ref)))}")

    print("KERNEL_OK")
</pallas_src>

<mosaic_0001>
module attributes {stable_mosaic.version = 11 : i64} {
  func.func @kernel(%arg0: i32, %arg1: memref<32x16xf32, #tpu.memory_space<vmem>>, %arg2: memref<176x48xf32, #tpu.memory_space<vmem>>, %arg3: memref<1x48xf32, #tpu.memory_space<vmem>>, %arg4: memref<528x48xf32, #tpu.memory_space<vmem>>, %arg5: memref<1x48xf32, #tpu.memory_space<vmem>>, %arg6: memref<528x48xf32, #tpu.memory_space<vmem>>, %arg7: memref<1x48xf32, #tpu.memory_space<vmem>>, %arg8: memref<528x32xf32, #tpu.memory_space<vmem>>, %arg9: memref<1x32xf32, #tpu.memory_space<vmem>>, %arg10: memref<32x32xf32, #tpu.memory_space<vmem>>, %arg11: memref<52x48xf32, #tpu.memory_space<vmem>>, %arg12: memref<32x528xf32, #tpu.memory_space<vmem>>) attributes {dimension_semantics = [#tpu.dimension_semantics<parallel>], iteration_bounds = array<i64: 1>, scalar_prefetch = 0 : i64, scratch_operands = 2 : i64, tpu.core_type = #tpu.core_type<tc>, window_params = [{transform_indices = @transform_0, window_bounds = array<i64: 32, 16>}, {pipeline_mode = #tpu.pipeline_mode<synchronous>, transform_indices = @transform_1, window_bounds = array<i64: 176, 48>}, {pipeline_mode = #tpu.pipeline_mode<synchronous>, transform_indices = @transform_2, window_bounds = array<i64: 1, 48>}, {pipeline_mode = #tpu.pipeline_mode<synchronous>, transform_indices = @transform_3, window_bounds = array<i64: 528, 48>}, {pipeline_mode = #tpu.pipeline_mode<synchronous>, transform_indices = @transform_4, window_bounds = array<i64: 1, 48>}, {pipeline_mode = #tpu.pipeline_mode<synchronous>, transform_indices = @transform_5, window_bounds = array<i64: 528, 48>}, {pipeline_mode = #tpu.pipeline_mode<synchronous>, transform_indices = @transform_6, window_bounds = array<i64: 1, 48>}, {pipeline_mode = #tpu.pipeline_mode<synchronous>, transform_indices = @transform_7, window_bounds = array<i64: 528, 32>}, {pipeline_mode = #tpu.pipeline_mode<synchronous>, transform_indices = @transform_8, window_bounds = array<i64: 1, 32>}, {transform_indices = @transform_9, window_bounds = array<i64: 32, 32>}]} {
    %cst = arith.constant 0.000000e+00 : f32
    %0 = vector.broadcast %cst : f32 to vector<5x48xf32>
    %c0 = arith.constant 0 : index
    %c0_0 = arith.constant 0 : index
    %1 = vector.load %arg11[%c0, %c0_0] : memref<52x48xf32, #tpu.memory_space<vmem>>, vector<5x48xf32>
    tpu.vector_store %arg11[%c0, %c0_0], %0 {strides = array<i32>} : memref<52x48xf32, #tpu.memory_space<vmem>>, vector<5x48xf32>,
    %cst_1 = arith.constant 0.000000e+00 : f32
    %2 = vector.broadcast %cst_1 : f32 to vector<5x48xf32>
    %c21 = arith.constant 21 : index
    %c0_2 = arith.constant 0 : index
    %3 = vector.load %arg11[%c21, %c0_2] : memref<52x48xf32, #tpu.memory_space<vmem>>, vector<5x48xf32>
    tpu.vector_store %arg11[%c21, %c0_2], %2 {strides = array<i32>} : memref<52x48xf32, #tpu.memory_space<vmem>>, vector<5x48xf32>,
    %cst_3 = arith.constant 0.000000e+00 : f32
    %4 = vector.broadcast %cst_3 : f32 to vector<5x48xf32>
    %c26 = arith.constant 26 : index
    %c0_4 = arith.constant 0 : index
    %5 = vector.load %arg11[%c26, %c0_4] : memref<52x48xf32, #tpu.memory_space<vmem>>, vector<5x48xf32>
    tpu.vector_store %arg11[%c26, %c0_4], %4 {strides = array<i32>} : memref<52x48xf32, #tpu.memory_space<vmem>>, vector<5x48xf32>,
    %cst_5 = arith.constant 0.000000e+00 : f32
    %6 = vector.broadcast %cst_5 : f32 to vector<5x48xf32>
    %c47 = arith.constant 47 : index
    %c0_6 = arith.constant 0 : index
    %7 = vector.load %arg11[%c47, %c0_6] : memref<52x48xf32, #tpu.memory_space<vmem>>, vector<5x48xf32>
    tpu.vector_store %arg11[%c47, %c0_6], %6 {strides = array<i32>} : memref<52x48xf32, #tpu.memory_space<vmem>>, vector<5x48xf32>,
    %c0_7 = arith.constant 0 : index
    %c0_8 = arith.constant 0 : index
    %8 = vector.load %arg1[%c0_7, %c0_8] : memref<32x16xf32, #tpu.memory_space<vmem>>, vector<16x16xf32>
    %c5 = arith.constant 5 : index
    %c0_9 = arith.constant 0 : index
    %9 = vector.load %arg11[%c5, %c0_9] : memref<52x48xf32, #tpu.memory_space<vmem>>, vector<16x16xf32>
    tpu.vector_store %arg11[%c5, %c0_9], %8 {strides = array<i32>} : memref<52x48xf32, #tpu.memory_space<vmem>>, vector<16x16xf32>,
    %c16 = arith.constant 16 : index
    %c0_10 = arith.constant 0 : index
    %10 = vector.load %arg1[%c16, %c0_10] : memref<32x16xf32, #tpu.memory_space<vmem>>, vector<16x16xf32>
    %c31 = arith.constant 31 : index
    %c0_11 = arith.constant 0 : index
    %11 = vector.load %arg11[%c31, %c0_11] : memref<52x48xf32, #tpu.memory_space<vmem>>, vector<16x16xf32>
    tpu.vector_store %arg11[%c31, %c0_11], %10 {strides = array<i32>} : memref<52x48xf32, #tpu.memory_space<vmem>>, vector<16x16xf32>,
    %c0_12 = arith.constant 0 : index
    %c0_13 = arith.constant 0 : index
    %12 = vector.load %arg11[%c0_12, %c0_13] : memref<52x48xf32, #tpu.memory_space<vmem>>, vector<16x16xf32>
    %c0_14 = arith.constant 0 : index
    %c0_15 = arith.constant 0 : index
    %13 = vector.load %arg12[%c0_14, %c0_15] : memref<32x528xf32, #tpu.memory_space<vmem>>, vector<16x16xf32>
    tpu.vector_store %arg12[%c0_14, %c0_15], %12 {strides = array<i32>} : memref<32x528xf32, #tpu.memory_space<vmem>>, vector<16x16xf32>,
    %c1 = arith.constant 1 : index
    %c0_16 = arith.constant 0 : index
    %14 = vector.load %arg11[%c1, %c0_16] : memref<52x48xf32, #tpu.memory_space<vmem>>, vector<16x16xf32>
    %c0_17 = arith.constant 0 : index
    %c16_18 = arith.constant 16 : index
    %15 = vector.load %arg12[%c0_17, %c16_18] : memref<32x528xf32, #tpu.memory_space<vmem>>, vector<16x16xf32>
    tpu.vector_store %arg12[%c0_17, %c16_18], %14 {strides = array<i32>} : memref<32x528xf32, #tpu.memory_space<vmem>>, vector<16x16xf32>,
    %c2 = arith.constant 2 : index
    %c0_19 = arith.constant 0 : index
    %16 = vector.load %arg11[%c2, %c0_19] : memref<52x48xf32, #tpu.memory_space<vmem>>, vector<16x16xf32>
    %c0_20 = arith.constant 0 : index
    %c32 = arith.constant 32 : index
    %17 = vector.load %arg12[%c0_20, %c32] : memref<32x528xf32, #tpu.memory_space<vmem>>, vector<16x16xf32>
    tpu.vector_store %arg12[%c0_20, %c32], %16 {strides = array<i32>} : memref<32x528xf32, #tpu.memory_space<vmem>>, vector<16x16xf32>,
    %c3 = arith.constant 3 : index
    %c0_21 = arith.constant 0 : index
    %18 = vector.load %arg11[%c3, %c0_21] : memref<52x48xf32, #tpu.memory_space<vmem>>, vector<16x16xf32>
    %c0_22 = arith.constant 0 : index
    %c48 = arith.constant 48 : index
    %19 = vector.load %arg12[%c0_22, %c48] : memref<32x528xf32, #tpu.memory_space<vmem>>, vector<16x16xf32>
    tpu.vector_store %arg12[%c0_22, %c48], %18 {strides = array<i32>} : memref<32x528xf32, #tpu.memory_space<vmem>>, vector<16x16xf32>,
    %c4 = arith.constant 4 : index
    %c0_23 = arith.constant 0 : index
    %20 = vector.load %arg11[%c4, %c0_23] : memref<52x48xf32, #tpu.memory_space<vmem>>, vector<16x16xf32>
    %c0_24 = arith.constant 0 : index
    %c64 = arith.constant 64 : index
    %21 = vector.load %arg12[%c0_24, %c64] : memref<32x528xf32, #tpu.memory_space<vmem>>, vector<16x16xf32>
    tpu.vector_store %arg12[%c0_24, %c64], %20 {strides = array<i32>} : memref<32x528xf32, #tpu.memory_space<vmem>>, vector<16x16xf32>,
    %c5_25 = arith.constant 5 : index
    %c0_26 = arith.constant 0 : index
    %22 = vector.load %arg11[%c5_25, %c0_26] : memref<52x48xf32, #tpu.memory_space<vmem>>, vector<16x16xf32>
    %c0_27 = arith.constant 0 : index
    %c80 = arith.constant 80 : index
    %23 = vector.load %arg12[%c0_27, %c80] : memref<32x528xf32, #tpu.memory_space<vmem>>, vector<16x16xf32>
    tpu.vector_store %arg12[%c0_27, %c80], %22 {strides = array<i32>} : memref<32x528xf32, #tpu.memory_space<vmem>>, vector<16x16xf32>,
    %c6 = arith.constant 6 : index
    %c0_28 = arith.constant 0 : index
    %24 = vector.load %arg11[%c6, %c0_28] : memref<52x48xf32, #tpu.memory_space<vmem>>, vector<16x16xf32>
    %c0_29 = arith.constant 0 : index
    %c96 = arith.constant 96 : index
    %25 = vector.load %arg12[%c0_29, %c96] : memref<32x528xf32, #tpu.memory_space<vmem>>, vector<16x16xf32>
    tpu.vector_store %arg12[%c0_29, %c96], %24 {strides = array<i32>} : memref<32x528xf32, #tpu.memory_space<vmem>>, vector<16x16xf32>,
    %c7 = arith.constant 7 : index
    %c0_30 = arith.constant 0 : index
    %26 = vector.load %arg11[%c7, %c0_30] : memref<52x48xf32, #tpu.memory_space<vmem>>, vector<16x16xf32>
    %c0_31 = arith.constant 0 : index
    %c112 = arith.constant 112 : index
    %27 = vector.load %arg12[%c0_31, %c112] : memref<32x528xf32, #tpu.memory_space<vmem>>, vector<16x16xf32>
    tpu.vector_store %arg12[%c0_31, %c112], %26 {strides = array<i32>} : memref<32x528xf32, #tpu.memory_space<vmem>>, vector<16x16xf32>,
    %c8 = arith.constant 8 : index
    %c0_32 = arith.constant 0 : index
    %28 = vector.load %arg11[%c8, %c0_32] : memref<52x48xf32, #tpu.memory_space<vmem>>, vector<16x16xf32>
    %c0_33 = arith.constant 0 : index
    %c128 = arith.constant 128 : index
    %29 = vector.load %arg12[%c0_33, %c128] : memref<32x528xf32, #tpu.memory_space<vmem>>, vector<16x16xf32>
    tpu.vector_store %arg12[%c0_33, %c128], %28 {strides = array<i32>} : memref<32x528xf32, #tpu.memory_space<vmem>>, vector<16x16xf32>,
    %c9 = arith.constant 9 : index
    %c0_34 = arith.constant 0 : index
    %30 = vector.load %arg11[%c9, %c0_34] : memref<52x48xf32, #tpu.memory_space<vmem>>, vector<16x16xf32>
    %c0_35 = arith.constant 0 : index
    %c144 = arith.constant 144 : index
    %31 = vector.load %arg12[%c0_35, %c144] : memref<32x528xf32, #tpu.memory_space<vmem>>, vector<16x16xf32>
    tpu.vector_store %arg12[%c0_35, %c144], %30 {strides = array<i32>} : memref<32x528xf32, #tpu.memory_space<vmem>>, vector<16x16xf32>,
    %c10 = arith.constant 10 : index
    %c0_36 = arith.constant 0 : index
    %32 = vector.load %arg11[%c10, %c0_36] : memref<52x48xf32, #tpu.memory_space<vmem>>, vector<16x16xf32>
    %c0_37 = arith.constant 0 : index
    %c160 = arith.constant 160 : index
    %33 = vector.load %arg12[%c0_37, %c160] : memref<32x528xf32, #tpu.memory_space<vmem>>, vector<16x16xf32>
    tpu.vector_store %arg12[%c0_37, %c160], %32 {strides = array<i32>} : memref<32x528xf32, #tpu.memory_space<vmem>>, vector<16x16xf32>,
    %c26_38 = arith.constant 26 : index
    %c0_39 = arith.constant 0 : index
    %34 = vector.load %arg11[%c26_38, %c0_39] : memref<52x48xf32, #tpu.memory_space<vmem>>, vector<16x16xf32>
    %c16_40 = arith.constant 16 : index
    %c0_41 = arith.constant 0 : index
    %35 = vector.load %arg12[%c16_40, %c0_41] : memref<32x528xf32, #tpu.memory_space<vmem>>, vector<16x16xf32>
    tpu.vector_store %arg12[%c16_40, %c0_41], %34 {strides = array<i32>} : memref<32x528xf32, #tpu.memory_space<vmem>>, vector<16x16xf32>,
    %c27 = arith.constant 27 : index
    %c0_42 = arith.constant 0 : index
    %36 = vector.load %arg11[%c27, %c0_42] : memref<52x48xf32, #tpu.memory_space<vmem>>, vector<16x16xf32>
    %c16_43 = arith.constant 16 : index
    %c16_44 = arith.constant 16 : index
    %37 = vector.load %arg12[%c16_43, %c16_44] : memref<32x528xf32, #tpu.memory_space<vmem>>, vector<16x16xf32>
    tpu.vector_store %arg12[%c16_43, %c16_44], %36 {strides = array<i32>} : memref<32x528xf32, #tpu.memory_space<vmem>>, vector<16x16xf32>,
    %c28 = arith.constant 28 : index
    %c0_45 = arith.constant 0 : index
    %38 = vector.load %arg11[%c28, %c0_45] : memref<52x48xf32, #tpu.memory_space<vmem>>, vector<16x16xf32>
    %c16_46 = arith.constant 16 : index
    %c32_47 = arith.constant 32 : index
    %39 = vector.load %arg12[%c16_46, %c32_47] : memref<32x528xf32, #tpu.memory_space<vmem>>, vector<16x16xf32>
    tpu.vector_store %arg12[%c16_46, %c32_47], %38 {strides = array<i32>} : memref<32x528xf32, #tpu.memory_space<vmem>>, vector<16x16xf32>,
    %c29 = arith.constant 29 : index
    %c0_48 = arith.constant 0 : index
    %40 = vector.load %arg11[%c29, %c0_48] : memref<52x48xf32, #tpu.memory_space<vmem>>, vector<16x16xf32>
    %c16_49 = arith.constant 16 : index
    %c48_50 = arith.constant 48 : index
    %41 = vector.load %arg12[%c16_49, %c48_50] : memref<32x528xf32, #tpu.memory_space<vmem>>, vector<16x16xf32>
    tpu.vector_store %arg12[%c16_49, %c48_50], %40 {strides = array<i32>} : memref<32x528xf32, #tpu.memory_space<vmem>>, vector<16x16xf32>,
    %c30 = arith.constant 30 : index
    %c0_51 = arith.constant 0 : index
    %42 = vector.load %arg11[%c30, %c0_51] : memref<52x48xf32, #tpu.memory_space<vmem>>, vector<16x16xf32>
    %c16_52 = arith.constant 16 : index
    %c64_53 = arith.constant 64 : index
    %43 = vector.load %arg12[%c16_52, %c64_53] : memref<32x528xf32, #tpu.memory_space<vmem>>, vector<16x16xf32>
    tpu.vector_store %arg12[%c16_52, %c64_53], %42 {strides = array<i32>} : memref<32x528xf32, #tpu.memory_space<vmem>>, vector<16x16xf32>,
    %c31_54 = arith.constant 31 : index
    %c0_55 = arith.constant 0 : index
    %44 = vector.load %arg11[%c31_54, %c0_55] : memref<52x48xf32, #tpu.memory_space<vmem>>, vector<16x16xf32>
    %c16_56 = arith.constant 16 : index
    %c80_57 = arith.constant 80 : index
    %45 = vector.load %arg12[%c16_56, %c80_57] : memref<32x528xf32, #tpu.memory_space<vmem>>, vector<16x16xf32>
    tpu.vector_store %arg12[%c16_56, %c80_57], %44 {strides = array<i32>} : memref<32x528xf32, #tpu.memory_space<vmem>>, vector<16x16xf32>,
    %c32_58 = arith.constant 32 : index
    %c0_59 = arith.constant 0 : index
    %46 = vector.load %arg11[%c32_58, %c0_59] : memref<52x48xf32, #tpu.memory_space<vmem>>, vector<16x16xf32>
    %c16_60 = arith.constant 16 : index
    %c96_61 = arith.constant 96 : index
    %47 = vector.load %arg12[%c16_60, %c96_61] : memref<32x528xf32, #tpu.memory_space<vmem>>, vector<16x16xf32>
    tpu.vector_store %arg12[%c16_60, %c96_61], %46 {strides = array<i32>} : memref<32x528xf32, #tpu.memory_space<vmem>>, vector<16x16xf32>,
    %c33 = arith.constant 33 : index
    %c0_62 = arith.constant 0 : index
    %48 = vector.load %arg11[%c33, %c0_62] : memref<52x48xf32, #tpu.memory_space<vmem>>, vector<16x16xf32>
    %c16_63 = arith.constant 16 : index
    %c112_64 = arith.constant 112 : index
    %49 = vector.load %arg12[%c16_63, %c112_64] : memref<32x528xf32, #tpu.memory_space<vmem>>, vector<16x16xf32>
    tpu.vector_store %arg12[%c16_63, %c112_64], %48 {strides = array<i32>} : memref<32x528xf32, #tpu.memory_space<vmem>>, vector<16x16xf32>,
    %c34 = arith.constant 34 : index
    %c0_65 = arith.constant 0 : index
    %50 = vector.load %arg11[%c34, %c0_65] : memref<52x48xf32, #tpu.memory_space<vmem>>, vector<16x16xf32>
    %c16_66 = arith.constant 16 : index
    %c128_67 = arith.constant 128 : index
    %51 = vector.load %arg12[%c16_66, %c128_67] : memref<32x528xf32, #tpu.memory_space<vmem>>, vector<16x16xf32>
    tpu.vector_store %arg12[%c16_66, %c128_67], %50 {strides = array<i32>} : memref<32x528xf32, #tpu.memory_space<vmem>>, vector<16x16xf32>,
    %c35 = arith.constant 35 : index
    %c0_68 = arith.constant 0 : index
    %52 = vector.load %arg11[%c35, %c0_68] : memref<52x48xf32, #tpu.memory_space<vmem>>, vector<16x16xf32>
    %c16_69 = arith.constant 16 : index
    %c144_70 = arith.constant 144 : index
    %53 = vector.load %arg12[%c16_69, %c144_70] : memref<32x528xf32, #tpu.memory_space<vmem>>, vector<16x16xf32>
    tpu.vector_store %arg12[%c16_69, %c144_70], %52 {strides = array<i32>} : memref<32x528xf32, #tpu.memory_space<vmem>>, vector<16x16xf32>,
    %c36 = arith.constant 36 : index
    %c0_71 = arith.constant 0 : index
    %54 = vector.load %arg11[%c36, %c0_71] : memref<52x48xf32, #tpu.memory_space<vmem>>, vector<16x16xf32>
    %c16_72 = arith.constant 16 : index
    %c160_73 = arith.constant 160 : index
    %55 = vector.load %arg12[%c16_72, %c160_73] : memref<32x528xf32, #tpu.memory_space<vmem>>, vector<16x16xf32>
    tpu.vector_store %arg12[%c16_72, %c160_73], %54 {strides = array<i32>} : memref<32x528xf32, #tpu.memory_space<vmem>>, vector<16x16xf32>,
    %c0_74 = arith.constant 0 : index
    %c0_75 = arith.constant 0 : index
    %56 = vector.load %arg12[%c0_74, %c0_75] : memref<32x528xf32, #tpu.memory_space<vmem>>, vector<32x176xf32>
    %c0_76 = arith.constant 0 : index
    %c0_77 = arith.constant 0 : index
    %57 = vector.load %arg2[%c0_76, %c0_77] : memref<176x48xf32, #tpu.memory_space<vmem>>, vector<176x48xf32>
    %cst_78 = arith.constant dense<0.000000e+00> : vector<32x48xf32>
    %58 = tpu.matmul %56, %57, %cst_78 {dimension_numbers = #tpu.dot_dimension_numbers<[1], [0], [0], [1], [0, 0, 1, 1], [], []>} : vector<32x176xf32>, vector<176x48xf32>, vector<32x48xf32> -> vector<32x48xf32>
    %c0_79 = arith.constant 0 : index
    %c0_80 = arith.constant 0 : index
    %59 = vector.load %arg3[%c0_79, %c0_80] : memref<1x48xf32, #tpu.memory_space<vmem>>, vector<1x48xf32>
    %60 = vector.broadcast %59 : vector<1x48xf32> to vector<32x48xf32>
    %61 = arith.addf %58, %60 : vector<32x48xf32>
    %62 = vector.extract_strided_slice %61 {offsets = [0, 0], sizes = [16, 48], strides = [1, 1]} : vector<32x48xf32> to vector<16x48xf32>
    %c5_81 = arith.constant 5 : index
    %c0_82 = arith.constant 0 : index
    %63 = vector.load %arg11[%c5_81, %c0_82] : memref<52x48xf32, #tpu.memory_space<vmem>>, vector<16x48xf32>
    tpu.vector_store %arg11[%c5_81, %c0_82], %62 {strides = array<i32>} : memref<52x48xf32, #tpu.memory_space<vmem>>, vector<16x48xf32>,
    %64 = vector.extract_strided_slice %61 {offsets = [16, 0], sizes = [16, 48], strides = [1, 1]} : vector<32x48xf32> to vector<16x48xf32>
    %c31_83 = arith.constant 31 : index
    %c0_84 = arith.constant 0 : index
    %65 = vector.load %arg11[%c31_83, %c0_84] : memref<52x48xf32, #tpu.memory_space<vmem>>, vector<16x48xf32>
    tpu.vector_store %arg11[%c31_83, %c0_84], %64 {strides = array<i32>} : memref<52x48xf32, #tpu.memory_space<vmem>>, vector<16x48xf32>,
    %c0_85 = arith.constant 0 : index
    %c0_86 = arith.constant 0 : index
    %66 = vector.load %arg11[%c0_85, %c0_86] : memref<52x48xf32, #tpu.memory_space<vmem>>, vector<16x48xf32>
    %c0_87 = arith.constant 0 : index
    %c0_88 = arith.constant 0 : index
    %67 = vector.load %arg12[%c0_87, %c0_88] : memref<32x528xf32, #tpu.memory_space<vmem>>, vector<16x48xf32>
    tpu.vector_store %arg12[%c0_87, %c0_88], %66 {strides = array<i32>} : memref<32x528xf32, #tpu.memory_space<vmem>>, vector<16x48xf32>,
    %c1_89 = arith.constant 1 : index
    %c0_90 = arith.constant 0 : index
    %68 = vector.load %arg11[%c1_89, %c0_90] : memref<52x48xf32, #tpu.memory_space<vmem>>, vector<16x48xf32>
    %c0_91 = arith.constant 0 : index
    %c48_92 = arith.constant 48 : index
    %69 = vector.load %arg12[%c0_91, %c48_92] : memref<32x528xf32, #tpu.memory_space<vmem>>, vector<16x48xf32>
    tpu.vector_store %arg12[%c0_91, %c48_92], %68 {strides = array<i32>} : memref<32x528xf32, #tpu.memory_space<vmem>>, vector<16x48xf32>,
    %c2_93 = arith.constant 2 : index
    %c0_94 = arith.constant 0 : index
    %70 = vector.load %arg11[%c2_93, %c0_94] : memref<52x48xf32, #tpu.memory_space<vmem>>, vector<16x48xf32>
    %c0_95 = arith.constant 0 : index
    %c96_96 = arith.constant 96 : index
    %71 = vector.load %arg12[%c0_95, %c96_96] : memref<32x528xf32, #tpu.memory_space<vmem>>, vector<16x48xf32>
    tpu.vector_store %arg12[%c0_95, %c96_96], %70 {strides = array<i32>} : memref<32x528xf32, #tpu.memory_space<vmem>>, vector<16x48xf32>,
    %c3_97 = arith.constant 3 : index
    %c0_98 = arith.constant 0 : index
    %72 = vector.load %arg11[%c3_97, %c0_98] : memref<52x48xf32, #tpu.memory_space<vmem>>, vector<16x48xf32>
    %c0_99 = arith.constant 0 : index
    %c144_100 = arith.constant 144 : index
    %73 = vector.load %arg12[%c0_99, %c144_100] : memref<32x528xf32, #tpu.memory_space<vmem>>, vector<16x48xf32>
    tpu.vector_store %arg12[%c0_99, %c144_100], %72 {strides = array<i32>} : memref<32x528xf32, #tpu.memory_space<vmem>>, vector<16x48xf32>,
    %c4_101 = arith.constant 4 : index
    %c0_102 = arith.constant 0 : index
    %74 = vector.load %arg11[%c4_101, %c0_102] : memref<52x48xf32, #tpu.memory_space<vmem>>, vector<16x48xf32>
    %c0_103 = arith.constant 0 : index
    %c192 = arith.constant 192 : index
    %75 = vector.load %arg12[%c0_103, %c192] : memref<32x528xf32, #tpu.memory_space<vmem>>, vector<16x48xf32>
    tpu.vector_store %arg12[%c0_103, %c192], %74 {strides = array<i32>} : memref<32x528xf32, #tpu.memory_space<vmem>>, vector<16x48xf32>,
    %c5_104 = arith.constant 5 : index
    %c0_105 = arith.constant 0 : index
    %76 = vector.load %arg11[%c5_104, %c0_105] : memref<52x48xf32, #tpu.memory_space<vmem>>, vector<16x48xf32>
    %c0_106 = arith.constant 0 : index
    %c240 = arith.constant 240 : index
    %77 = vector.load %arg12[%c0_106, %c240] : memref<32x528xf32, #tpu.memory_space<vmem>>, vector<16x48xf32>
    tpu.vector_store %arg12[%c0_106, %c240], %76 {strides = array<i32>} : memref<32x528xf32, #tpu.memory_space<vmem>>, vector<16x48xf32>,
    %c6_107 = arith.constant 6 : index
    %c0_108 = arith.constant 0 : index
    %78 = vector.load %arg11[%c6_107, %c0_108] : memref<52x48xf32, #tpu.memory_space<vmem>>, vector<16x48xf32>
    %c0_109 = arith.constant 0 : index
    %c288 = arith.constant 288 : index
    %79 = vector.load %arg12[%c0_109, %c288] : memref<32x528xf32, #tpu.memory_space<vmem>>, vector<16x48xf32>
    tpu.vector_store %arg12[%c0_109, %c288], %78 {strides = array<i32>} : memref<32x528xf32, #tpu.memory_space<vmem>>, vector<16x48xf32>,
    %c7_110 = arith.constant 7 : index
    %c0_111 = arith.constant 0 : index
    %80 = vector.load %arg11[%c7_110, %c0_111] : memref<52x48xf32, #tpu.memory_space<vmem>>, vector<16x48xf32>
    %c0_112 = arith.constant 0 : index
    %c336 = arith.constant 336 : index
    %81 = vector.load %arg12[%c0_112, %c336] : memref<32x528xf32, #tpu.memory_space<vmem>>, vector<16x48xf32>
    tpu.vector_store %arg12[%c0_112, %c336], %80 {strides = array<i32>} : memref<32x528xf32, #tpu.memory_space<vmem>>, vector<16x48xf32>,
    %c8_113 = arith.constant 8 : index
    %c0_114 = arith.constant 0 : index
    %82 = vector.load %arg11[%c8_113, %c0_114] : memref<52x48xf32, #tpu.memory_space<vmem>>, vector<16x48xf32>
    %c0_115 = arith.constant 0 : index
    %c384 = arith.constant 384 : index
    %83 = vector.load %arg12[%c0_115, %c384] : memref<32x528xf32, #tpu.memory_space<vmem>>, vector<16x48xf32>
    tpu.vector_store %arg12[%c0_115, %c384], %82 {strides = array<i32>} : memref<32x528xf32, #tpu.memory_space<vmem>>, vector<16x48xf32>,
    %c9_116 = arith.constant 9 : index
    %c0_117 = arith.constant 0 : index
    %84 = vector.load %arg11[%c9_116, %c0_117] : memref<52x48xf32, #tpu.memory_space<vmem>>, vector<16x48xf32>
    %c0_118 = arith.constant 0 : index
    %c432 = arith.constant 432 : index
    %85 = vector.load %arg12[%c0_118, %c432] : memref<32x528xf32, #tpu.memory_space<vmem>>, vector<16x48xf32>
    tpu.vector_store %arg12[%c0_118, %c432], %84 {strides = array<i32>} : memref<32x528xf32, #tpu.memory_space<vmem>>, vector<16x48xf32>,
    %c10_119 = arith.constant 10 : index
    %c0_120 = arith.constant 0 : index
    %86 = vector.load %arg11[%c10_119, %c0_120] : memref<52x48xf32, #tpu.memory_space<vmem>>, vector<16x48xf32>
    %c0_121 = arith.constant 0 : index
    %c480 = arith.constant 480 : index
    %87 = vector.load %arg12[%c0_121, %c480] : memref<32x528xf32, #tpu.memory_space<vmem>>, vector<16x48xf32>
    tpu.vector_store %arg12[%c0_121, %c480], %86 {strides = array<i32>} : memref<32x528xf32, #tpu.memory_space<vmem>>, vector<16x48xf32>,
    %c26_122 = arith.constant 26 : index
    %c0_123 = arith.constant 0 : index
    %88 = vector.load %arg11[%c26_122, %c0_123] : memref<52x48xf32, #tpu.memory_space<vmem>>, vector<16x48xf32>
    %c16_124 = arith.constant 16 : index
    %c0_125 = arith.constant 0 : index
    %89 = vector.load %arg12[%c16_124, %c0_125] : memref<32x528xf32, #tpu.memory_space<vmem>>, vector<16x48xf32>
    tpu.vector_store %arg12[%c16_124, %c0_125], %88 {strides = array<i32>} : memref<32x528xf32, #tpu.memory_space<vmem>>, vector<16x48xf32>,
    %c27_126 = arith.constant 27 : index
    %c0_127 = arith.constant 0 : index
    %90 = vector.load %arg11[%c27_126, %c0_127] : memref<52x48xf32, #tpu.memory_space<vmem>>, vector<16x48xf32>
    %c16_128 = arith.constant 16 : index
    %c48_129 = arith.constant 48 : index
    %91 = vector.load %arg12[%c16_128, %c48_129] : memref<32x528xf32, #tpu.memory_space<vmem>>, vector<16x48xf32>
    tpu.vector_store %arg12[%c16_128, %c48_129], %90 {strides = array<i32>} : memref<32x528xf32, #tpu.memory_space<vmem>>, vector<16x48xf32>,
    %c28_130 = arith.constant 28 : index
    %c0_131 = arith.constant 0 : index
    %92 = vector.load %arg11[%c28_130, %c0_131] : memref<52x48xf32, #tpu.memory_space<vmem>>, vector<16x48xf32>
    %c16_132 = arith.constant 16 : index
    %c96_133 = arith.constant 96 : index
    %93 = vector.load %arg12[%c16_132, %c96_133] : memref<32x528xf32, #tpu.memory_space<vmem>>, vector<16x48xf32>
    tpu.vector_store %arg12[%c16_132, %c96_133], %92 {strides = array<i32>} : memref<32x528xf32, #tpu.memory_space<vmem>>, vector<16x48xf32>,
    %c29_134 = arith.constant 29 : index
    %c0_135 = arith.constant 0 : index
    %94 = vector.load %arg11[%c29_134, %c0_135] : memref<52x48xf32, #tpu.memory_space<vmem>>, vector<16x48xf32>
    %c16_136 = arith.constant 16 : index
    %c144_137 = arith.constant 144 : index
    %95 = vector.load %arg12[%c16_136, %c144_137] : memref<32x528xf32, #tpu.memory_space<vmem>>, vector<16x48xf32>
    tpu.vector_store %arg12[%c16_136, %c144_137], %94 {strides = array<i32>} : memref<32x528xf32, #tpu.memory_space<vmem>>, vector<16x48xf32>,
    %c30_138 = arith.constant 30 : index
    %c0_139 = arith.constant 0 : index
    %96 = vector.load %arg11[%c30_138, %c0_139] : memref<52x48xf32, #tpu.memory_space<vmem>>, vector<16x48xf32>
    %c16_140 = arith.constant 16 : index
    %c192_141 = arith.constant 192 : index
    %97 = vector.load %arg12[%c16_140, %c192_141] : memref<32x528xf32, #tpu.memory_space<vmem>>, vector<16x48xf32>
    tpu.vector_store %arg12[%c16_140, %c192_141], %96 {strides = array<i32>} : memref<32x528xf32, #tpu.memory_space<vmem>>, vector<16x48xf32>,
    %c31_142 = arith.constant 31 : index
    %c0_143 = arith.constant 0 : index
    %98 = vector.load %arg11[%c31_142, %c0_143] : memref<52x48xf32, #tpu.memory_space<vmem>>, vector<16x48xf32>
    %c16_144 = arith.constant 16 : index
    %c240_145 = arith.constant 240 : index
    %99 = vector.load %arg12[%c16_144, %c240_145] : memref<32x528xf32, #tpu.memory_space<vmem>>, vector<16x48xf32>
    tpu.vector_store %arg12[%c16_144, %c240_145], %98 {strides = array<i32>} : memref<32x528xf32, #tpu.memory_space<vmem>>, vector<16x48xf32>,
    %c32_146 = arith.constant 32 : index
    %c0_147 = arith.constant 0 : index
    %100 = vector.load %arg11[%c32_146, %c0_147] : memref<52x48xf32, #tpu.memory_space<vmem>>, vector<16x48xf32>
    %c16_148 = arith.constant 16 : index
    %c288_149 = arith.constant 288 : index
    %101 = vector.load %arg12[%c16_148, %c288_149] : memref<32x528xf32, #tpu.memory_space<vmem>>, vector<16x48xf32>
    tpu.vector_store %arg12[%c16_148, %c288_149], %100 {strides = array<i32>} : memref<32x528xf32, #tpu.memory_space<vmem>>, vector<16x48xf32>,
    %c33_150 = arith.constant 33 : index
    %c0_151 = arith.constant 0 : index
    %102 = vector.load %arg11[%c33_150, %c0_151] : memref<52x48xf32, #tpu.memory_space<vmem>>, vector<16x48xf32>
    %c16_152 = arith.constant 16 : index
    %c336_153 = arith.constant 336 : index
    %103 = vector.load %arg12[%c16_152, %c336_153] : memref<32x528xf32, #tpu.memory_space<vmem>>, vector<16x48xf32>
    tpu.vector_store %arg12[%c16_152, %c336_153], %102 {strides = array<i32>} : memref<32x528xf32, #tpu.memory_space<vmem>>, vector<16x48xf32>,
    %c34_154 = arith.constant 34 : index
    %c0_155 = arith.constant 0 : index
    %104 = vector.load %arg11[%c34_154, %c0_155] : memref<52x48xf32, #tpu.memory_space<vmem>>, vector<16x48xf32>
    %c16_156 = arith.constant 16 : index
    %c384_157 = arith.constant 384 : index
    %105 = vector.load %arg12[%c16_156, %c384_157] : memref<32x528xf32, #tpu.memory_space<vmem>>, vector<16x48xf32>
    tpu.vector_store %arg12[%c16_156, %c384_157], %104 {strides = array<i32>} : memref<32x528xf32, #tpu.memory_space<vmem>>, vector<16x48xf32>,
    %c35_158 = arith.constant 35 : index
    %c0_159 = arith.constant 0 : index
    %106 = vector.load %arg11[%c35_158, %c0_159] : memref<52x48xf32, #tpu.memory_space<vmem>>, vector<16x48xf32>
    %c16_160 = arith.constant 16 : index
    %c432_161 = arith.constant 432 : index
    %107 = vector.load %arg12[%c16_160, %c432_161] : memref<32x528xf32, #tpu.memory_space<vmem>>, vector<16x48xf32>
    tpu.vector_store %arg12[%c16_160, %c432_161], %106 {strides = array<i32>} : memref<32x528xf32, #tpu.memory_space<vmem>>, vector<16x48xf32>,
    %c36_162 = arith.constant 36 : index
    %c0_163 = arith.constant 0 : index
    %108 = vector.load %arg11[%c36_162, %c0_163] : memref<52x48xf32, #tpu.memory_space<vmem>>, vector<16x48xf32>
    %c16_164 = arith.constant 16 : index
    %c480_165 = arith.constant 480 : index
    %109 = vector.load %arg12[%c16_164, %c480_165] : memref<32x528xf32, #tpu.memory_space<vmem>>, vector<16x48xf32>
    tpu.vector_store %arg12[%c16_164, %c480_165], %108 {strides = array<i32>} : memref<32x528xf32, #tpu.memory_space<vmem>>, vector<16x48xf32>,
    %c0_166 = arith.constant 0 : index
    %c0_167 = arith.constant 0 : index
    %110 = vector.load %arg12[%c0_166, %c0_167] : memref<32x528xf32, #tpu.memory_space<vmem>>, vector<32x528xf32>
    %c0_168 = arith.constant 0 : index
    %c0_169 = arith.constant 0 : index
    %111 = vector.load %arg4[%c0_168, %c0_169] : memref<528x48xf32, #tpu.memory_space<vmem>>, vector<528x48xf32>
    %cst_170 = arith.constant dense<0.000000e+00> : vector<32x48xf32>
    %112 = tpu.matmul %110, %111, %cst_170 {dimension_numbers = #tpu.dot_dimension_numbers<[1], [0], [0], [1], [0, 0, 1, 1], [], []>} : vector<32x528xf32>, vector<528x48xf32>, vector<32x48xf32> -> vector<32x48xf32>
    %c0_171 = arith.constant 0 : index
    %c0_172 = arith.constant 0 : index
    %113 = vector.load %arg5[%c0_171, %c0_172] : memref<1x48xf32, #tpu.memory_space<vmem>>, vector<1x48xf32>
    %114 = vector.broadcast %113 : vector<1x48xf32> to vector<32x48xf32>
    %115 = arith.addf %112, %114 : vector<32x48xf32>
    %116 = vector.extract_strided_slice %115 {offsets = [0, 0], sizes = [16, 48], strides = [1, 1]} : vector<32x48xf32> to vector<16x48xf32>
    %c5_173 = arith.constant 5 : index
    %c0_174 = arith.constant 0 : index
    %117 = vector.load %arg11[%c5_173, %c0_174] : memref<52x48xf32, #tpu.memory_space<vmem>>, vector<16x48xf32>
    tpu.vector_store %arg11[%c5_173, %c0_174], %116 {strides = array<i32>} : memref<52x48xf32, #tpu.memory_space<vmem>>, vector<16x48xf32>,
    %118 = vector.extract_strided_slice %115 {offsets = [16, 0], sizes = [16, 48], strides = [1, 1]} : vector<32x48xf32> to vector<16x48xf32>
    %c31_175 = arith.constant 31 : index
    %c0_176 = arith.constant 0 : index
    %119 = vector.load %arg11[%c31_175, %c0_176] : memref<52x48xf32, #tpu.memory_space<vmem>>, vector<16x48xf32>
    tpu.vector_store %arg11[%c31_175, %c0_176], %118 {strides = array<i32>} : memref<52x48xf32, #tpu.memory_space<vmem>>, vector<16x48xf32>,
    %c0_177 = arith.constant 0 : index
    %c0_178 = arith.constant 0 : index
    %120 = vector.load %arg11[%c0_177, %c0_178] : memref<52x48xf32, #tpu.memory_space<vmem>>, vector<16x48xf32>
    %c0_179 = arith.constant 0 : index
    %c0_180 = arith.constant 0 : index
    %121 = vector.load %arg12[%c0_179, %c0_180] : memref<32x528xf32, #tpu.memory_space<vmem>>, vector<16x48xf32>
    tpu.vector_store %arg12[%c0_179, %c0_180], %120 {strides = array<i32>} : memref<32x528xf32, #tpu.memory_space<vmem>>, vector<16x48xf32>,
    %c1_181 = arith.constant 1 : index
    %c0_182 = arith.constant 0 : index
    %122 = vector.load %arg11[%c1_181, %c0_182] : memref<52x48xf32, #tpu.memory_space<vmem>>, vector<16x48xf32>
    %c0_183 = arith.constant 0 : index
    %c48_184 = arith.constant 48 : index
    %123 = vector.load %arg12[%c0_183, %c48_184] : memref<32x528xf32, #tpu.memory_space<vmem>>, vector<16x48xf32>
    tpu.vector_store %arg12[%c0_183, %c48_184], %122 {strides = array<i32>} : memref<32x528xf32, #tpu.memory_space<vmem>>, vector<16x48xf32>,
    %c2_185 = arith.constant 2 : index
    %c0_186 = arith.constant 0 : index
    %124 = vector.load %arg11[%c2_185, %c0_186] : memref<52x48xf32, #tpu.memory_space<vmem>>, vector<16x48xf32>
    %c0_187 = arith.constant 0 : index
    %c96_188 = arith.constant 96 : index
    %125 = vector.load %arg12[%c0_187, %c96_188] : memref<32x528xf32, #tpu.memory_space<vmem>>, vector<16x48xf32>
    tpu.vector_store %arg12[%c0_187, %c96_188], %124 {strides = array<i32>} : memref<32x528xf32, #tpu.memory_space<vmem>>, vector<16x48xf32>,
    %c3_189 = arith.constant 3 : index
    %c0_190 = arith.constant 0 : index
    %126 = vector.load %arg11[%c3_189, %c0_190] : memref<52x48xf32, #tpu.memory_space<vmem>>, vector<16x48xf32>
    %c0_191 = arith.constant 0 : index
    %c144_192 = arith.constant 144 : index
    %127 = vector.load %arg12[%c0_191, %c144_192] : memref<32x528xf32, #tpu.memory_space<vmem>>, vector<16x48xf32>
    tpu.vector_store %arg12[%c0_191, %c144_192], %126 {strides = array<i32>} : memref<32x528xf32, #tpu.memory_space<vmem>>, vector<16x48xf32>,
    %c4_193 = arith.constant 4 : index
    %c0_194 = arith.constant 0 : index
    %128 = vector.load %arg11[%c4_193, %c0_194] : memref<52x48xf32, #tpu.memory_space<vmem>>, vector<16x48xf32>
    %c0_195 = arith.constant 0 : index
    %c192_196 = arith.constant 192 : index
    %129 = vector.load %arg12[%c0_195, %c192_196] : memref<32x528xf32, #tpu.memory_space<vmem>>, vector<16x48xf32>
    tpu.vector_store %arg12[%c0_195, %c192_196], %128 {strides = array<i32>} : memref<32x528xf32, #tpu.memory_space<vmem>>, vector<16x48xf32>,
    %c5_197 = arith.constant 5 : index
    %c0_198 = arith.constant 0 : index
    %130 = vector.load %arg11[%c5_197, %c0_198] : memref<52x48xf32, #tpu.memory_space<vmem>>, vector<16x48xf32>
    %c0_199 = arith.constant 0 : index
    %c240_200 = arith.constant 240 : index
    %131 = vector.load %arg12[%c0_199, %c240_200] : memref<32x528xf32, #tpu.memory_space<vmem>>, vector<16x48xf32>
    tpu.vector_store %arg12[%c0_199, %c240_200], %130 {strides = array<i32>} : memref<32x528xf32, #tpu.memory_space<vmem>>, vector<16x48xf32>,
    %c6_201 = arith.constant 6 : index
    %c0_202 = arith.constant 0 : index
    %132 = vector.load %arg11[%c6_201, %c0_202] : memref<52x48xf32, #tpu.memory_space<vmem>>, vector<16x48xf32>
    %c0_203 = arith.constant 0 : index
    %c288_204 = arith.constant 288 : index
    %133 = vector.load %arg12[%c0_203, %c288_204] : memref<32x528xf32, #tpu.memory_space<vmem>>, vector<16x48xf32>
    tpu.vector_store %arg12[%c0_203, %c288_204], %132 {strides = array<i32>} : memref<32x528xf32, #tpu.memory_space<vmem>>, vector<16x48xf32>,
    %c7_205 = arith.constant 7 : index
    %c0_206 = arith.constant 0 : index
    %134 = vector.load %arg11[%c7_205, %c0_206] : memref<52x48xf32, #tpu.memory_space<vmem>>, vector<16x48xf32>
    %c0_207 = arith.constant 0 : index
    %c336_208 = arith.constant 336 : index
    %135 = vector.load %arg12[%c0_207, %c336_208] : memref<32x528xf32, #tpu.memory_space<vmem>>, vector<16x48xf32>
    tpu.vector_store %arg12[%c0_207, %c336_208], %134 {strides = array<i32>} : memref<32x528xf32, #tpu.memory_space<vmem>>, vector<16x48xf32>,
    %c8_209 = arith.constant 8 : index
    %c0_210 = arith.constant 0 : index
    %136 = vector.load %arg11[%c8_209, %c0_210] : memref<52x48xf32, #tpu.memory_space<vmem>>, vector<16x48xf32>
    %c0_211 = arith.constant 0 : index
    %c384_212 = arith.constant 384 : index
    %137 = vector.load %arg12[%c0_211, %c384_212] : memref<32x528xf32, #tpu.memory_space<vmem>>, vector<16x48xf32>
    tpu.vector_store %arg12[%c0_211, %c384_212], %136 {strides = array<i32>} : memref<32x528xf32, #tpu.memory_space<vmem>>, vector<16x48xf32>,
    %c9_213 = arith.constant 9 : index
    %c0_214 = arith.constant 0 : index
    %138 = vector.load %arg11[%c9_213, %c0_214] : memref<52x48xf32, #tpu.memory_space<vmem>>, vector<16x48xf32>
    %c0_215 = arith.constant 0 : index
    %c432_216 = arith.constant 432 : index
    %139 = vector.load %arg12[%c0_215, %c432_216] : memref<32x528xf32, #tpu.memory_space<vmem>>, vector<16x48xf32>
    tpu.vector_store %arg12[%c0_215, %c432_216], %138 {strides = array<i32>} : memref<32x528xf32, #tpu.memory_space<vmem>>, vector<16x48xf32>,
    %c10_217 = arith.constant 10 : index
    %c0_218 = arith.constant 0 : index
    %140 = vector.load %arg11[%c10_217, %c0_218] : memref<52x48xf32, #tpu.memory_space<vmem>>, vector<16x48xf32>
    %c0_219 = arith.constant 0 : index
    %c480_220 = arith.constant 480 : index
    %141 = vector.load %arg12[%c0_219, %c480_220] : memref<32x528xf32, #tpu.memory_space<vmem>>, vector<16x48xf32>
    tpu.vector_store %arg12[%c0_219, %c480_220], %140 {strides = array<i32>} : memref<32x528xf32, #tpu.memory_space<vmem>>, vector<16x48xf32>,
    %c26_221 = arith.constant 26 : index
    %c0_222 = arith.constant 0 : index
    %142 = vector.load %arg11[%c26_221, %c0_222] : memref<52x48xf32, #tpu.memory_space<vmem>>, vector<16x48xf32>
    %c16_223 = arith.constant 16 : index
    %c0_224 = arith.constant 0 : index
    %143 = vector.load %arg12[%c16_223, %c0_224] : memref<32x528xf32, #tpu.memory_space<vmem>>, vector<16x48xf32>
    tpu.vector_store %arg12[%c16_223, %c0_224], %142 {strides = array<i32>} : memref<32x528xf32, #tpu.memory_space<vmem>>, vector<16x48xf32>,
    %c27_225 = arith.constant 27 : index
    %c0_226 = arith.constant 0 : index
    %144 = vector.load %arg11[%c27_225, %c0_226] : memref<52x48xf32, #tpu.memory_space<vmem>>, vector<16x48xf32>
    %c16_227 = arith.constant 16 : index
    %c48_228 = arith.constant 48 : index
    %145 = vector.load %arg12[%c16_227, %c48_228] : memref<32x528xf32, #tpu.memory_space<vmem>>, vector<16x48xf32>
    tpu.vector_store %arg12[%c16_227, %c48_228], %144 {strides = array<i32>} : memref<32x528xf32, #tpu.memory_space<vmem>>, vector<16x48xf32>,
    %c28_229 = arith.constant 28 : index
    %c0_230 = arith.constant 0 : index
    %146 = vector.load %arg11[%c28_229, %c0_230] : memref<52x48xf32, #tpu.memory_space<vmem>>, vector<16x48xf32>
    %c16_231 = arith.constant 16 : index
    %c96_232 = arith.constant 96 : index
    %147 = vector.load %arg12[%c16_231, %c96_232] : memref<32x528xf32, #tpu.memory_space<vmem>>, vector<16x48xf32>
    tpu.vector_store %arg12[%c16_231, %c96_232], %146 {strides = array<i32>} : memref<32x528xf32, #tpu.memory_space<vmem>>, vector<16x48xf32>,
    %c29_233 = arith.constant 29 : index
    %c0_234 = arith.constant 0 : index
    %148 = vector.load %arg11[%c29_233, %c0_234] : memref<52x48xf32, #tpu.memory_space<vmem>>, vector<16x48xf32>
    %c16_235 = arith.constant 16 : index
    %c144_236 = arith.constant 144 : index
    %149 = vector.load %arg12[%c16_235, %c144_236] : memref<32x528xf32, #tpu.memory_space<vmem>>, vector<16x48xf32>
    tpu.vector_store %arg12[%c16_235, %c144_236], %148 {strides = array<i32>} : memref<32x528xf32, #tpu.memory_space<vmem>>, vector<16x48xf32>,
    %c30_237 = arith.constant 30 : index
    %c0_238 = arith.constant 0 : index
    %150 = vector.load %arg11[%c30_237, %c0_238] : memref<52x48xf32, #tpu.memory_space<vmem>>, vector<16x48xf32>
    %c16_239 = arith.constant 16 : index
    %c192_240 = arith.constant 192 : index
    %151 = vector.load %arg12[%c16_239, %c192_240] : memref<32x528xf32, #tpu.memory_space<vmem>>, vector<16x48xf32>
    tpu.vector_store %arg12[%c16_239, %c192_240], %150 {strides = array<i32>} : memref<32x528xf32, #tpu.memory_space<vmem>>, vector<16x48xf32>,
    %c31_241 = arith.constant 31 : index
    %c0_242 = arith.constant 0 : index
    %152 = vector.load %arg11[%c31_241, %c0_242] : memref<52x48xf32, #tpu.memory_space<vmem>>, vector<16x48xf32>
    %c16_243 = arith.constant 16 : index
    %c240_244 = arith.constant 240 : index
    %153 = vector.load %arg12[%c16_243, %c240_244] : memref<32x528xf32, #tpu.memory_space<vmem>>, vector<16x48xf32>
    tpu.vector_store %arg12[%c16_243, %c240_244], %152 {strides = array<i32>} : memref<32x528xf32, #tpu.memory_space<vmem>>, vector<16x48xf32>,
    %c32_245 = arith.constant 32 : index
    %c0_246 = arith.constant 0 : index
    %154 = vector.load %arg11[%c32_245, %c0_246] : memref<52x48xf32, #tpu.memory_space<vmem>>, vector<16x48xf32>
    %c16_247 = arith.constant 16 : index
    %c288_248 = arith.constant 288 : index
    %155 = vector.load %arg12[%c16_247, %c288_248] : memref<32x528xf32, #tpu.memory_space<vmem>>, vector<16x48xf32>
    tpu.vector_store %arg12[%c16_247, %c288_248], %154 {strides = array<i32>} : memref<32x528xf32, #tpu.memory_space<vmem>>, vector<16x48xf32>,
    %c33_249 = arith.constant 33 : index
    %c0_250 = arith.constant 0 : index
    %156 = vector.load %arg11[%c33_249, %c0_250] : memref<52x48xf32, #tpu.memory_space<vmem>>, vector<16x48xf32>
    %c16_251 = arith.constant 16 : index
    %c336_252 = arith.constant 336 : index
    %157 = vector.load %arg12[%c16_251, %c336_252] : memref<32x528xf32, #tpu.memory_space<vmem>>, vector<16x48xf32>
    tpu.vector_store %arg12[%c16_251, %c336_252], %156 {strides = array<i32>} : memref<32x528xf32, #tpu.memory_space<vmem>>, vector<16x48xf32>,
    %c34_253 = arith.constant 34 : index
    %c0_254 = arith.constant 0 : index
    %158 = vector.load %arg11[%c34_253, %c0_254] : memref<52x48xf32, #tpu.memory_space<vmem>>, vector<16x48xf32>
    %c16_255 = arith.constant 16 : index
    %c384_256 = arith.constant 384 : index
    %159 = vector.load %arg12[%c16_255, %c384_256] : memref<32x528xf32, #tpu.memory_space<vmem>>, vector<16x48xf32>
    tpu.vector_store %arg12[%c16_255, %c384_256], %158 {strides = array<i32>} : memref<32x528xf32, #tpu.memory_space<vmem>>, vector<16x48xf32>,
    %c35_257 = arith.constant 35 : index
    %c0_258 = arith.constant 0 : index
    %160 = vector.load %arg11[%c35_257, %c0_258] : memref<52x48xf32, #tpu.memory_space<vmem>>, vector<16x48xf32>
    %c16_259 = arith.constant 16 : index
    %c432_260 = arith.constant 432 : index
    %161 = vector.load %arg12[%c16_259, %c432_260] : memref<32x528xf32, #tpu.memory_space<vmem>>, vector<16x48xf32>
    tpu.vector_store %arg12[%c16_259, %c432_260], %160 {strides = array<i32>} : memref<32x528xf32, #tpu.memory_space<vmem>>, vector<16x48xf32>,
    %c36_261 = arith.constant 36 : index
    %c0_262 = arith.constant 0 : index
    %162 = vector.load %arg11[%c36_261, %c0_262] : memref<52x48xf32, #tpu.memory_space<vmem>>, vector<16x48xf32>
    %c16_263 = arith.constant 16 : index
    %c480_264 = arith.constant 480 : index
    %163 = vector.load %arg12[%c16_263, %c480_264] : memref<32x528xf32, #tpu.memory_space<vmem>>, vector<16x48xf32>
    tpu.vector_store %arg12[%c16_263, %c480_264], %162 {strides = array<i32>} : memref<32x528xf32, #tpu.memory_space<vmem>>, vector<16x48xf32>,
    %c0_265 = arith.constant 0 : index
    %c0_266 = arith.constant 0 : index
    %164 = vector.load %arg12[%c0_265, %c0_266] : memref<32x528xf32, #tpu.memory_space<vmem>>, vector<32x528xf32>
    %c0_267 = arith.constant 0 : index
    %c0_268 = arith.constant 0 : index
    %165 = vector.load %arg6[%c0_267, %c0_268] : memref<528x48xf32, #tpu.memory_space<vmem>>, vector<528x48xf32>
    %cst_269 = arith.constant dense<0.000000e+00> : vector<32x48xf32>
    %166 = tpu.matmul %164, %165, %cst_269 {dimension_numbers = #tpu.dot_dimension_numbers<[1], [0], [0], [1], [0, 0, 1, 1], [], []>} : vector<32x528xf32>, vector<528x48xf32>, vector<32x48xf32> -> vector<32x48xf32>
    %c0_270 = arith.constant 0 : index
    %c0_271 = arith.constant 0 : index
    %167 = vector.load %arg7[%c0_270, %c0_271] : memref<1x48xf32, #tpu.memory_space<vmem>>, vector<1x48xf32>
    %168 = vector.broadcast %167 : vector<1x48xf32> to vector<32x48xf32>
    %169 = arith.addf %166, %168 : vector<32x48xf32>
    %170 = vector.extract_strided_slice %169 {offsets = [0, 0], sizes = [16, 48], strides = [1, 1]} : vector<32x48xf32> to vector<16x48xf32>
    %c5_272 = arith.constant 5 : index
    %c0_273 = arith.constant 0 : index
    %171 = vector.load %arg11[%c5_272, %c0_273] : memref<52x48xf32, #tpu.memory_space<vmem>>, vector<16x48xf32>
    tpu.vector_store %arg11[%c5_272, %c0_273], %170 {strides = array<i32>} : memref<52x48xf32, #tpu.memory_space<vmem>>, vector<16x48xf32>,
    %172 = vector.extract_strided_slice %169 {offsets = [16, 0], sizes = [16, 48], strides = [1, 1]} : vector<32x48xf32> to vector<16x48xf32>
    %c31_274 = arith.constant 31 : index
    %c0_275 = arith.constant 0 : index
    %173 = vector.load %arg11[%c31_274, %c0_275] : memref<52x48xf32, #tpu.memory_space<vmem>>, vector<16x48xf32>
    tpu.vector_store %arg11[%c31_274, %c0_275], %172 {strides = array<i32>} : memref<52x48xf32, #tpu.memory_space<vmem>>, vector<16x48xf32>,
    %c0_276 = arith.constant 0 : index
    %c0_277 = arith.constant 0 : index
    %174 = vector.load %arg11[%c0_276, %c0_277] : memref<52x48xf32, #tpu.memory_space<vmem>>, vector<16x48xf32>
    %c0_278 = arith.constant 0 : index
    %c0_279 = arith.constant 0 : index
    %175 = vector.load %arg12[%c0_278, %c0_279] : memref<32x528xf32, #tpu.memory_space<vmem>>, vector<16x48xf32>
    tpu.vector_store %arg12[%c0_278, %c0_279], %174 {strides = array<i32>} : memref<32x528xf32, #tpu.memory_space<vmem>>, vector<16x48xf32>,
    %c1_280 = arith.constant 1 : index
    %c0_281 = arith.constant 0 : index
    %176 = vector.load %arg11[%c1_280, %c0_281] : memref<52x48xf32, #tpu.memory_space<vmem>>, vector<16x48xf32>
    %c0_282 = arith.constant 0 : index
    %c48_283 = arith.constant 48 : index
    %177 = vector.load %arg12[%c0_282, %c48_283] : memref<32x528xf32, #tpu.memory_space<vmem>>, vector<16x48xf32>
    tpu.vector_store %arg12[%c0_282, %c48_283], %176 {strides = array<i32>} : memref<32x528xf32, #tpu.memory_space<vmem>>, vector<16x48xf32>,
    %c2_284 = arith.constant 2 : index
    %c0_285 = arith.constant 0 : index
    %178 = vector.load %arg11[%c2_284, %c0_285] : memref<52x48xf32, #tpu.memory_space<vmem>>, vector<16x48xf32>
    %c0_286 = arith.constant 0 : index
    %c96_287 = arith.constant 96 : index
    %179 = vector.load %arg12[%c0_286, %c96_287] : memref<32x528xf32, #tpu.memory_space<vmem>>, vector<16x48xf32>
    tpu.vector_store %arg12[%c0_286, %c96_287], %178 {strides = array<i32>} : memref<32x528xf32, #tpu.memory_space<vmem>>, vector<16x48xf32>,
    %c3_288 = arith.constant 3 : index
    %c0_289 = arith.constant 0 : index
    %180 = vector.load %arg11[%c3_288, %c0_289] : memref<52x48xf32, #tpu.memory_space<vmem>>, vector<16x48xf32>
    %c0_290 = arith.constant 0 : index
    %c144_291 = arith.constant 144 : index
    %181 = vector.load %arg12[%c0_290, %c144_291] : memref<32x528xf32, #tpu.memory_space<vmem>>, vector<16x48xf32>
    tpu.vector_store %arg12[%c0_290, %c144_291], %180 {strides = array<i32>} : memref<32x528xf32, #tpu.memory_space<vmem>>, vector<16x48xf32>,
    %c4_292 = arith.constant 4 : index
    %c0_293 = arith.constant 0 : index
    %182 = vector.load %arg11[%c4_292, %c0_293] : memref<52x48xf32, #tpu.memory_space<vmem>>, vector<16x48xf32>
    %c0_294 = arith.constant 0 : index
    %c192_295 = arith.constant 192 : index
    %183 = vector.load %arg12[%c0_294, %c192_295] : memref<32x528xf32, #tpu.memory_space<vmem>>, vector<16x48xf32>
    tpu.vector_store %arg12[%c0_294, %c192_295], %182 {strides = array<i32>} : memref<32x528xf32, #tpu.memory_space<vmem>>, vector<16x48xf32>,
    %c5_296 = arith.constant 5 : index
    %c0_297 = arith.constant 0 : index
    %184 = vector.load %arg11[%c5_296, %c0_297] : memref<52x48xf32, #tpu.memory_space<vmem>>, vector<16x48xf32>
    %c0_298 = arith.constant 0 : index
    %c240_299 = arith.constant 240 : index
    %185 = vector.load %arg12[%c0_298, %c240_299] : memref<32x528xf32, #tpu.memory_space<vmem>>, vector<16x48xf32>
    tpu.vector_store %arg12[%c0_298, %c240_299], %184 {strides = array<i32>} : memref<32x528xf32, #tpu.memory_space<vmem>>, vector<16x48xf32>,
    %c6_300 = arith.constant 6 : index
    %c0_301 = arith.constant 0 : index
    %186 = vector.load %arg11[%c6_300, %c0_301] : memref<52x48xf32, #tpu.memory_space<vmem>>, vector<16x48xf32>
    %c0_302 = arith.constant 0 : index
    %c288_303 = arith.constant 288 : index
    %187 = vector.load %arg12[%c0_302, %c288_303] : memref<32x528xf32, #tpu.memory_space<vmem>>, vector<16x48xf32>
    tpu.vector_store %arg12[%c0_302, %c288_303], %186 {strides = array<i32>} : memref<32x528xf32, #tpu.memory_space<vmem>>, vector<16x48xf32>,
    %c7_304 = arith.constant 7 : index
    %c0_305 = arith.constant 0 : index
    %188 = vector.load %arg11[%c7_304, %c0_305] : memref<52x48xf32, #tpu.memory_space<vmem>>, vector<16x48xf32>
    %c0_306 = arith.constant 0 : index
    %c336_307 = arith.constant 336 : index
    %189 = vector.load %arg12[%c0_306, %c336_307] : memref<32x528xf32, #tpu.memory_space<vmem>>, vector<16x48xf32>
    tpu.vector_store %arg12[%c0_306, %c336_307], %188 {strides = array<i32>} : memref<32x528xf32, #tpu.memory_space<vmem>>, vector<16x48xf32>,
    %c8_308 = arith.constant 8 : index
    %c0_309 = arith.constant 0 : index
    %190 = vector.load %arg11[%c8_308, %c0_309] : memref<52x48xf32, #tpu.memory_space<vmem>>, vector<16x48xf32>
    %c0_310 = arith.constant 0 : index
    %c384_311 = arith.constant 384 : index
    %191 = vector.load %arg12[%c0_310, %c384_311] : memref<32x528xf32, #tpu.memory_space<vmem>>, vector<16x48xf32>
    tpu.vector_store %arg12[%c0_310, %c384_311], %190 {strides = array<i32>} : memref<32x528xf32, #tpu.memory_space<vmem>>, vector<16x48xf32>,
    %c9_312 = arith.constant 9 : index
    %c0_313 = arith.constant 0 : index
    %192 = vector.load %arg11[%c9_312, %c0_313] : memref<52x48xf32, #tpu.memory_space<vmem>>, vector<16x48xf32>
    %c0_314 = arith.constant 0 : index
    %c432_315 = arith.constant 432 : index
    %193 = vector.load %arg12[%c0_314, %c432_315] : memref<32x528xf32, #tpu.memory_space<vmem>>, vector<16x48xf32>
    tpu.vector_store %arg12[%c0_314, %c432_315], %192 {strides = array<i32>} : memref<32x528xf32, #tpu.memory_space<vmem>>, vector<16x48xf32>,
    %c10_316 = arith.constant 10 : index
    %c0_317 = arith.constant 0 : index
    %194 = vector.load %arg11[%c10_316, %c0_317] : memref<52x48xf32, #tpu.memory_space<vmem>>, vector<16x48xf32>
    %c0_318 = arith.constant 0 : index
    %c480_319 = arith.constant 480 : index
    %195 = vector.load %arg12[%c0_318, %c480_319] : memref<32x528xf32, #tpu.memory_space<vmem>>, vector<16x48xf32>
    tpu.vector_store %arg12[%c0_318, %c480_319], %194 {strides = array<i32>} : memref<32x528xf32, #tpu.memory_space<vmem>>, vector<16x48xf32>,
    %c26_320 = arith.constant 26 : index
    %c0_321 = arith.constant 0 : index
    %196 = vector.load %arg11[%c26_320, %c0_321] : memref<52x48xf32, #tpu.memory_space<vmem>>, vector<16x48xf32>
    %c16_322 = arith.constant 16 : index
    %c0_323 = arith.constant 0 : index
    %197 = vector.load %arg12[%c16_322, %c0_323] : memref<32x528xf32, #tpu.memory_space<vmem>>, vector<16x48xf32>
    tpu.vector_store %arg12[%c16_322, %c0_323], %196 {strides = array<i32>} : memref<32x528xf32, #tpu.memory_space<vmem>>, vector<16x48xf32>,
    %c27_324 = arith.constant 27 : index
    %c0_325 = arith.constant 0 : index
    %198 = vector.load %arg11[%c27_324, %c0_325] : memref<52x48xf32, #tpu.memory_space<vmem>>, vector<16x48xf32>
    %c16_326 = arith.constant 16 : index
    %c48_327 = arith.constant 48 : index
    %199 = vector.load %arg12[%c16_326, %c48_327] : memref<32x528xf32, #tpu.memory_space<vmem>>, vector<16x48xf32>
    tpu.vector_store %arg12[%c16_326, %c48_327], %198 {strides = array<i32>} : memref<32x528xf32, #tpu.memory_space<vmem>>, vector<16x48xf32>,
    %c28_328 = arith.constant 28 : index
    %c0_329 = arith.constant 0 : index
    %200 = vector.load %arg11[%c28_328, %c0_329] : memref<52x48xf32, #tpu.memory_space<vmem>>, vector<16x48xf32>
    %c16_330 = arith.constant 16 : index
    %c96_331 = arith.constant 96 : index
    %201 = vector.load %arg12[%c16_330, %c96_331] : memref<32x528xf32, #tpu.memory_space<vmem>>, vector<16x48xf32>
    tpu.vector_store %arg12[%c16_330, %c96_331], %200 {strides = array<i32>} : memref<32x528xf32, #tpu.memory_space<vmem>>, vector<16x48xf32>,
    %c29_332 = arith.constant 29 : index
    %c0_333 = arith.constant 0 : index
    %202 = vector.load %arg11[%c29_332, %c0_333] : memref<52x48xf32, #tpu.memory_space<vmem>>, vector<16x48xf32>
    %c16_334 = arith.constant 16 : index
    %c144_335 = arith.constant 144 : index
    %203 = vector.load %arg12[%c16_334, %c144_335] : memref<32x528xf32, #tpu.memory_space<vmem>>, vector<16x48xf32>
    tpu.vector_store %arg12[%c16_334, %c144_335], %202 {strides = array<i32>} : memref<32x528xf32, #tpu.memory_space<vmem>>, vector<16x48xf32>,
    %c30_336 = arith.constant 30 : index
    %c0_337 = arith.constant 0 : index
    %204 = vector.load %arg11[%c30_336, %c0_337] : memref<52x48xf32, #tpu.memory_space<vmem>>, vector<16x48xf32>
    %c16_338 = arith.constant 16 : index
    %c192_339 = arith.constant 192 : index
    %205 = vector.load %arg12[%c16_338, %c192_339] : memref<32x528xf32, #tpu.memory_space<vmem>>, vector<16x48xf32>
    tpu.vector_store %arg12[%c16_338, %c192_339], %204 {strides = array<i32>} : memref<32x528xf32, #tpu.memory_space<vmem>>, vector<16x48xf32>,
    %c31_340 = arith.constant 31 : index
    %c0_341 = arith.constant 0 : index
    %206 = vector.load %arg11[%c31_340, %c0_341] : memref<52x48xf32, #tpu.memory_space<vmem>>, vector<16x48xf32>
    %c16_342 = arith.constant 16 : index
    %c240_343 = arith.constant 240 : index
    %207 = vector.load %arg12[%c16_342, %c240_343] : memref<32x528xf32, #tpu.memory_space<vmem>>, vector<16x48xf32>
    tpu.vector_store %arg12[%c16_342, %c240_343], %206 {strides = array<i32>} : memref<32x528xf32, #tpu.memory_space<vmem>>, vector<16x48xf32>,
    %c32_344 = arith.constant 32 : index
    %c0_345 = arith.constant 0 : index
    %208 = vector.load %arg11[%c32_344, %c0_345] : memref<52x48xf32, #tpu.memory_space<vmem>>, vector<16x48xf32>
    %c16_346 = arith.constant 16 : index
    %c288_347 = arith.constant 288 : index
    %209 = vector.load %arg12[%c16_346, %c288_347] : memref<32x528xf32, #tpu.memory_space<vmem>>, vector<16x48xf32>
    tpu.vector_store %arg12[%c16_346, %c288_347], %208 {strides = array<i32>} : memref<32x528xf32, #tpu.memory_space<vmem>>, vector<16x48xf32>,
    %c33_348 = arith.constant 33 : index
    %c0_349 = arith.constant 0 : index
    %210 = vector.load %arg11[%c33_348, %c0_349] : memref<52x48xf32, #tpu.memory_space<vmem>>, vector<16x48xf32>
    %c16_350 = arith.constant 16 : index
    %c336_351 = arith.constant 336 : index
    %211 = vector.load %arg12[%c16_350, %c336_351] : memref<32x528xf32, #tpu.memory_space<vmem>>, vector<16x48xf32>
    tpu.vector_store %arg12[%c16_350, %c336_351], %210 {strides = array<i32>} : memref<32x528xf32, #tpu.memory_space<vmem>>, vector<16x48xf32>,
    %c34_352 = arith.constant 34 : index
    %c0_353 = arith.constant 0 : index
    %212 = vector.load %arg11[%c34_352, %c0_353] : memref<52x48xf32, #tpu.memory_space<vmem>>, vector<16x48xf32>
    %c16_354 = arith.constant 16 : index
    %c384_355 = arith.constant 384 : index
    %213 = vector.load %arg12[%c16_354, %c384_355] : memref<32x528xf32, #tpu.memory_space<vmem>>, vector<16x48xf32>
    tpu.vector_store %arg12[%c16_354, %c384_355], %212 {strides = array<i32>} : memref<32x528xf32, #tpu.memory_space<vmem>>, vector<16x48xf32>,
    %c35_356 = arith.constant 35 : index
    %c0_357 = arith.constant 0 : index
    %214 = vector.load %arg11[%c35_356, %c0_357] : memref<52x48xf32, #tpu.memory_space<vmem>>, vector<16x48xf32>
    %c16_358 = arith.constant 16 : index
    %c432_359 = arith.constant 432 : index
    %215 = vector.load %arg12[%c16_358, %c432_359] : memref<32x528xf32, #tpu.memory_space<vmem>>, vector<16x48xf32>
    tpu.vector_store %arg12[%c16_358, %c432_359], %214 {strides = array<i32>} : memref<32x528xf32, #tpu.memory_space<vmem>>, vector<16x48xf32>,
    %c36_360 = arith.constant 36 : index
    %c0_361 = arith.constant 0 : index
    %216 = vector.load %arg11[%c36_360, %c0_361] : memref<52x48xf32, #tpu.memory_space<vmem>>, vector<16x48xf32>
    %c16_362 = arith.constant 16 : index
    %c480_363 = arith.constant 480 : index
    %217 = vector.load %arg12[%c16_362, %c480_363] : memref<32x528xf32, #tpu.memory_space<vmem>>, vector<16x48xf32>
    tpu.vector_store %arg12[%c16_362, %c480_363], %216 {strides = array<i32>} : memref<32x528xf32, #tpu.memory_space<vmem>>, vector<16x48xf32>,
    %c0_364 = arith.constant 0 : index
    %c0_365 = arith.constant 0 : index
    %218 = vector.load %arg12[%c0_364, %c0_365] : memref<32x528xf32, #tpu.memory_space<vmem>>, vector<32x528xf32>
    %c0_366 = arith.constant 0 : index
    %c0_367 = arith.constant 0 : index
    %219 = vector.load %arg8[%c0_366, %c0_367] : memref<528x32xf32, #tpu.memory_space<vmem>>, vector<528x32xf32>
    %cst_368 = arith.constant dense<0.000000e+00> : vector<32x32xf32>
    %220 = tpu.matmul %218, %219, %cst_368 {dimension_numbers = #tpu.dot_dimension_numbers<[1], [0], [0], [1], [0, 0, 1, 1], [], []>} : vector<32x528xf32>, vector<528x32xf32>, vector<32x32xf32> -> vector<32x32xf32>
    %c0_369 = arith.constant 0 : index
    %c0_370 = arith.constant 0 : index
    %221 = vector.load %arg9[%c0_369, %c0_370] : memref<1x32xf32, #tpu.memory_space<vmem>>, vector<1x32xf32>
    %222 = vector.broadcast %221 : vector<1x32xf32> to vector<32x32xf32>
    %223 = arith.addf %220, %222 : vector<32x32xf32>
    %c0_371 = arith.constant 0 : index
    %c0_372 = arith.constant 0 : index
    %224 = vector.load %arg10[%c0_371, %c0_372] : memref<32x32xf32, #tpu.memory_space<vmem>>, vector<32x32xf32>
    tpu.vector_store %arg10[%c0_371, %c0_372], %223 {strides = array<i32>} : memref<32x32xf32, #tpu.memory_space<vmem>>, vector<32x32xf32>,
    return
  }
  func.func @transform_0(%arg0: i32) -> (i32, i32) {
    %c0_i32 = arith.constant 0 : i32
    %c0_i32_0 = arith.constant 0 : i32
    return %arg0, %c0_i32 : i32, i32
  }
  func.func @transform_1(%arg0: i32) -> (i32, i32) {
    %c0_i32 = arith.constant 0 : i32
    %c0_i32_0 = arith.constant 0 : i32
    %c0_i32_1 = arith.constant 0 : i32
    return %c0_i32, %c0_i32_0 : i32, i32
  }
  func.func @transform_2(%arg0: i32) -> (i32, i32) {
    %c0_i32 = arith.constant 0 : i32
    %c0_i32_0 = arith.constant 0 : i32
    %c0_i32_1 = arith.constant 0 : i32
    return %c0_i32, %c0_i32_0 : i32, i32
  }
  func.func @transform_3(%arg0: i32) -> (i32, i32) {
    %c0_i32 = arith.constant 0 : i32
    %c0_i32_0 = arith.constant 0 : i32
    %c0_i32_1 = arith.constant 0 : i32
    return %c0_i32, %c0_i32_0 : i32, i32
  }
  func.func @transform_4(%arg0: i32) -> (i32, i32) {
    %c0_i32 = arith.constant 0 : i32
    %c0_i32_0 = arith.constant 0 : i32
    %c0_i32_1 = arith.constant 0 : i32
    return %c0_i32, %c0_i32_0 : i32, i32
  }
  func.func @transform_5(%arg0: i32) -> (i32, i32) {
    %c0_i32 = arith.constant 0 : i32
    %c0_i32_0 = arith.constant 0 : i32
    %c0_i32_1 = arith.constant 0 : i32
    return %c0_i32, %c0_i32_0 : i32, i32
  }
  func.func @transform_6(%arg0: i32) -> (i32, i32) {
    %c0_i32 = arith.constant 0 : i32
    %c0_i32_0 = arith.constant 0 : i32
    %c0_i32_1 = arith.constant 0 : i32
    return %c0_i32, %c0_i32_0 : i32, i32
  }
  func.func @transform_7(%arg0: i32) -> (i32, i32) {
    %c0_i32 = arith.constant 0 : i32
    %c0_i32_0 = arith.constant 0 : i32
    %c0_i32_1 = arith.constant 0 : i32
    return %c0_i32, %c0_i32_0 : i32, i32
  }
  func.func @transform_8(%arg0: i32) -> (i32, i32) {
    %c0_i32 = arith.constant 0 : i32
    %c0_i32_0 = arith.constant 0 : i32
    %c0_i32_1 = arith.constant 0 : i32
    return %c0_i32, %c0_i32_0 : i32, i32
  }
  func.func @transform_9(%arg0: i32) -> (i32, i32) {
    %c0_i32 = arith.constant 0 : i32
    %c0_i32_0 = arith.constant 0 : i32
    return %arg0, %c0_i32 : i32, i32
  }
}

</mosaic_0001>

<llo_original>
// kernel: tpu_custom_call.1
$region0: #{tpu_custom_call.1}
  #allocation0 [shape = 'u32[]', space=smem, size = 0x4, offset = 0x4, fixed_abs, tag = 'smem constant byte address 0x4 - core index']
  #allocation1 [shape = 'u32[144,128]{1,0:T(1,128)}', space=vmem, size = 0x12000, scoped, tag = 'internal scratch']
  #allocation2 [shape = 'f32[52,48]{1,0:T(8,128)}', space=vmem, size = 0x7000, scoped, tag = 'scratch operand']
  #allocation3 [shape = 'f32[32,528]{1,0:T(8,128)}', space=vmem, size = 0x14000, scoped, tag = 'scratch operand']
  %s0 = inlined_call_operand.vmem [shape: f32[32,16], index: 0, kind: input, shape index: {}]
  %s1 = inlined_call_operand.vmem [shape: f32[176,48], index: 1, kind: input, shape index: {}]
  %s2 = inlined_call_operand.vmem [shape: f32[1,48], index: 2, kind: input, shape index: {}]
  %s3 = inlined_call_operand.vmem [shape: f32[528,48], index: 3, kind: input, shape index: {}]
  %s4 = inlined_call_operand.vmem [shape: f32[1,48], index: 4, kind: input, shape index: {}]
  %s5 = inlined_call_operand.vmem [shape: f32[528,48], index: 5, kind: input, shape index: {}]
  %s6 = inlined_call_operand.vmem [shape: f32[1,48], index: 6, kind: input, shape index: {}]
  %s7 = inlined_call_operand.vmem [shape: f32[528,32], index: 7, kind: input, shape index: {}]
  %s8 = inlined_call_operand.vmem [shape: f32[1,32], index: 8, kind: input, shape index: {}]
  %s9 = inlined_call_operand.hbm [shape: f32[32,32], index: 9, kind: output, shape index: {}]
  %s10 = sld [smem:[#allocation0]]
  $region46: #{tpu_custom_call.1} parent=0
    _
  %s12 = ssub.s32 1, %s10
  %s13 = scalar_select 0, %s12, %s10
  $region1: #{tpu_custom_call.1} parent=0
    #allocation4 [shape = 'u8[16384]{0}', space=vmem, size = 0x4000, scoped, tag = 'output window, operand 0, single buffered']
    #allocation5 [shape = 's32[1]{0}', space=sflag, size = 0x4, scoped, tag = 'scoped memory for tpu_custom_call.1']
    %14 = vsyncpa [#allocation5], 0
    // Predicated region
    $region2: #{tpu_custom_call.1} parent=1 // pred_check
      _
    $region3: #{tpu_custom_call.1} parent=1 // pred_check_branch
      %16 = sbr.rel (0) target = $region5
    $region4: #{tpu_custom_call.1} parent=1 // pred_region
      _
    $region5: #{tpu_custom_call.1} parent=1 // pred_fallthru
      _
    // Predicated region
    $region6: #{tpu_custom_call.1} parent=1 // pred_check
      _
    $region7: #{tpu_custom_call.1} parent=1 // pred_check_branch
      %18 = sbr.rel (0) target = $region9
    $region8: #{tpu_custom_call.1} parent=1 // pred_region
      _
    $region9: #{tpu_custom_call.1} parent=1 // pred_fallthru
      _
    // Predicated region
    $region10: #{tpu_custom_call.1} parent=1 // pred_check
      _
    $region11: #{tpu_custom_call.1} parent=1 // pred_check_branch
      %20 = sbr.rel (0) target = $region13
    $region12: #{tpu_custom_call.1} parent=1 // pred_region
      _
    $region13: #{tpu_custom_call.1} parent=1 // pred_fallthru
      _
    // Predicated region
    $region14: #{tpu_custom_call.1} parent=1 // pred_check
      _
    $region15: #{tpu_custom_call.1} parent=1 // pred_check_branch
      %22 = sbr.rel (0) target = $region17
    $region16: #{tpu_custom_call.1} parent=1 // pred_region
      _
    $region17: #{tpu_custom_call.1} parent=1 // pred_fallthru
      _
    // Predicated region
    $region18: #{tpu_custom_call.1} parent=1 // pred_check
      _
    $region19: #{tpu_custom_call.1} parent=1 // pred_check_branch
      %24 = sbr.rel (0) target = $region21
    $region20: #{tpu_custom_call.1} parent=1 // pred_region
      _
    $region21: #{tpu_custom_call.1} parent=1 // pred_fallthru
      _
    // Predicated region
    $region22: #{tpu_custom_call.1} parent=1 // pred_check
      _
    $region23: #{tpu_custom_call.1} parent=1 // pred_check_branch
      %26 = sbr.rel (0) target = $region25
    $region24: #{tpu_custom_call.1} parent=1 // pred_region
      _
    $region25: #{tpu_custom_call.1} parent=1 // pred_fallthru
      _
    // Predicated region
    $region26: #{tpu_custom_call.1} parent=1 // pred_check
      _
    $region27: #{tpu_custom_call.1} parent=1 // pred_check_branch
      %28 = sbr.rel (0) target = $region29
    $region28: #{tpu_custom_call.1} parent=1 // pred_region
      _
    $region29: #{tpu_custom_call.1} parent=1 // pred_fallthru
      _
    // Predicated region
    $region30: #{tpu_custom_call.1} parent=1 // pred_check
      _
    $region31: #{tpu_custom_call.1} parent=1 // pred_check_branch
      %30 = sbr.rel (0) target = $region33
    $region32: #{tpu_custom_call.1} parent=1 // pred_region
      _
    $region33: #{tpu_custom_call.1} parent=1 // pred_fallthru
      _
    // Predicated region
    $region34: #{tpu_custom_call.1} parent=1 // pred_check
      _
    $region35: #{tpu_custom_call.1} parent=1 // pred_check_branch
      %32 = sbr.rel (0) target = $region37
    $region36: #{tpu_custom_call.1} parent=1 // pred_region
      _
    $region37: #{tpu_custom_call.1} parent=1 // pred_fallthru
      _
    %vm33 = vcmask 389120
    %34 = vst.msk [vmem:[#allocation2] sm:$0x1f] %vm33, 0.0
    %35 = vst.msk [vmem:[#allocation2 + $0x15] sm:$0x1f] %vm33, 0.0
    %36 = vst.msk [vmem:[#allocation2 + $0x1a] sm:$0x1f] %vm33, 0.0
    %37 = vst.msk [vmem:[#allocation2 + $0x2f] sm:$0x1f] %vm33, 0.0
    %v38 = vld [vmem:[%s0] sm:$0xff]
    %v39 = vld [vmem:[%s0 + $0x8] sm:$0xff]
    %vm40 = vcmask 130048
    %41 = vst.msk [vmem:[#allocation2 + $0x5] sm:$0xff] %vm40, %v38
    %42 = vst.msk [vmem:[#allocation2 + $0xd] sm:$0xff] %vm40, %v39
    %v43 = vld [vmem:[%s0 + $0x10] sm:$0xff]
    %v44 = vld [vmem:[%s0 + $0x18] sm:$0xff]
    %45 = vst.msk [vmem:[#allocation2 + $0x1f] sm:$0xff] %vm40, %v43
    %46 = vst.msk [vmem:[#allocation2 + $0x27] sm:$0xff] %vm40, %v44
    %v47 = vld [vmem:[#allocation2] sm:$0xff]
    %v48 = vld [vmem:[#allocation2 + $0x8] sm:$0xff]
    %49 = vst.msk [vmem:[#allocation3] sm:$0xff] %vm40, %v47
    %50 = vst.msk [vmem:[#allocation3 + $0x28] sm:$0xff] %vm40, %v48
    %v51 = vld [vmem:[#allocation2 + $0x1] sm:$0xff]
    %v52 = vld [vmem:[#allocation2 + $0x9] sm:$0xff]
    %55 = vrot.lane.b32.xlu0 %v51, 16
    %v56 = vpop.permute.xlu0 %55
    %57 = vrot.lane.b32.xlu0 %v52, 16
    %v58 = vpop.permute.xlu0 %57
    %vm61 = vcmask 261248
    %62 = vst.msk [vmem:[#allocation3] sm:$0xff] %vm61, %v56
    %63 = vst.msk [vmem:[#allocation3 + $0x28] sm:$0xff] %vm61, %v58
    %v64 = vld [vmem:[#allocation2 + $0x2] sm:$0xff]
    %v65 = vld [vmem:[#allocation2 + $0xa] sm:$0xff]
    %68 = vrot.lane.b32.xlu0 %v64, 32
    %v69 = vpop.permute.xlu0 %68
    %70 = vrot.lane.b32.xlu0 %v65, 32
    %v71 = vpop.permute.xlu0 %70
    %vm74 = vcmask 392448
    %75 = vst.msk [vmem:[#allocation3] sm:$0xff] %vm74, %v69
    %76 = vst.msk [vmem:[#allocation3 + $0x28] sm:$0xff] %vm74, %v71
    %v77 = vld [vmem:[#allocation2 + $0x3] sm:$0xff]
    %v78 = vld [vmem:[#allocation2 + $0xb] sm:$0xff]
    %81 = vrot.lane.b32.xlu0 %v77, 48
    %v82 = vpop.permute.xlu0 %81
    %83 = vrot.lane.b32.xlu0 %v78, 48
    %v84 = vpop.permute.xlu0 %83
    %vm87 = vcmask 523648
    %88 = vst.msk [vmem:[#allocation3] sm:$0xff] %vm87, %v82
    %89 = vst.msk [vmem:[#allocation3 + $0x28] sm:$0xff] %vm87, %v84
    %v90 = vld [vmem:[#allocation2 + $0x4] sm:$0xff]
    %v91 = vld [vmem:[#allocation2 + $0xc] sm:$0xff]
    %94 = vrot.lane.b32.xlu0 %v90, 64
    %v95 = vpop.permute.xlu0 %94
    %96 = vrot.lane.b32.xlu0 %v91, 64
    %v97 = vpop.permute.xlu0 %96
    %vm100 = vcmask 654848
    %101 = vst.msk [vmem:[#allocation3] sm:$0xff] %vm100, %v95
    %102 = vst.msk [vmem:[#allocation3 + $0x28] sm:$0xff] %vm100, %v97
    %v103 = vld [vmem:[#allocation2 + $0x5] sm:$0xff]
    %v104 = vld [vmem:[#allocation2 + $0xd] sm:$0xff]
    %107 = vrot.lane.b32.xlu0 %v103, 80
    %v108 = vpop.permute.xlu0 %107
    %109 = vrot.lane.b32.xlu0 %v104, 80
    %v110 = vpop.permute.xlu0 %109
    %vm113 = vcmask 786048
    %114 = vst.msk [vmem:[#allocation3] sm:$0xff] %vm113, %v108
    %115 = vst.msk [vmem:[#allocation3 + $0x28] sm:$0xff] %vm113, %v110
    %v116 = vld [vmem:[#allocation2 + $0x6] sm:$0xff]
    %v117 = vld [vmem:[#allocation2 + $0xe] sm:$0xff]
    %120 = vrot.lane.b32.xlu0 %v116, 96
    %v121 = vpop.permute.xlu0 %120
    %122 = vrot.lane.b32.xlu0 %v117, 96
    %v123 = vpop.permute.xlu0 %122
    %vm126 = vcmask 917248
    %127 = vst.msk [vmem:[#allocation3] sm:$0xff] %vm126, %v121
    %128 = vst.msk [vmem:[#allocation3 + $0x28] sm:$0xff] %vm126, %v123
    %v129 = vld [vmem:[#allocation2 + $0x7] sm:$0xff]
    %v130 = vld [vmem:[#allocation2 + $0xf] sm:$0xff]
    %133 = vrot.lane.b32.xlu0 %v129, 112
    %v134 = vpop.permute.xlu0 %133
    %135 = vrot.lane.b32.xlu0 %v130, 112
    %v136 = vpop.permute.xlu0 %135
    %vm139 = vcmask 1048448
    %140 = vst.msk [vmem:[#allocation3] sm:$0xff] %vm139, %v134
    %141 = vst.msk [vmem:[#allocation3 + $0x28] sm:$0xff] %vm139, %v136
    %v142 = vld [vmem:[#allocation2 + $0x8] sm:$0xff]
    %v143 = vld [vmem:[#allocation2 + $0x10] sm:$0xff]
    %144 = vst.msk [vmem:[#allocation3 + $0x8] sm:$0xff] %vm40, %v142
    %145 = vst.msk [vmem:[#allocation3 + $0x30] sm:$0xff] %vm40, %v143
    %v146 = vld [vmem:[#allocation2 + $0x9] sm:$0xff]
    %v147 = vld [vmem:[#allocation2 + $0x11] sm:$0xff]
    %150 = vrot.lane.b32.xlu0 %v146, 16
    %v151 = vpop.permute.xlu0 %150
    %152 = vrot.lane.b32.xlu0 %v147, 16
    %v153 = vpop.permute.xlu0 %152
    %156 = vst.msk [vmem:[#allocation3 + $0x8] sm:$0xff] %vm61, %v151
    %157 = vst.msk [vmem:[#allocation3 + $0x30] sm:$0xff] %vm61, %v153
    %v158 = vld [vmem:[#allocation2 + $0xa] sm:$0xff]
    %v159 = vld [vmem:[#allocation2 + $0x12] sm:$0xff]
    %162 = vrot.lane.b32.xlu0 %v158, 32
    %v163 = vpop.permute.xlu0 %162
    %164 = vrot.lane.b32.xlu0 %v159, 32
    %v165 = vpop.permute.xlu0 %164
    %168 = vst.msk [vmem:[#allocation3 + $0x8] sm:$0xff] %vm74, %v163
    %169 = vst.msk [vmem:[#allocation3 + $0x30] sm:$0xff] %vm74, %v165
    %v170 = vld [vmem:[#allocation2 + $0x1a] sm:$0xff]
    %v171 = vld [vmem:[#allocation2 + $0x22] sm:$0xff]
    %172 = vst.msk [vmem:[#allocation3 + $0x50] sm:$0xff] %vm40, %v170
    %173 = vst.msk [vmem:[#allocation3 + $0x78] sm:$0xff] %vm40, %v171
    %v174 = vld [vmem:[#allocation2 + $0x1b] sm:$0xff]
    %v175 = vld [vmem:[#allocation2 + $0x23] sm:$0xff]
    %178 = vrot.lane.b32.xlu0 %v174, 16
    %v179 = vpop.permute.xlu0 %178
    %180 = vrot.lane.b32.xlu0 %v175, 16
    %v181 = vpop.permute.xlu0 %180
    %184 = vst.msk [vmem:[#allocation3 + $0x50] sm:$0xff] %vm61, %v179
    %185 = vst.msk [vmem:[#allocation3 + $0x78] sm:$0xff] %vm61, %v181
    %v186 = vld [vmem:[#allocation2 + $0x1c] sm:$0xff]
    %v187 = vld [vmem:[#allocation2 + $0x24] sm:$0xff]
    %190 = vrot.lane.b32.xlu0 %v186, 32
    %v191 = vpop.permute.xlu0 %190
    %192 = vrot.lane.b32.xlu0 %v187, 32
    %v193 = vpop.permute.xlu0 %192
    %196 = vst.msk [vmem:[#allocation3 + $0x50] sm:$0xff] %vm74, %v191
    %197 = vst.msk [vmem:[#allocation3 + $0x78] sm:$0xff] %vm74, %v193
    %v198 = vld [vmem:[#allocation2 + $0x1d] sm:$0xff]
    %v199 = vld [vmem:[#allocation2 + $0x25] sm:$0xff]
    %202 = vrot.lane.b32.xlu0 %v198, 48
    %v203 = vpop.permute.xlu0 %202
    %204 = vrot.lane.b32.xlu0 %v199, 48
    %v205 = vpop.permute.xlu0 %204
    %208 = vst.msk [vmem:[#allocation3 + $0x50] sm:$0xff] %vm87, %v203
    %209 = vst.msk [vmem:[#allocation3 + $0x78] sm:$0xff] %vm87, %v205
    %v210 = vld [vmem:[#allocation2 + $0x1e] sm:$0xff]
    %v211 = vld [vmem:[#allocation2 + $0x26] sm:$0xff]
    %214 = vrot.lane.b32.xlu0 %v210, 64
    %v215 = vpop.permute.xlu0 %214
    %216 = vrot.lane.b32.xlu0 %v211, 64
    %v217 = vpop.permute.xlu0 %216
    %220 = vst.msk [vmem:[#allocation3 + $0x50] sm:$0xff] %vm100, %v215
    %221 = vst.msk [vmem:[#allocation3 + $0x78] sm:$0xff] %vm100, %v217
    %v222 = vld [vmem:[#allocation2 + $0x1f] sm:$0xff]
    %v223 = vld [vmem:[#allocation2 + $0x27] sm:$0xff]
    %226 = vrot.lane.b32.xlu0 %v222, 80
    %v227 = vpop.permute.xlu0 %226
    %228 = vrot.lane.b32.xlu0 %v223, 80
    %v229 = vpop.permute.xlu0 %228
    %232 = vst.msk [vmem:[#allocation3 + $0x50] sm:$0xff] %vm113, %v227
    %233 = vst.msk [vmem:[#allocation3 + $0x78] sm:$0xff] %vm113, %v229
    %v234 = vld [vmem:[#allocation2 + $0x20] sm:$0xff]
    %v235 = vld [vmem:[#allocation2 + $0x28] sm:$0xff]
    %238 = vrot.lane.b32.xlu0 %v234, 96
    %v239 = vpop.permute.xlu0 %238
    %240 = vrot.lane.b32.xlu0 %v235, 96
    %v241 = vpop.permute.xlu0 %240
    %244 = vst.msk [vmem:[#allocation3 + $0x50] sm:$0xff] %vm126, %v239
    %245 = vst.msk [vmem:[#allocation3 + $0x78] sm:$0xff] %vm126, %v241
    %v246 = vld [vmem:[#allocation2 + $0x21] sm:$0xff]
    %v247 = vld [vmem:[#allocation2 + $0x29] sm:$0xff]
    %250 = vrot.lane.b32.xlu0 %v246, 112
    %v251 = vpop.permute.xlu0 %250
    %252 = vrot.lane.b32.xlu0 %v247, 112
    %v253 = vpop.permute.xlu0 %252
    %256 = vst.msk [vmem:[#allocation3 + $0x50] sm:$0xff] %vm139, %v251
    %257 = vst.msk [vmem:[#allocation3 + $0x78] sm:$0xff] %vm139, %v253
    %v258 = vld [vmem:[#allocation2 + $0x22] sm:$0xff]
    %v259 = vld [vmem:[#allocation2 + $0x2a] sm:$0xff]
    %260 = vst.msk [vmem:[#allocation3 + $0x58] sm:$0xff] %vm40, %v258
    %261 = vst.msk [vmem:[#allocation3 + $0x80] sm:$0xff] %vm40, %v259
    %v262 = vld [vmem:[#allocation2 + $0x23] sm:$0xff]
    %v263 = vld [vmem:[#allocation2 + $0x2b] sm:$0xff]
    %266 = vrot.lane.b32.xlu0 %v262, 16
    %v267 = vpop.permute.xlu0 %266
    %268 = vrot.lane.b32.xlu0 %v263, 16
    %v269 = vpop.permute.xlu0 %268
    %272 = vst.msk [vmem:[#allocation3 + $0x58] sm:$0xff] %vm61, %v267
    %273 = vst.msk [vmem:[#allocation3 + $0x80] sm:$0xff] %vm61, %v269
    %v274 = vld [vmem:[#allocation2 + $0x24] sm:$0xff]
    %v275 = vld [vmem:[#allocation2 + $0x2c] sm:$0xff]
    %278 = vrot.lane.b32.xlu0 %v274, 32
    %v279 = vpop.permute.xlu0 %278
    %280 = vrot.lane.b32.xlu0 %v275, 32
    %v281 = vpop.permute.xlu0 %280
    %284 = vst.msk [vmem:[#allocation3 + $0x58] sm:$0xff] %vm74, %v279
    %285 = vst.msk [vmem:[#allocation3 + $0x80] sm:$0xff] %vm74, %v281
    %v286 = vld [vmem:[#allocation3] sm:$0xff]
    %v287 = vld [vmem:[#allocation3 + $0x8] sm:$0xff]
    %v288 = vld [vmem:[#allocation3 + $0x28] sm:$0xff]
    %v289 = vld [vmem:[#allocation3 + $0x30] sm:$0xff]
    %v290 = vld [vmem:[#allocation3 + $0x50] sm:$0xff]
    %v291 = vld [vmem:[#allocation3 + $0x58] sm:$0xff]
    %v292 = vld [vmem:[#allocation3 + $0x78] sm:$0xff]
    %v293 = vld [vmem:[#allocation3 + $0x80] sm:$0xff]
    %v294 = vld [vmem:[%s1] sm:$0xff]
    %v295 = vld [vmem:[%s1 + $0x8] sm:$0xff]
    %v296 = vld [vmem:[%s1 + $0x10] sm:$0xff]
    %v297 = vld [vmem:[%s1 + $0x18] sm:$0xff]
    %v298 = vld [vmem:[%s1 + $0x20] sm:$0xff]
    %v299 = vld [vmem:[%s1 + $0x28] sm:$0xff]
    %v300 = vld [vmem:[%s1 + $0x30] sm:$0xff]
    %v301 = vld [vmem:[%s1 + $0x38] sm:$0xff]
    %v302 = vld [vmem:[%s1 + $0x40] sm:$0xff]
    %v303 = vld [vmem:[%s1 + $0x48] sm:$0xff]
    %v304 = vld [vmem:[%s1 + $0x50] sm:$0xff]
    %v305 = vld [vmem:[%s1 + $0x58] sm:$0xff]
    %v306 = vld [vmem:[%s1 + $0x60] sm:$0xff]
    %v307 = vld [vmem:[%s1 + $0x68] sm:$0xff]
    %v308 = vld [vmem:[%s1 + $0x70] sm:$0xff]
    %v309 = vld [vmem:[%s1 + $0x78] sm:$0xff]
    %v310 = vld [vmem:[%s1 + $0x80] sm:$0xff]
    %v311 = vld [vmem:[%s1 + $0x88] sm:$0xff]
    %v312 = vld [vmem:[%s1 + $0x90] sm:$0xff]
    %v313 = vld [vmem:[%s1 + $0x98] sm:$0xff]
    %v314 = vld [vmem:[%s1 + $0xa0] sm:$0xff]
    %v315 = vld [vmem:[%s1 + $0xa8] sm:$0xff]
    %v316 = vld [vmem:[%s2] sm:$0x1]
    %v318 = vlaneseq
    %v319 = vshrl.u32 %v318, 7
    %v320 = vsub.s32 0, %v319
    %v321 = vrot.slane %v316, %v320
    %vm323 = vcmask 392192
    %v325 = vsel %vm323, %v287, 0
    %v328 = vsel %vm323, %v289, 0
    %v331 = vsel %vm323, %v291, 0
    %v334 = vsel %vm323, %v293, 0
    %336 = vmatprep.subr.mxu0 0.0
    %337 = vmatpush1.msra.mxu0 %v294
    %338 = vmatprep.subr.mxu0 0.0
    %339 = vmatpush1.msra.mxu0 %v295
    %340 = vmatprep.subr.mxu0 0.0
    %341 = vmatpush1.msra.mxu0 %v296
    %342 = vmatprep.subr.mxu0 0.0
    %343 = vmatpush1.msra.mxu0 %v297
    %344 = vmatprep.subr.mxu0 0.0
    %345 = vmatpush1.msra.mxu0 %v298
    %346 = vmatprep.subr.mxu0 0.0
    %347 = vmatpush1.msra.mxu0 %v299
    %348 = vmatprep.subr.mxu0 0.0
    %349 = vmatpush1.msra.mxu0 %v300
    %350 = vmatprep.subr.mxu0 0.0
    %351 = vmatpush1.msra.mxu0 %v301
    %352 = vmatprep.subr.mxu0 0.0
    %353 = vmatpush1.msra.mxu0 %v302
    %354 = vmatprep.subr.mxu0 0.0
    %355 = vmatpush1.msra.mxu0 %v303
    %356 = vmatprep.subr.mxu0 0.0
    %357 = vmatpush1.msra.mxu0 %v304
    %358 = vmatprep.subr.mxu0 0.0
    %359 = vmatpush1.msra.mxu0 %v305
    %360 = vmatprep.subr.mxu0 0.0
    %361 = vmatpush1.msra.mxu0 %v306
    %362 = vmatprep.subr.mxu0 0.0
    %363 = vmatpush1.msra.mxu0 %v307
    %364 = vmatprep.subr.mxu0 0.0
    %365 = vmatpush1.msra.mxu0 %v308
    %366 = vmatprep.subr.mxu0 0.0
    %367 = vmatpush1.msra.mxu0 %v309
    %368 = vmatprep.subr.mxu0 0.0
    %369 = vmatpush1.msra.mxu0 %v310
    %370 = vmatprep.subr.mxu0 0.0
    %371 = vmatpush1.msra.mxu0 %v311
    %372 = vmatprep.subr.mxu0 0.0
    %373 = vmatpush1.msra.mxu0 %v312
    %374 = vmatprep.subr.mxu0 0.0
    %375 = vmatpush1.msra.mxu0 %v313
    %376 = vmatprep.subr.mxu0 0.0
    %377 = vmatpush1.msra.mxu0 %v314
    %378 = vmatprep.subr.mxu0 0.0
    %379 = vmatpush1.msra.mxu0 %v315
    %380 = vmatprep.subr.mxu0 0.0
    %381 = vmatpush1.msra.mxu0 0.0
    %382 = vmatprep.subr.mxu0 0.0
    %383 = vmatpush1.msra.mxu0 0.0
    %384 = vmatprep.subr.mxu0 0.0
    %385 = vmatpush1.msra.mxu0 0.0
    %386 = vmatprep.subr.mxu0 0.0
    %387 = vmatpush1.msra.mxu0 0.0
    %388 = vmatprep.subr.mxu0 0.0
    %389 = vmatpush1.msra.mxu0 0.0
    %390 = vmatprep.subr.mxu0 0.0
    %391 = vmatpush1.msra.mxu0 0.0
    %392 = vmatprep.subr.mxu0 0.0
    %393 = vmatpush1.msra.mxu0 0.0
    %394 = vmatprep.subr.mxu0 0.0
    %395 = vmatpush1.msra.mxu0 0.0
    %396 = vmatprep.subr.mxu0 0.0
    %397 = vmatpush1.msra.mxu0 0.0
    %398 = vmatprep.subr.mxu0 0.0
    %399 = vmatpush1.msra.mxu0 0.0
    %400 = vmatprep.mubr.f32.mxu0 %v325
    %401 = vmatmul.mubr.f32.gmra.mrb[0].mxu0 %v286
    %v402 = vpop.f32.mrb[0].mxu0
    %v403 = vadd.f32 %v321, %v402
    %v404 = vpop.f32.mrb[0].mxu0
    %405 = vmatprep.mubr.f32.mxu0 %v328
    %406 = vmatmul.mubr.f32.gmra.mrb[0].mxu0 %v288
    %v407 = vpop.f32.mrb[0].mxu0
    %v408 = vadd.f32 %v321, %v407
    %v409 = vpop.f32.mrb[0].mxu0
    %410 = vmatprep.mubr.f32.mxu0 %v331
    %411 = vmatmul.mubr.f32.gmra.mrb[0].mxu0 %v290
    %v412 = vpop.f32.mrb[0].mxu0
    %v413 = vadd.f32 %v321, %v412
    %v414 = vpop.f32.mrb[0].mxu0
    %415 = vmatprep.mubr.f32.mxu0 %v334
    %416 = vmatmul.mubr.f32.gmra.mrb[0].mxu0 %v292
    %v417 = vpop.f32.mrb[0].mxu0
    %v418 = vadd.f32 %v321, %v417
    %v419 = vpop.f32.mrb[0].mxu0
    %420 = vdwg.mxu0
    %421 = vst.msk [vmem:[#allocation2 + $0x5] sm:$0xff] %vm323, %v403
    %422 = vst.msk [vmem:[#allocation2 + $0xd] sm:$0xff] %vm323, %v408
    %423 = vst.msk [vmem:[#allocation2 + $0x1f] sm:$0xff] %vm323, %v413
    %424 = vst.msk [vmem:[#allocation2 + $0x27] sm:$0xff] %vm323, %v418
    %v425 = vld [vmem:[#allocation2] sm:$0xff]
    %v426 = vld [vmem:[#allocation2 + $0x8] sm:$0xff]
    %427 = vst.msk [vmem:[#allocation3] sm:$0xff] %vm323, %v425
    %428 = vst.msk [vmem:[#allocation3 + $0x28] sm:$0xff] %vm323, %v426
    %v429 = vld [vmem:[#allocation2 + $0x1] sm:$0xff]
    %v430 = vld [vmem:[#allocation2 + $0x9] sm:$0xff]
    %433 = vrot.lane.b32.xlu0 %v429, 48
    %v434 = vpop.permute.xlu0 %433
    %435 = vrot.lane.b32.xlu0 %v430, 48
    %v436 = vpop.permute.xlu0 %435
    %vm439 = vcmask 785792
    %440 = vst.msk [vmem:[#allocation3] sm:$0xff] %vm439, %v434
    %441 = vst.msk [vmem:[#allocation3 + $0x28] sm:$0xff] %vm439, %v436
    %v442 = vld [vmem:[#allocation2 + $0x2] sm:$0xff]
    %v443 = vld [vmem:[#allocation2 + $0xa] sm:$0xff]
    %446 = vrot.lane.b32.xlu0 %v442, 96
    %v447 = vpop.permute.xlu0 %446
    %448 = vrot.lane.b32.xlu0 %v443, 96
    %v449 = vpop.permute.xlu0 %448
    %vm452 = vcmask 1048320
    %453 = vst.msk [vmem:[#allocation3] sm:$0xff] %vm452, %v447
    %454 = vst.msk [vmem:[#allocation3 + $0x8] sm:$0xff] %vm40, %v447
    %455 = vst.msk [vmem:[#allocation3 + $0x28] sm:$0xff] %vm452, %v449
    %456 = vst.msk [vmem:[#allocation3 + $0x30] sm:$0xff] %vm40, %v449
    %v457 = vld [vmem:[#allocation2 + $0x3] sm:$0xff]
    %v458 = vld [vmem:[#allocation2 + $0xb] sm:$0xff]
    %461 = vrot.lane.b32.xlu0 %v457, 16
    %v462 = vpop.permute.xlu0 %461
    %463 = vrot.lane.b32.xlu0 %v458, 16
    %v464 = vpop.permute.xlu0 %463
    %vm467 = vcmask 523392
    %468 = vst.msk [vmem:[#allocation3 + $0x8] sm:$0xff] %vm467, %v462
    %469 = vst.msk [vmem:[#allocation3 + $0x30] sm:$0xff] %vm467, %v464
    %v470 = vld [vmem:[#allocation2 + $0x4] sm:$0xff]
    %v471 = vld [vmem:[#allocation2 + $0xc] sm:$0xff]
    %474 = vrot.lane.b32.xlu0 %v470, 64
    %v475 = vpop.permute.xlu0 %474
    %476 = vrot.lane.b32.xlu0 %v471, 64
    %v477 = vpop.permute.xlu0 %476
    %vm480 = vcmask 916992
    %481 = vst.msk [vmem:[#allocation3 + $0x8] sm:$0xff] %vm480, %v475
    %482 = vst.msk [vmem:[#allocation3 + $0x30] sm:$0xff] %vm480, %v477
    %v483 = vld [vmem:[#allocation2 + $0x5] sm:$0xff]
    %v484 = vld [vmem:[#allocation2 + $0xd] sm:$0xff]
    %487 = vrot.lane.b32.xlu0 %v483, 112
    %v488 = vpop.permute.xlu0 %487
    %489 = vrot.lane.b32.xlu0 %v484, 112
    %v490 = vpop.permute.xlu0 %489
    %493 = vst.msk [vmem:[#allocation3 + $0x8] sm:$0xff] %vm139, %v488
    %vm494 = vcmask 261120
    %495 = vst.msk [vmem:[#allocation3 + $0x10] sm:$0xff] %vm494, %v488
    %496 = vst.msk [vmem:[#allocation3 + $0x30] sm:$0xff] %vm139, %v490
    %497 = vst.msk [vmem:[#allocation3 + $0x38] sm:$0xff] %vm494, %v490
    %v498 = vld [vmem:[#allocation2 + $0x6] sm:$0xff]
    %v499 = vld [vmem:[#allocation2 + $0xe] sm:$0xff]
    %502 = vrot.lane.b32.xlu0 %v498, 32
    %v503 = vpop.permute.xlu0 %502
    %504 = vrot.lane.b32.xlu0 %v499, 32
    %v505 = vpop.permute.xlu0 %504
    %vm508 = vcmask 654592
    %509 = vst.msk [vmem:[#allocation3 + $0x10] sm:$0xff] %vm508, %v503
    %510 = vst.msk [vmem:[#allocation3 + $0x38] sm:$0xff] %vm508, %v505
    %v511 = vld [vmem:[#allocation2 + $0x7] sm:$0xff]
    %v512 = vld [vmem:[#allocation2 + $0xf] sm:$0xff]
    %515 = vrot.lane.b32.xlu0 %v511, 80
    %v516 = vpop.permute.xlu0 %515
    %517 = vrot.lane.b32.xlu0 %v512, 80
    %v518 = vpop.permute.xlu0 %517
    %vm521 = vcmask 1048192
    %522 = vst.msk [vmem:[#allocation3 + $0x10] sm:$0xff] %vm521, %v516
    %523 = vst.msk [vmem:[#allocation3 + $0x38] sm:$0xff] %vm521, %v518
    %v524 = vld [vmem:[#allocation2 + $0x8] sm:$0xff]
    %v525 = vld [vmem:[#allocation2 + $0x10] sm:$0xff]
    %526 = vst.msk [vmem:[#allocation3 + $0x18] sm:$0xff] %vm323, %v524
    %527 = vst.msk [vmem:[#allocation3 + $0x40] sm:$0xff] %vm323, %v525
    %v528 = vld [vmem:[#allocation2 + $0x9] sm:$0xff]
    %v529 = vld [vmem:[#allocation2 + $0x11] sm:$0xff]
    %532 = vrot.lane.b32.xlu0 %v528, 48
    %v533 = vpop.permute.xlu0 %532
    %534 = vrot.lane.b32.xlu0 %v529, 48
    %v535 = vpop.permute.xlu0 %534
    %538 = vst.msk [vmem:[#allocation3 + $0x18] sm:$0xff] %vm439, %v533
    %539 = vst.msk [vmem:[#allocation3 + $0x40] sm:$0xff] %vm439, %v535
    %v540 = vld [vmem:[#allocation2 + $0xa] sm:$0xff]
    %v541 = vld [vmem:[#allocation2 + $0x12] sm:$0xff]
    %544 = vrot.lane.b32.xlu0 %v540, 96
    %v545 = vpop.permute.xlu0 %544
    %546 = vrot.lane.b32.xlu0 %v541, 96
    %v547 = vpop.permute.xlu0 %546
    %550 = vst.msk [vmem:[#allocation3 + $0x18] sm:$0xff] %vm452, %v545
    %551 = vst.msk [vmem:[#allocation3 + $0x20] sm:$0xff] %vm40, %v545
    %552 = vst.msk [vmem:[#allocation3 + $0x40] sm:$0xff] %vm452, %v547
    %553 = vst.msk [vmem:[#allocation3 + $0x48] sm:$0xff] %vm40, %v547
    %v554 = vld [vmem:[#allocation2 + $0x1a] sm:$0xff]
    %v555 = vld [vmem:[#allocation2 + $0x22] sm:$0xff]
    %556 = vst.msk [vmem:[#allocation3 + $0x50] sm:$0xff] %vm323, %v554
    %557 = vst.msk [vmem:[#allocation3 + $0x78] sm:$0xff] %vm323, %v555
    %v558 = vld [vmem:[#allocation2 + $0x1b] sm:$0xff]
    %v559 = vld [vmem:[#allocation2 + $0x23] sm:$0xff]
    %562 = vrot.lane.b32.xlu0 %v558, 48
    %v563 = vpop.permute.xlu0 %562
    %564 = vrot.lane.b32.xlu0 %v559, 48
    %v565 = vpop.permute.xlu0 %564
    %568 = vst.msk [vmem:[#allocation3 + $0x50] sm:$0xff] %vm439, %v563
    %569 = vst.msk [vmem:[#allocation3 + $0x78] sm:$0xff] %vm439, %v565
    %v570 = vld [vmem:[#allocation2 + $0x1c] sm:$0xff]
    %v571 = vld [vmem:[#allocation2 + $0x24] sm:$0xff]
    %574 = vrot.lane.b32.xlu0 %v570, 96
    %v575 = vpop.permute.xlu0 %574
    %576 = vrot.lane.b32.xlu0 %v571, 96
    %v577 = vpop.permute.xlu0 %576
    %580 = vst.msk [vmem:[#allocation3 + $0x50] sm:$0xff] %vm452, %v575
    %581 = vst.msk [vmem:[#allocation3 + $0x58] sm:$0xff] %vm40, %v575
    %582 = vst.msk [vmem:[#allocation3 + $0x78] sm:$0xff] %vm452, %v577
    %583 = vst.msk [vmem:[#allocation3 + $0x80] sm:$0xff] %vm40, %v577
    %v584 = vld [vmem:[#allocation2 + $0x1d] sm:$0xff]
    %v585 = vld [vmem:[#allocation2 + $0x25] sm:$0xff]
    %588 = vrot.lane.b32.xlu0 %v584, 16
    %v589 = vpop.permute.xlu0 %588
    %590 = vrot.lane.b32.xlu0 %v585, 16
    %v591 = vpop.permute.xlu0 %590
    %594 = vst.msk [vmem:[#allocation3 + $0x58] sm:$0xff] %vm467, %v589
    %595 = vst.msk [vmem:[#allocation3 + $0x80] sm:$0xff] %vm467, %v591
    %v596 = vld [vmem:[#allocation2 + $0x1e] sm:$0xff]
    %v597 = vld [vmem:[#allocation2 + $0x26] sm:$0xff]
    %600 = vrot.lane.b32.xlu0 %v596, 64
    %v601 = vpop.permute.xlu0 %600
    %602 = vrot.lane.b32.xlu0 %v597, 64
    %v603 = vpop.permute.xlu0 %602
    %606 = vst.msk [vmem:[#allocation3 + $0x58] sm:$0xff] %vm480, %v601
    %607 = vst.msk [vmem:[#allocation3 + $0x80] sm:$0xff] %vm480, %v603
    %v608 = vld [vmem:[#allocation2 + $0x1f] sm:$0xff]
    %v609 = vld [vmem:[#allocation2 + $0x27] sm:$0xff]
    %612 = vrot.lane.b32.xlu0 %v608, 112
    %v613 = vpop.permute.xlu0 %612
    %614 = vrot.lane.b32.xlu0 %v609, 112
    %v615 = vpop.permute.xlu0 %614
    %618 = vst.msk [vmem:[#allocation3 + $0x58] sm:$0xff] %vm139, %v613
    %619 = vst.msk [vmem:[#allocation3 + $0x60] sm:$0xff] %vm494, %v613
    %620 = vst.msk [vmem:[#allocation3 + $0x80] sm:$0xff] %vm139, %v615
    %621 = vst.msk [vmem:[#allocation3 + $0x88] sm:$0xff] %vm494, %v615
    %v622 = vld [vmem:[#allocation2 + $0x20] sm:$0xff]
    %v623 = vld [vmem:[#allocation2 + $0x28] sm:$0xff]
    %626 = vrot.lane.b32.xlu0 %v622, 32
    %v627 = vpop.permute.xlu0 %626
    %628 = vrot.lane.b32.xlu0 %v623, 32
    %v629 = vpop.permute.xlu0 %628
    %632 = vst.msk [vmem:[#allocation3 + $0x60] sm:$0xff] %vm508, %v627
    %633 = vst.msk [vmem:[#allocation3 + $0x88] sm:$0xff] %vm508, %v629
    %v634 = vld [vmem:[#allocation2 + $0x21] sm:$0xff]
    %v635 = vld [vmem:[#allocation2 + $0x29] sm:$0xff]
    %638 = vrot.lane.b32.xlu0 %v634, 80
    %v639 = vpop.permute.xlu0 %638
    %640 = vrot.lane.b32.xlu0 %v635, 80
    %v641 = vpop.permute.xlu0 %640
    %644 = vst.msk [vmem:[#allocation3 + $0x60] sm:$0xff] %vm521, %v639
    %645 = vst.msk [vmem:[#allocation3 + $0x88] sm:$0xff] %vm521, %v641
    %v646 = vld [vmem:[#allocation2 + $0x22] sm:$0xff]
    %v647 = vld [vmem:[#allocation2 + $0x2a] sm:$0xff]
    %648 = vst.msk [vmem:[#allocation3 + $0x68] sm:$0xff] %vm323, %v646
    %649 = vst.msk [vmem:[#allocation3 + $0x90] sm:$0xff] %vm323, %v647
    %v650 = vld [vmem:[#allocation2 + $0x23] sm:$0xff]
    %v651 = vld [vmem:[#allocation2 + $0x2b] sm:$0xff]
    %654 = vrot.lane.b32.xlu0 %v650, 48
    %v655 = vpop.permute.xlu0 %654
    %656 = vrot.lane.b32.xlu0 %v651, 48
    %v657 = vpop.permute.xlu0 %656
    %660 = vst.msk [vmem:[#allocation3 + $0x68] sm:$0xff] %vm439, %v655
    %661 = vst.msk [vmem:[#allocation3 + $0x90] sm:$0xff] %vm439, %v657
    %v662 = vld [vmem:[#allocation2 + $0x24] sm:$0xff]
    %v663 = vld [vmem:[#allocation2 + $0x2c] sm:$0xff]
    %666 = vrot.lane.b32.xlu0 %v662, 96
    %v667 = vpop.permute.xlu0 %666
    %668 = vrot.lane.b32.xlu0 %v663, 96
    %v669 = vpop.permute.xlu0 %668
    %672 = vst.msk [vmem:[#allocation3 + $0x68] sm:$0xff] %vm452, %v667
    %673 = vst.msk [vmem:[#allocation3 + $0x70] sm:$0xff] %vm40, %v667
    %674 = vst.msk [vmem:[#allocation3 + $0x90] sm:$0xff] %vm452, %v669
    %675 = vst.msk [vmem:[#allocation3 + $0x98] sm:$0xff] %vm40, %v669
    %v676 = vld [vmem:[#allocation3] sm:$0xff]
    %v677 = vld [vmem:[#allocation3 + $0x8] sm:$0xff]
    %v678 = vld [vmem:[#allocation3 + $0x10] sm:$0xff]
    %v679 = vld [vmem:[#allocation3 + $0x18] sm:$0xff]
    %v680 = vld [vmem:[#allocation3 + $0x20] sm:$0xff]
    %v681 = vld [vmem:[#allocation3 + $0x28] sm:$0xff]
    %v682 = vld [vmem:[#allocation3 + $0x30] sm:$0xff]
    %v683 = vld [vmem:[#allocation3 + $0x38] sm:$0xff]
    %v684 = vld [vmem:[#allocation3 + $0x40] sm:$0xff]
    %v685 = vld [vmem:[#allocation3 + $0x48] sm:$0xff]
    %v686 = vld [vmem:[#allocation3 + $0x50] sm:$0xff]
    %v687 = vld [vmem:[#allocation3 + $0x58] sm:$0xff]
    %v688 = vld [vmem:[#allocation3 + $0x60] sm:$0xff]
    %v689 = vld [vmem:[#allocation3 + $0x68] sm:$0xff]
    %v690 = vld [vmem:[#allocation3 + $0x70] sm:$0xff]
    %v691 = vld [vmem:[#allocation3 + $0x78] sm:$0xff]
    %v692 = vld [vmem:[#allocation3 + $0x80] sm:$0xff]
    %v693 = vld [vmem:[#allocation3 + $0x88] sm:$0xff]
    %v694 = vld [vmem:[#allocation3 + $0x90] sm:$0xff]
    %v695 = vld [vmem:[#allocation3 + $0x98] sm:$0xff]
    %v696 = vld [vmem:[%s3] sm:$0xff]
    %v697 = vld [vmem:[%s3 + $0x8] sm:$0xff]
    %v698 = vld [vmem:[%s3 + $0x10] sm:$0xff]
    %v699 = vld [vmem:[%s3 + $0x18] sm:$0xff]
    %v700 = vld [vmem:[%s3 + $0x20] sm:$0xff]
    %v701 = vld [vmem:[%s3 + $0x28] sm:$0xff]
    %v702 = vld [vmem:[%s3 + $0x30] sm:$0xff]
    %v703 = vld [vmem:[%s3 + $0x38] sm:$0xff]
    %v704 = vld [vmem:[%s3 + $0x40] sm:$0xff]
    %v705 = vld [vmem:[%s3 + $0x48] sm:$0xff]
    %v706 = vld [vmem:[%s3 + $0x50] sm:$0xff]
    %v707 = vld [vmem:[%s3 + $0x58] sm:$0xff]
    %v708 = vld [vmem:[%s3 + $0x60] sm:$0xff]
    %v709 = vld [vmem:[%s3 + $0x68] sm:$0xff]
    %v710 = vld [vmem:[%s3 + $0x70] sm:$0xff]
    %v711 = vld [vmem:[%s3 + $0x78] sm:$0xff]
    %v712 = vld [vmem:[%s3 + $0x80] sm:$0xff]
    %v713 = vld [vmem:[%s3 + $0x88] sm:$0xff]
    %v714 = vld [vmem:[%s3 + $0x90] sm:$0xff]
    %v715 = vld [vmem:[%s3 + $0x98] sm:$0xff]
    %v716 = vld [vmem:[%s3 + $0xa0] sm:$0xff]
    %v717 = vld [vmem:[%s3 + $0xa8] sm:$0xff]
    %v718 = vld [vmem:[%s3 + $0xb0] sm:$0xff]
    %v719 = vld [vmem:[%s3 + $0xb8] sm:$0xff]
    %v720 = vld [vmem:[%s3 + $0xc0] sm:$0xff]
    %v721 = vld [vmem:[%s3 + $0xc8] sm:$0xff]
    %v722 = vld [vmem:[%s3 + $0xd0] sm:$0xff]
    %v723 = vld [vmem:[%s3 + $0xd8] sm:$0xff]
    %v724 = vld [vmem:[%s3 + $0xe0] sm:$0xff]
    %v725 = vld [vmem:[%s3 + $0xe8] sm:$0xff]
    %v726 = vld [vmem:[%s3 + $0xf0] sm:$0xff]
    %v727 = vld [vmem:[%s3 + $0xf8] sm:$0xff]
    %v728 = vld [vmem:[%s3 + $0x100] sm:$0xff]
    %v729 = vld [vmem:[%s3 + $0x108] sm:$0xff]
    %v730 = vld [vmem:[%s3 + $0x110] sm:$0xff]
    %v731 = vld [vmem:[%s3 + $0x118] sm:$0xff]
    %v732 = vld [vmem:[%s3 + $0x120] sm:$0xff]
    %v733 = vld [vmem:[%s3 + $0x128] sm:$0xff]
    %v734 = vld [vmem:[%s3 + $0x130] sm:$0xff]
    %v735 = vld [vmem:[%s3 + $0x138] sm:$0xff]
    %v736 = vld [vmem:[%s3 + $0x140] sm:$0xff]
    %v737 = vld [vmem:[%s3 + $0x148] sm:$0xff]
    %v738 = vld [vmem:[%s3 + $0x150] sm:$0xff]
    %v739 = vld [vmem:[%s3 + $0x158] sm:$0xff]
    %v740 = vld [vmem:[%s3 + $0x160] sm:$0xff]
    %v741 = vld [vmem:[%s3 + $0x168] sm:$0xff]
    %v742 = vld [vmem:[%s3 + $0x170] sm:$0xff]
    %v743 = vld [vmem:[%s3 + $0x178] sm:$0xff]
    %v744 = vld [vmem:[%s3 + $0x180] sm:$0xff]
    %v745 = vld [vmem:[%s3 + $0x188] sm:$0xff]
    %v746 = vld [vmem:[%s3 + $0x190] sm:$0xff]
    %v747 = vld [vmem:[%s3 + $0x198] sm:$0xff]
    %v748 = vld [vmem:[%s3 + $0x1a0] sm:$0xff]
    %v749 = vld [vmem:[%s3 + $0x1a8] sm:$0xff]
    %v750 = vld [vmem:[%s3 + $0x1b0] sm:$0xff]
    %v751 = vld [vmem:[%s3 + $0x1b8] sm:$0xff]
    %v752 = vld [vmem:[%s3 + $0x1c0] sm:$0xff]
    %v753 = vld [vmem:[%s3 + $0x1c8] sm:$0xff]
    %v754 = vld [vmem:[%s3 + $0x1d0] sm:$0xff]
    %v755 = vld [vmem:[%s3 + $0x1d8] sm:$0xff]
    %v756 = vld [vmem:[%s3 + $0x1e0] sm:$0xff]
    %v757 = vld [vmem:[%s3 + $0x1e8] sm:$0xff]
    %v758 = vld [vmem:[%s3 + $0x1f0] sm:$0xff]
    %v759 = vld [vmem:[%s3 + $0x1f8] sm:$0xff]
    %v760 = vld [vmem:[%s3 + $0x200] sm:$0xff]
    %v761 = vld [vmem:[%s3 + $0x208] sm:$0xff]
    %v762 = vld [vmem:[%s4] sm:$0x1]
    %v764 = vlaneseq
    %v765 = vshrl.u32 %v764, 7
    %v766 = vsub.s32 0, %v765
    %v767 = vrot.slane %v762, %v766
    %v770 = vsel %vm40, %v680, 0
    %v773 = vsel %vm40, %v685, 0
    %v776 = vsel %vm40, %v690, 0
    %v779 = vsel %vm40, %v695, 0
    %781 = vmatprep.subr.mxu0 0.0
    %782 = vmatpush1.msra.mxu0 %v696
    %783 = vmatprep.subr.mxu0 0.0
    %784 = vmatpush1.msra.mxu0 %v697
    %785 = vmatprep.subr.mxu0 0.0
    %786 = vmatpush1.msra.mxu0 %v698
    %787 = vmatprep.subr.mxu0 0.0
    %788 = vmatpush1.msra.mxu0 %v699
    %789 = vmatprep.subr.mxu0 0.0
    %790 = vmatpush1.msra.mxu0 %v700
    %791 = vmatprep.subr.mxu0 0.0
    %792 = vmatpush1.msra.mxu0 %v701
    %793 = vmatprep.subr.mxu0 0.0
    %794 = vmatpush1.msra.mxu0 %v702
    %795 = vmatprep.subr.mxu0 0.0
    %796 = vmatpush1.msra.mxu0 %v703
    %797 = vmatprep.subr.mxu0 0.0
    %798 = vmatpush1.msra.mxu0 %v704
    %799 = vmatprep.subr.mxu0 0.0
    %800 = vmatpush1.msra.mxu0 %v705
    %801 = vmatprep.subr.mxu0 0.0
    %802 = vmatpush1.msra.mxu0 %v706
    %803 = vmatprep.subr.mxu0 0.0
    %804 = vmatpush1.msra.mxu0 %v707
    %805 = vmatprep.subr.mxu0 0.0
    %806 = vmatpush1.msra.mxu0 %v708
    %807 = vmatprep.subr.mxu0 0.0
    %808 = vmatpush1.msra.mxu0 %v709
    %809 = vmatprep.subr.mxu0 0.0
    %810 = vmatpush1.msra.mxu0 %v710
    %811 = vmatprep.subr.mxu0 0.0
    %812 = vmatpush1.msra.mxu0 %v711
    %813 = vmatprep.subr.mxu0 0.0
    %814 = vmatpush1.msra.mxu0 %v712
    %815 = vmatprep.subr.mxu0 0.0
    %816 = vmatpush1.msra.mxu0 %v713
    %817 = vmatprep.subr.mxu0 0.0
    %818 = vmatpush1.msra.mxu0 %v714
    %819 = vmatprep.subr.mxu0 0.0
    %820 = vmatpush1.msra.mxu0 %v715
    %821 = vmatprep.subr.mxu0 0.0
    %822 = vmatpush1.msra.mxu0 %v716
    %823 = vmatprep.subr.mxu0 0.0
    %824 = vmatpush1.msra.mxu0 %v717
    %825 = vmatprep.subr.mxu0 0.0
    %826 = vmatpush1.msra.mxu0 %v718
    %827 = vmatprep.subr.mxu0 0.0
    %828 = vmatpush1.msra.mxu0 %v719
    %829 = vmatprep.subr.mxu0 0.0
    %830 = vmatpush1.msra.mxu0 %v720
    %831 = vmatprep.subr.mxu0 0.0
    %832 = vmatpush1.msra.mxu0 %v721
    %833 = vmatprep.subr.mxu0 0.0
    %834 = vmatpush1.msra.mxu0 %v722
    %835 = vmatprep.subr.mxu0 0.0
    %836 = vmatpush1.msra.mxu0 %v723
    %837 = vmatprep.subr.mxu0 0.0
    %838 = vmatpush1.msra.mxu0 %v724
    %839 = vmatprep.subr.mxu0 0.0
    %840 = vmatpush1.msra.mxu0 %v725
    %841 = vmatprep.subr.mxu0 0.0
    %842 = vmatpush1.msra.mxu0 %v726
    %843 = vmatprep.subr.mxu0 0.0
    %844 = vmatpush1.msra.mxu0 %v727
    %845 = vmatprep.mubr.f32.mxu0 %v677
    %846 = vmatmul.mubr.f32.gmra.mrb[0].mxu0 %v676
    %v847 = vpop.f32.mrb[0].mxu0
    %v848 = vadd.f32 %v767, %v847
    %v849 = vpop.f32.mrb[0].mxu0
    %850 = vmatprep.mubr.f32.mxu0 %v682
    %851 = vmatmul.mubr.f32.gmra.mrb[0].mxu0 %v681
    %v852 = vpop.f32.mrb[0].mxu0
    %v853 = vadd.f32 %v767, %v852
    %v854 = vpop.f32.mrb[0].mxu0
    %855 = vmatprep.mubr.f32.mxu0 %v687
    %856 = vmatmul.mubr.f32.gmra.mrb[0].mxu0 %v686
    %v857 = vpop.f32.mrb[0].mxu0
    %v858 = vadd.f32 %v767, %v857
    %v859 = vpop.f32.mrb[0].mxu0
    %860 = vmatprep.mubr.f32.mxu0 %v692
    %861 = vmatmul.mubr.f32.gmra.mrb[0].mxu0 %v691
    %v862 = vpop.f32.mrb[0].mxu0
    %v863 = vadd.f32 %v767, %v862
    %v864 = vpop.f32.mrb[0].mxu0
    %865 = vdwg.mxu0
    %866 = vmatprep.subr.mxu0 0.0
    %867 = vmatpush1.msra.mxu0 %v728
    %868 = vmatprep.subr.mxu0 0.0
    %869 = vmatpush1.msra.mxu0 %v729
    %870 = vmatprep.subr.mxu0 0.0
    %871 = vmatpush1.msra.mxu0 %v730
    %872 = vmatprep.subr.mxu0 0.0
    %873 = vmatpush1.msra.mxu0 %v731
    %874 = vmatprep.subr.mxu0 0.0
    %875 = vmatpush1.msra.mxu0 %v732
    %876 = vmatprep.subr.mxu0 0.0
    %877 = vmatpush1.msra.mxu0 %v733
    %878 = vmatprep.subr.mxu0 0.0
    %879 = vmatpush1.msra.mxu0 %v734
    %880 = vmatprep.subr.mxu0 0.0
    %881 = vmatpush1.msra.mxu0 %v735
    %882 = vmatprep.subr.mxu0 0.0
    %883 = vmatpush1.msra.mxu0 %v736
    %884 = vmatprep.subr.mxu0 0.0
    %885 = vmatpush1.msra.mxu0 %v737
    %886 = vmatprep.subr.mxu0 0.0
    %887 = vmatpush1.msra.mxu0 %v738
    %888 = vmatprep.subr.mxu0 0.0
    %889 = vmatpush1.msra.mxu0 %v739
    %890 = vmatprep.subr.mxu0 0.0
    %891 = vmatpush1.msra.mxu0 %v740
    %892 = vmatprep.subr.mxu0 0.0
    %893 = vmatpush1.msra.mxu0 %v741
    %894 = vmatprep.subr.mxu0 0.0
    %895 = vmatpush1.msra.mxu0 %v742
    %896 = vmatprep.subr.mxu0 0.0
    %897 = vmatpush1.msra.mxu0 %v743
    %898 = vmatprep.subr.mxu0 0.0
    %899 = vmatpush1.msra.mxu0 %v744
    %900 = vmatprep.subr.mxu0 0.0
    %901 = vmatpush1.msra.mxu0 %v745
    %902 = vmatprep.subr.mxu0 0.0
    %903 = vmatpush1.msra.mxu0 %v746
    %904 = vmatprep.subr.mxu0 0.0
    %905 = vmatpush1.msra.mxu0 %v747
    %906 = vmatprep.subr.mxu0 0.0
    %907 = vmatpush1.msra.mxu0 %v748
    %908 = vmatprep.subr.mxu0 0.0
    %909 = vmatpush1.msra.mxu0 %v749
    %910 = vmatprep.subr.mxu0 0.0
    %911 = vmatpush1.msra.mxu0 %v750
    %912 = vmatprep.subr.mxu0 0.0
    %913 = vmatpush1.msra.mxu0 %v751
    %914 = vmatprep.subr.mxu0 0.0
    %915 = vmatpush1.msra.mxu0 %v752
    %916 = vmatprep.subr.mxu0 0.0
    %917 = vmatpush1.msra.mxu0 %v753
    %918 = vmatprep.subr.mxu0 0.0
    %919 = vmatpush1.msra.mxu0 %v754
    %920 = vmatprep.subr.mxu0 0.0
    %921 = vmatpush1.msra.mxu0 %v755
    %922 = vmatprep.subr.mxu0 0.0
    %923 = vmatpush1.msra.mxu0 %v756
    %924 = vmatprep.subr.mxu0 0.0
    %925 = vmatpush1.msra.mxu0 %v757
    %926 = vmatprep.subr.mxu0 0.0
    %927 = vmatpush1.msra.mxu0 %v758
    %928 = vmatprep.subr.mxu0 0.0
    %929 = vmatpush1.msra.mxu0 %v759
    %930 = vmatprep.mubr.f32.mxu0 %v679
    %931 = vmatmul.mubr.f32.gmra.mrb[0].mxu0 %v678
    %v932 = vpop.f32.mrb[0].mxu0
    %v933 = vadd.f32 %v848, %v932
    %v934 = vpop.f32.mrb[0].mxu0
    %935 = vmatprep.mubr.f32.mxu0 %v684
    %936 = vmatmul.mubr.f32.gmra.mrb[0].mxu0 %v683
    %v937 = vpop.f32.mrb[0].mxu0
    %v938 = vadd.f32 %v853, %v937
    %v939 = vpop.f32.mrb[0].mxu0
    %940 = vmatprep.mubr.f32.mxu0 %v689
    %941 = vmatmul.mubr.f32.gmra.mrb[0].mxu0 %v688
    %v942 = vpop.f32.mrb[0].mxu0
    %v943 = vadd.f32 %v858, %v942
    %v944 = vpop.f32.mrb[0].mxu0
    %945 = vmatprep.mubr.f32.mxu0 %v694
    %946 = vmatmul.mubr.f32.gmra.mrb[0].mxu0 %v693
    %v947 = vpop.f32.mrb[0].mxu0
    %v948 = vadd.f32 %v863, %v947
    %v949 = vpop.f32.mrb[0].mxu0
    %950 = vdwg.mxu0
    %951 = vmatprep.subr.mxu0 0.0
    %952 = vmatpush1.msra.mxu0 %v760
    %953 = vmatprep.subr.mxu0 0.0
    %954 = vmatpush1.msra.mxu0 %v761
    %955 = vmatprep.subr.mxu0 0.0
    %956 = vmatpush1.msra.mxu0 0.0
    %957 = vmatprep.subr.mxu0 0.0
    %958 = vmatpush1.msra.mxu0 0.0
    %959 = vmatprep.subr.mxu0 0.0
    %960 = vmatpush1.msra.mxu0 0.0
    %961 = vmatprep.subr.mxu0 0.0
    %962 = vmatpush1.msra.mxu0 0.0
    %963 = vmatprep.subr.mxu0 0.0
    %964 = vmatpush1.msra.mxu0 0.0
    %965 = vmatprep.subr.mxu0 0.0
    %966 = vmatpush1.msra.mxu0 0.0
    %967 = vmatprep.subr.mxu0 0.0
    %968 = vmatpush1.msra.mxu0 0.0
    %969 = vmatprep.subr.mxu0 0.0
    %970 = vmatpush1.msra.mxu0 0.0
    %971 = vmatprep.subr.mxu0 0.0
    %972 = vmatpush1.msra.mxu0 0.0
    %973 = vmatprep.subr.mxu0 0.0
    %974 = vmatpush1.msra.mxu0 0.0
    %975 = vmatprep.subr.mxu0 0.0
    %976 = vmatpush1.msra.mxu0 0.0
    %977 = vmatprep.subr.mxu0 0.0
    %978 = vmatpush1.msra.mxu0 0.0
    %979 = vmatprep.subr.mxu0 0.0
    %980 = vmatpush1.msra.mxu0 0.0
    %981 = vmatprep.subr.mxu0 0.0
    %982 = vmatpush1.msra.mxu0 0.0
    %983 = vmatprep.subr.mxu0 0.0
    %984 = vmatpush1.msra.mxu0 0.0
    %985 = vmatprep.subr.mxu0 0.0
    %986 = vmatpush1.msra.mxu0 0.0
    %987 = vmatprep.subr.mxu0 0.0
    %988 = vmatpush1.msra.mxu0 0.0
    %989 = vmatprep.subr.mxu0 0.0
    %990 = vmatpush1.msra.mxu0 0.0
    %991 = vmatprep.subr.mxu0 0.0
    %992 = vmatpush1.msra.mxu0 0.0
    %993 = vmatprep.subr.mxu0 0.0
    %994 = vmatpush1.msra.mxu0 0.0
    %995 = vmatprep.subr.mxu0 0.0
    %996 = vmatpush1.msra.mxu0 0.0
    %997 = vmatprep.subr.mxu0 0.0
    %998 = vmatpush1.msra.mxu0 0.0
    %999 = vmatprep.subr.mxu0 0.0
    %1000 = vmatpush1.msra.mxu0 0.0
    %1001 = vmatprep.subr.mxu0 0.0
    %1002 = vmatpush1.msra.mxu0 0.0
    %1003 = vmatprep.subr.mxu0 0.0
    %1004 = vmatpush1.msra.mxu0 0.0
    %1005 = vmatprep.subr.mxu0 0.0
    %1006 = vmatpush1.msra.mxu0 0.0
    %1007 = vmatprep.subr.mxu0 0.0
    %1008 = vmatpush1.msra.mxu0 0.0
    %1009 = vmatprep.subr.mxu0 0.0
    %1010 = vmatpush1.msra.mxu0 0.0
    %1011 = vmatprep.subr.mxu0 0.0
    %1012 = vmatpush1.msra.mxu0 0.0
    %1013 = vmatprep.subr.mxu0 0.0
    %1014 = vmatpush1.msra.mxu0 0.0
    %1015 = vmatprep.mubr.f32.mxu0 0.0
    %1016 = vmatmul.mubr.f32.gmra.mrb[0].mxu0 %v770
    %v1017 = vpop.f32.mrb[0].mxu0
    %v1018 = vadd.f32 %v933, %v1017
    %v1019 = vpop.f32.mrb[0].mxu0
    %1020 = vmatprep.mubr.f32.mxu0 0.0
    %1021 = vmatmul.mubr.f32.gmra.mrb[0].mxu0 %v773
    %v1022 = vpop.f32.mrb[0].mxu0
    %v1023 = vadd.f32 %v938, %v1022
    %v1024 = vpop.f32.mrb[0].mxu0
    %1025 = vmatprep.mubr.f32.mxu0 0.0
    %1026 = vmatmul.mubr.f32.gmra.mrb[0].mxu0 %v776
    %v1027 = vpop.f32.mrb[0].mxu0
    %v1028 = vadd.f32 %v943, %v1027
    %v1029 = vpop.f32.mrb[0].mxu0
    %1030 = vmatprep.mubr.f32.mxu0 0.0
    %1031 = vmatmul.mubr.f32.gmra.mrb[0].mxu0 %v779
    %v1032 = vpop.f32.mrb[0].mxu0
    %v1033 = vadd.f32 %v948, %v1032
    %v1034 = vpop.f32.mrb[0].mxu0
    %1035 = vdwg.mxu0
    %1036 = vst.msk [vmem:[#allocation2 + $0x5] sm:$0xff] %vm323, %v1018
    %1037 = vst.msk [vmem:[#allocation2 + $0xd] sm:$0xff] %vm323, %v1023
    %1038 = vst.msk [vmem:[#allocation2 + $0x1f] sm:$0xff] %vm323, %v1028
    %1039 = vst.msk [vmem:[#allocation2 + $0x27] sm:$0xff] %vm323, %v1033
    %v1040 = vld [vmem:[#allocation2] sm:$0xff]
    %v1041 = vld [vmem:[#allocation2 + $0x8] sm:$0xff]
    %1042 = vst.msk [vmem:[#allocation3] sm:$0xff] %vm323, %v1040
    %1043 = vst.msk [vmem:[#allocation3 + $0x28] sm:$0xff] %vm323, %v1041
    %v1044 = vld [vmem:[#allocation2 + $0x1] sm:$0xff]
    %v1045 = vld [vmem:[#allocation2 + $0x9] sm:$0xff]
    %1048 = vrot.lane.b32.xlu0 %v1044, 48
    %v1049 = vpop.permute.xlu0 %1048
    %1050 = vrot.lane.b32.xlu0 %v1045, 48
    %v1051 = vpop.permute.xlu0 %1050
    %1054 = vst.msk [vmem:[#allocation3] sm:$0xff] %vm439, %v1049
    %1055 = vst.msk [vmem:[#allocation3 + $0x28] sm:$0xff] %vm439, %v1051
    %v1056 = vld [vmem:[#allocation2 + $0x2] sm:$0xff]
    %v1057 = vld [vmem:[#allocation2 + $0xa] sm:$0xff]
    %1060 = vrot.lane.b32.xlu0 %v1056, 96
    %v1061 = vpop.permute.xlu0 %1060
    %1062 = vrot.lane.b32.xlu0 %v1057, 96
    %v1063 = vpop.permute.xlu0 %1062
    %1066 = vst.msk [vmem:[#allocation3] sm:$0xff] %vm452, %v1061
    %1067 = vst.msk [vmem:[#allocation3 + $0x8] sm:$0xff] %vm40, %v1061
    %1068 = vst.msk [vmem:[#allocation3 + $0x28] sm:$0xff] %vm452, %v1063
    %1069 = vst.msk [vmem:[#allocation3 + $0x30] sm:$0xff] %vm40, %v1063
    %v1070 = vld [vmem:[#allocation2 + $0x3] sm:$0xff]
    %v1071 = vld [vmem:[#allocation2 + $0xb] sm:$0xff]
    %1074 = vrot.lane.b32.xlu0 %v1070, 16
    %v1075 = vpop.permute.xlu0 %1074
    %1076 = vrot.lane.b32.xlu0 %v1071, 16
    %v1077 = vpop.permute.xlu0 %1076
    %1080 = vst.msk [vmem:[#allocation3 + $0x8] sm:$0xff] %vm467, %v1075
    %1081 = vst.msk [vmem:[#allocation3 + $0x30] sm:$0xff] %vm467, %v1077
    %v1082 = vld [vmem:[#allocation2 + $0x4] sm:$0xff]
    %v1083 = vld [vmem:[#allocation2 + $0xc] sm:$0xff]
    %1086 = vrot.lane.b32.xlu0 %v1082, 64
    %v1087 = vpop.permute.xlu0 %1086
    %1088 = vrot.lane.b32.xlu0 %v1083, 64
    %v1089 = vpop.permute.xlu0 %1088
    %1092 = vst.msk [vmem:[#allocation3 + $0x8] sm:$0xff] %vm480, %v1087
    %1093 = vst.msk [vmem:[#allocation3 + $0x30] sm:$0xff] %vm480, %v1089
    %v1094 = vld [vmem:[#allocation2 + $0x5] sm:$0xff]
    %v1095 = vld [vmem:[#allocation2 + $0xd] sm:$0xff]
    %1098 = vrot.lane.b32.xlu0 %v1094, 112
    %v1099 = vpop.permute.xlu0 %1098
    %1100 = vrot.lane.b32.xlu0 %v1095, 112
    %v1101 = vpop.permute.xlu0 %1100
    %1104 = vst.msk [vmem:[#allocation3 + $0x8] sm:$0xff] %vm139, %v1099
    %1105 = vst.msk [vmem:[#allocation3 + $0x10] sm:$0xff] %vm494, %v1099
    %1106 = vst.msk [vmem:[#allocation3 + $0x30] sm:$0xff] %vm139, %v1101
    %1107 = vst.msk [vmem:[#allocation3 + $0x38] sm:$0xff] %vm494, %v1101
    %v1108 = vld [vmem:[#allocation2 + $0x6] sm:$0xff]
    %v1109 = vld [vmem:[#allocation2 + $0xe] sm:$0xff]
    %1112 = vrot.lane.b32.xlu0 %v1108, 32
    %v1113 = vpop.permute.xlu0 %1112
    %1114 = vrot.lane.b32.xlu0 %v1109, 32
    %v1115 = vpop.permute.xlu0 %1114
    %1118 = vst.msk [vmem:[#allocation3 + $0x10] sm:$0xff] %vm508, %v1113
    %1119 = vst.msk [vmem:[#allocation3 + $0x38] sm:$0xff] %vm508, %v1115
    %v1120 = vld [vmem:[#allocation2 + $0x7] sm:$0xff]
    %v1121 = vld [vmem:[#allocation2 + $0xf] sm:$0xff]
    %1124 = vrot.lane.b32.xlu0 %v1120, 80
    %v1125 = vpop.permute.xlu0 %1124
    %1126 = vrot.lane.b32.xlu0 %v1121, 80
    %v1127 = vpop.permute.xlu0 %1126
    %1130 = vst.msk [vmem:[#allocation3 + $0x10] sm:$0xff] %vm521, %v1125
    %1131 = vst.msk [vmem:[#allocation3 + $0x38] sm:$0xff] %vm521, %v1127
    %v1132 = vld [vmem:[#allocation2 + $0x8] sm:$0xff]
    %v1133 = vld [vmem:[#allocation2 + $0x10] sm:$0xff]
    %1134 = vst.msk [vmem:[#allocation3 + $0x18] sm:$0xff] %vm323, %v1132
    %1135 = vst.msk [vmem:[#allocation3 + $0x40] sm:$0xff] %vm323, %v1133
    %v1136 = vld [vmem:[#allocation2 + $0x9] sm:$0xff]
    %v1137 = vld [vmem:[#allocation2 + $0x11] sm:$0xff]
    %1140 = vrot.lane.b32.xlu0 %v1136, 48
    %v1141 = vpop.permute.xlu0 %1140
    %1142 = vrot.lane.b32.xlu0 %v1137, 48
    %v1143 = vpop.permute.xlu0 %1142
    %1146 = vst.msk [vmem:[#allocation3 + $0x18] sm:$0xff] %vm439, %v1141
    %1147 = vst.msk [vmem:[#allocation3 + $0x40] sm:$0xff] %vm439, %v1143
    %v1148 = vld [vmem:[#allocation2 + $0xa] sm:$0xff]
    %v1149 = vld [vmem:[#allocation2 + $0x12] sm:$0xff]
    %1152 = vrot.lane.b32.xlu0 %v1148, 96
    %v1153 = vpop.permute.xlu0 %1152
    %1154 = vrot.lane.b32.xlu0 %v1149, 96
    %v1155 = vpop.permute.xlu0 %1154
    %1158 = vst.msk [vmem:[#allocation3 + $0x18] sm:$0xff] %vm452, %v1153
    %1159 = vst.msk [vmem:[#allocation3 + $0x20] sm:$0xff] %vm40, %v1153
    %1160 = vst.msk [vmem:[#allocation3 + $0x40] sm:$0xff] %vm452, %v1155
    %1161 = vst.msk [vmem:[#allocation3 + $0x48] sm:$0xff] %vm40, %v1155
    %v1162 = vld [vmem:[#allocation2 + $0x1a] sm:$0xff]
    %v1163 = vld [vmem:[#allocation2 + $0x22] sm:$0xff]
    %1164 = vst.msk [vmem:[#allocation3 + $0x50] sm:$0xff] %vm323, %v1162
    %1165 = vst.msk [vmem:[#allocation3 + $0x78] sm:$0xff] %vm323, %v1163
    %v1166 = vld [vmem:[#allocation2 + $0x1b] sm:$0xff]
    %v1167 = vld [vmem:[#allocation2 + $0x23] sm:$0xff]
    %1170 = vrot.lane.b32.xlu0 %v1166, 48
    %v1171 = vpop.permute.xlu0 %1170
    %1172 = vrot.lane.b32.xlu0 %v1167, 48
    %v1173 = vpop.permute.xlu0 %1172
    %1176 = vst.msk [vmem:[#allocation3 + $0x50] sm:$0xff] %vm439, %v1171
    %1177 = vst.msk [vmem:[#allocation3 + $0x78] sm:$0xff] %vm439, %v1173
    %v1178 = vld [vmem:[#allocation2 + $0x1c] sm:$0xff]
    %v1179 = vld [vmem:[#allocation2 + $0x24] sm:$0xff]
    %1182 = vrot.lane.b32.xlu0 %v1178, 96
    %v1183 = vpop.permute.xlu0 %1182
    %1184 = vrot.lane.b32.xlu0 %v1179, 96
    %v1185 = vpop.permute.xlu0 %1184
    %1188 = vst.msk [vmem:[#allocation3 + $0x50] sm:$0xff] %vm452, %v1183
    %1189 = vst.msk [vmem:[#allocation3 + $0x58] sm:$0xff] %vm40, %v1183
    %1190 = vst.msk [vmem:[#allocation3 + $0x78] sm:$0xff] %vm452, %v1185
    %1191 = vst.msk [vmem:[#allocation3 + $0x80] sm:$0xff] %vm40, %v1185
    %v1192 = vld [vmem:[#allocation2 + $0x1d] sm:$0xff]
    %v1193 = vld [vmem:[#allocation2 + $0x25] sm:$0xff]
    %1196 = vrot.lane.b32.xlu0 %v1192, 16
    %v1197 = vpop.permute.xlu0 %1196
    %1198 = vrot.lane.b32.xlu0 %v1193, 16
    %v1199 = vpop.permute.xlu0 %1198
    %1202 = vst.msk [vmem:[#allocation3 + $0x58] sm:$0xff] %vm467, %v1197
    %1203 = vst.msk [vmem:[#allocation3 + $0x80] sm:$0xff] %vm467, %v1199
    %v1204 = vld [vmem:[#allocation2 + $0x1e] sm:$0xff]
    %v1205 = vld [vmem:[#allocation2 + $0x26] sm:$0xff]
    %1208 = vrot.lane.b32.xlu0 %v1204, 64
    %v1209 = vpop.permute.xlu0 %1208
    %1210 = vrot.lane.b32.xlu0 %v1205, 64
    %v1211 = vpop.permute.xlu0 %1210
    %1214 = vst.msk [vmem:[#allocation3 + $0x58] sm:$0xff] %vm480, %v1209
    %1215 = vst.msk [vmem:[#allocation3 + $0x80] sm:$0xff] %vm480, %v1211
    %v1216 = vld [vmem:[#allocation2 + $0x1f] sm:$0xff]
    %v1217 = vld [vmem:[#allocation2 + $0x27] sm:$0xff]
    %1220 = vrot.lane.b32.xlu0 %v1216, 112
    %v1221 = vpop.permute.xlu0 %1220
    %1222 = vrot.lane.b32.xlu0 %v1217, 112
    %v1223 = vpop.permute.xlu0 %1222
    %1226 = vst.msk [vmem:[#allocation3 + $0x58] sm:$0xff] %vm139, %v1221
    %1227 = vst.msk [vmem:[#allocation3 + $0x60] sm:$0xff] %vm494, %v1221
    %1228 = vst.msk [vmem:[#allocation3 + $0x80] sm:$0xff] %vm139, %v1223
    %1229 = vst.msk [vmem:[#allocation3 + $0x88] sm:$0xff] %vm494, %v1223
    %v1230 = vld [vmem:[#allocation2 + $0x20] sm:$0xff]
    %v1231 = vld [vmem:[#allocation2 + $0x28] sm:$0xff]
    %1234 = vrot.lane.b32.xlu0 %v1230, 32
    %v1235 = vpop.permute.xlu0 %1234
    %1236 = vrot.lane.b32.xlu0 %v1231, 32
    %v1237 = vpop.permute.xlu0 %1236
    %1240 = vst.msk [vmem:[#allocation3 + $0x60] sm:$0xff] %vm508, %v1235
    %1241 = vst.msk [vmem:[#allocation3 + $0x88] sm:$0xff] %vm508, %v1237
    %v1242 = vld [vmem:[#allocation2 + $0x21] sm:$0xff]
    %v1243 = vld [vmem:[#allocation2 + $0x29] sm:$0xff]
    %1246 = vrot.lane.b32.xlu0 %v1242, 80
    %v1247 = vpop.permute.xlu0 %1246
    %1248 = vrot.lane.b32.xlu0 %v1243, 80
    %v1249 = vpop.permute.xlu0 %1248
    %1252 = vst.msk [vmem:[#allocation3 + $0x60] sm:$0xff] %vm521, %v1247
    %1253 = vst.msk [vmem:[#allocation3 + $0x88] sm:$0xff] %vm521, %v1249
    %v1254 = vld [vmem:[#allocation2 + $0x22] sm:$0xff]
    %v1255 = vld [vmem:[#allocation2 + $0x2a] sm:$0xff]
    %1256 = vst.msk [vmem:[#allocation3 + $0x68] sm:$0xff] %vm323, %v1254
    %1257 = vst.msk [vmem:[#allocation3 + $0x90] sm:$0xff] %vm323, %v1255
    %v1258 = vld [vmem:[#allocation2 + $0x23] sm:$0xff]
    %v1259 = vld [vmem:[#allocation2 + $0x2b] sm:$0xff]
    %1262 = vrot.lane.b32.xlu0 %v1258, 48
    %v1263 = vpop.permute.xlu0 %1262
    %1264 = vrot.lane.b32.xlu0 %v1259, 48
    %v1265 = vpop.permute.xlu0 %1264
    %1268 = vst.msk [vmem:[#allocation3 + $0x68] sm:$0xff] %vm439, %v1263
    %1269 = vst.msk [vmem:[#allocation3 + $0x90] sm:$0xff] %vm439, %v1265
    %v1270 = vld [vmem:[#allocation2 + $0x24] sm:$0xff]
    %v1271 = vld [vmem:[#allocation2 + $0x2c] sm:$0xff]
    %1274 = vrot.lane.b32.xlu0 %v1270, 96
    %v1275 = vpop.permute.xlu0 %1274
    %1276 = vrot.lane.b32.xlu0 %v1271, 96
    %v1277 = vpop.permute.xlu0 %1276
    %1280 = vst.msk [vmem:[#allocation3 + $0x68] sm:$0xff] %vm452, %v1275
    %1281 = vst.msk [vmem:[#allocation3 + $0x70] sm:$0xff] %vm40, %v1275
    %1282 = vst.msk [vmem:[#allocation3 + $0x90] sm:$0xff] %vm452, %v1277
    %1283 = vst.msk [vmem:[#allocation3 + $0x98] sm:$0xff] %vm40, %v1277
    %v1284 = vld [vmem:[#allocation3] sm:$0xff]
    %v1285 = vld [vmem:[#allocation3 + $0x8] sm:$0xff]
    %v1286 = vld [vmem:[#allocation3 + $0x10] sm:$0xff]
    %v1287 = vld [vmem:[#allocation3 + $0x18] sm:$0xff]
    %v1288 = vld [vmem:[#allocation3 + $0x20] sm:$0xff]
    %v1289 = vld [vmem:[#allocation3 + $0x28] sm:$0xff]
    %v1290 = vld [vmem:[#allocation3 + $0x30] sm:$0xff]
    %v1291 = vld [vmem:[#allocation3 + $0x38] sm:$0xff]
    %v1292 = vld [vmem:[#allocation3 + $0x40] sm:$0xff]
    %v1293 = vld [vmem:[#allocation3 + $0x48] sm:$0xff]
    %v1294 = vld [vmem:[#allocation3 + $0x50] sm:$0xff]
    %v1295 = vld [vmem:[#allocation3 + $0x58] sm:$0xff]
    %v1296 = vld [vmem:[#allocation3 + $0x60] sm:$0xff]
    %v1297 = vld [vmem:[#allocation3 + $0x68] sm:$0xff]
    %v1298 = vld [vmem:[#allocation3 + $0x70] sm:$0xff]
    %v1299 = vld [vmem:[#allocation3 + $0x78] sm:$0xff]
    %v1300 = vld [vmem:[#allocation3 + $0x80] sm:$0xff]
    %v1301 = vld [vmem:[#allocation3 + $0x88] sm:$0xff]
    %v1302 = vld [vmem:[#allocation3 + $0x90] sm:$0xff]
    %v1303 = vld [vmem:[#allocation3 + $0x98] sm:$0xff]
    %v1304 = vld [vmem:[%s5] sm:$0xff]
    %v1305 = vld [vmem:[%s5 + $0x8] sm:$0xff]
    %v1306 = vld [vmem:[%s5 + $0x10] sm:$0xff]
    %v1307 = vld [vmem:[%s5 + $0x18] sm:$0xff]
    %v1308 = vld [vmem:[%s5 + $0x20] sm:$0xff]
    %v1309 = vld [vmem:[%s5 + $0x28] sm:$0xff]
    %v1310 = vld [vmem:[%s5 + $0x30] sm:$0xff]
    %v1311 = vld [vmem:[%s5 + $0x38] sm:$0xff]
    %v1312 = vld [vmem:[%s5 + $0x40] sm:$0xff]
    %v1313 = vld [vmem:[%s5 + $0x48] sm:$0xff]
    %v1314 = vld [vmem:[%s5 + $0x50] sm:$0xff]
    %v1315 = vld [vmem:[%s5 + $0x58] sm:$0xff]
    %v1316 = vld [vmem:[%s5 + $0x60] sm:$0xff]
    %v1317 = vld [vmem:[%s5 + $0x68] sm:$0xff]
    %v1318 = vld [vmem:[%s5 + $0x70] sm:$0xff]
    %v1319 = vld [vmem:[%s5 + $0x78] sm:$0xff]
    %v1320 = vld [vmem:[%s5 + $0x80] sm:$0xff]
    %v1321 = vld [vmem:[%s5 + $0x88] sm:$0xff]
    %v1322 = vld [vmem:[%s5 + $0x90] sm:$0xff]
    %v1323 = vld [vmem:[%s5 + $0x98] sm:$0xff]
    %v1324 = vld [vmem:[%s5 + $0xa0] sm:$0xff]
    %v1325 = vld [vmem:[%s5 + $0xa8] sm:$0xff]
    %v1326 = vld [vmem:[%s5 + $0xb0] sm:$0xff]
    %v1327 = vld [vmem:[%s5 + $0xb8] sm:$0xff]
    %v1328 = vld [vmem:[%s5 + $0xc0] sm:$0xff]
    %v1329 = vld [vmem:[%s5 + $0xc8] sm:$0xff]
    %v1330 = vld [vmem:[%s5 + $0xd0] sm:$0xff]
    %v1331 = vld [vmem:[%s5 + $0xd8] sm:$0xff]
    %v1332 = vld [vmem:[%s5 + $0xe0] sm:$0xff]
    %v1333 = vld [vmem:[%s5 + $0xe8] sm:$0xff]
    %v1334 = vld [vmem:[%s5 + $0xf0] sm:$0xff]
    %v1335 = vld [vmem:[%s5 + $0xf8] sm:$0xff]
    %v1336 = vld [vmem:[%s5 + $0x100] sm:$0xff]
    %v1337 = vld [vmem:[%s5 + $0x108] sm:$0xff]
    %v1338 = vld [vmem:[%s5 + $0x110] sm:$0xff]
    %v1339 = vld [vmem:[%s5 + $0x118] sm:$0xff]
    %v1340 = vld [vmem:[%s5 + $0x120] sm:$0xff]
    %v1341 = vld [vmem:[%s5 + $0x128] sm:$0xff]
    %v1342 = vld [vmem:[%s5 + $0x130] sm:$0xff]
    %v1343 = vld [vmem:[%s5 + $0x138] sm:$0xff]
    %v1344 = vld [vmem:[%s5 + $0x140] sm:$0xff]
    %v1345 = vld [vmem:[%s5 + $0x148] sm:$0xff]
    %v1346 = vld [vmem:[%s5 + $0x150] sm:$0xff]
    %v1347 = vld [vmem:[%s5 + $0x158] sm:$0xff]
    %v1348 = vld [vmem:[%s5 + $0x160] sm:$0xff]
    %v1349 = vld [vmem:[%s5 + $0x168] sm:$0xff]
    %v1350 = vld [vmem:[%s5 + $0x170] sm:$0xff]
    %v1351 = vld [vmem:[%s5 + $0x178] sm:$0xff]
    %v1352 = vld [vmem:[%s5 + $0x180] sm:$0xff]
    %v1353 = vld [vmem:[%s5 + $0x188] sm:$0xff]
    %v1354 = vld [vmem:[%s5 + $0x190] sm:$0xff]
    %v1355 = vld [vmem:[%s5 + $0x198] sm:$0xff]
    %v1356 = vld [vmem:[%s5 + $0x1a0] sm:$0xff]
    %v1357 = vld [vmem:[%s5 + $0x1a8] sm:$0xff]
    %v1358 = vld [vmem:[%s5 + $0x1b0] sm:$0xff]
    %v1359 = vld [vmem:[%s5 + $0x1b8] sm:$0xff]
    %v1360 = vld [vmem:[%s5 + $0x1c0] sm:$0xff]
    %v1361 = vld [vmem:[%s5 + $0x1c8] sm:$0xff]
    %v1362 = vld [vmem:[%s5 + $0x1d0] sm:$0xff]
    %v1363 = vld [vmem:[%s5 + $0x1d8] sm:$0xff]
    %v1364 = vld [vmem:[%s5 + $0x1e0] sm:$0xff]
    %v1365 = vld [vmem:[%s5 + $0x1e8] sm:$0xff]
    %v1366 = vld [vmem:[%s5 + $0x1f0] sm:$0xff]
    %v1367 = vld [vmem:[%s5 + $0x1f8] sm:$0xff]
    %v1368 = vld [vmem:[%s5 + $0x200] sm:$0xff]
    %v1369 = vld [vmem:[%s5 + $0x208] sm:$0xff]
    %v1370 = vld [vmem:[%s6] sm:$0x1]
    %v1372 = vlaneseq
    %v1373 = vshrl.u32 %v1372, 7
    %v1374 = vsub.s32 0, %v1373
    %v1375 = vrot.slane %v1370, %v1374
    %v1378 = vsel %vm40, %v1288, 0
    %v1381 = vsel %vm40, %v1293, 0
    %v1384 = vsel %vm40, %v1298, 0
    %v1387 = vsel %vm40, %v1303, 0
    %1389 = vmatprep.subr.mxu0 0.0
    %1390 = vmatpush1.msra.mxu0 %v1304
    %1391 = vmatprep.subr.mxu0 0.0
    %1392 = vmatpush1.msra.mxu0 %v1305
    %1393 = vmatprep.subr.mxu0 0.0
    %1394 = vmatpush1.msra.mxu0 %v1306
    %1395 = vmatprep.subr.mxu0 0.0
    %1396 = vmatpush1.msra.mxu0 %v1307
    %1397 = vmatprep.subr.mxu0 0.0
    %1398 = vmatpush1.msra.mxu0 %v1308
    %1399 = vmatprep.subr.mxu0 0.0
    %1400 = vmatpush1.msra.mxu0 %v1309
    %1401 = vmatprep.subr.mxu0 0.0
    %1402 = vmatpush1.msra.mxu0 %v1310
    %1403 = vmatprep.subr.mxu0 0.0
    %1404 = vmatpush1.msra.mxu0 %v1311
    %1405 = vmatprep.subr.mxu0 0.0
    %1406 = vmatpush1.msra.mxu0 %v1312
    %1407 = vmatprep.subr.mxu0 0.0
    %1408 = vmatpush1.msra.mxu0 %v1313
    %1409 = vmatprep.subr.mxu0 0.0
    %1410 = vmatpush1.msra.mxu0 %v1314
    %1411 = vmatprep.subr.mxu0 0.0
    %1412 = vmatpush1.msra.mxu0 %v1315
    %1413 = vmatprep.subr.mxu0 0.0
    %1414 = vmatpush1.msra.mxu0 %v1316
    %1415 = vmatprep.subr.mxu0 0.0
    %1416 = vmatpush1.msra.mxu0 %v1317
    %1417 = vmatprep.subr.mxu0 0.0
    %1418 = vmatpush1.msra.mxu0 %v1318
    %1419 = vmatprep.subr.mxu0 0.0
    %1420 = vmatpush1.msra.mxu0 %v1319
    %1421 = vmatprep.subr.mxu0 0.0
    %1422 = vmatpush1.msra.mxu0 %v1320
    %1423 = vmatprep.subr.mxu0 0.0
    %1424 = vmatpush1.msra.mxu0 %v1321
    %1425 = vmatprep.subr.mxu0 0.0
    %1426 = vmatpush1.msra.mxu0 %v1322
    %1427 = vmatprep.subr.mxu0 0.0
    %1428 = vmatpush1.msra.mxu0 %v1323
    %1429 = vmatprep.subr.mxu0 0.0
    %1430 = vmatpush1.msra.mxu0 %v1324
    %1431 = vmatprep.subr.mxu0 0.0
    %1432 = vmatpush1.msra.mxu0 %v1325
    %1433 = vmatprep.subr.mxu0 0.0
    %1434 = vmatpush1.msra.mxu0 %v1326
    %1435 = vmatprep.subr.mxu0 0.0
    %1436 = vmatpush1.msra.mxu0 %v1327
    %1437 = vmatprep.subr.mxu0 0.0
    %1438 = vmatpush1.msra.mxu0 %v1328
    %1439 = vmatprep.subr.mxu0 0.0
    %1440 = vmatpush1.msra.mxu0 %v1329
    %1441 = vmatprep.subr.mxu0 0.0
    %1442 = vmatpush1.msra.mxu0 %v1330
    %1443 = vmatprep.subr.mxu0 0.0
    %1444 = vmatpush1.msra.mxu0 %v1331
    %1445 = vmatprep.subr.mxu0 0.0
    %1446 = vmatpush1.msra.mxu0 %v1332
    %1447 = vmatprep.subr.mxu0 0.0
    %1448 = vmatpush1.msra.mxu0 %v1333
    %1449 = vmatprep.subr.mxu0 0.0
    %1450 = vmatpush1.msra.mxu0 %v1334
    %1451 = vmatprep.subr.mxu0 0.0
    %1452 = vmatpush1.msra.mxu0 %v1335
    %1453 = vmatprep.mubr.f32.mxu0 %v1285
    %1454 = vmatmul.mubr.f32.gmra.mrb[0].mxu0 %v1284
    %v1455 = vpop.f32.mrb[0].mxu0
    %v1456 = vadd.f32 %v1375, %v1455
    %v1457 = vpop.f32.mrb[0].mxu0
    %1458 = vmatprep.mubr.f32.mxu0 %v1290
    %1459 = vmatmul.mubr.f32.gmra.mrb[0].mxu0 %v1289
    %v1460 = vpop.f32.mrb[0].mxu0
    %v1461 = vadd.f32 %v1375, %v1460
    %v1462 = vpop.f32.mrb[0].mxu0
    %1463 = vmatprep.mubr.f32.mxu0 %v1295
    %1464 = vmatmul.mubr.f32.gmra.mrb[0].mxu0 %v1294
    %v1465 = vpop.f32.mrb[0].mxu0
    %v1466 = vadd.f32 %v1375, %v1465
    %v1467 = vpop.f32.mrb[0].mxu0
    %1468 = vmatprep.mubr.f32.mxu0 %v1300
    %1469 = vmatmul.mubr.f32.gmra.mrb[0].mxu0 %v1299
    %v1470 = vpop.f32.mrb[0].mxu0
    %v1471 = vadd.f32 %v1375, %v1470
    %v1472 = vpop.f32.mrb[0].mxu0
    %1473 = vdwg.mxu0
    %1474 = vmatprep.subr.mxu0 0.0
    %1475 = vmatpush1.msra.mxu0 %v1336
    %1476 = vmatprep.subr.mxu0 0.0
    %1477 = vmatpush1.msra.mxu0 %v1337
    %1478 = vmatprep.subr.mxu0 0.0
    %1479 = vmatpush1.msra.mxu0 %v1338
    %1480 = vmatprep.subr.mxu0 0.0
    %1481 = vmatpush1.msra.mxu0 %v1339
    %1482 = vmatprep.subr.mxu0 0.0
    %1483 = vmatpush1.msra.mxu0 %v1340
    %1484 = vmatprep.subr.mxu0 0.0
    %1485 = vmatpush1.msra.mxu0 %v1341
    %1486 = vmatprep.subr.mxu0 0.0
    %1487 = vmatpush1.msra.mxu0 %v1342
    %1488 = vmatprep.subr.mxu0 0.0
    %1489 = vmatpush1.msra.mxu0 %v1343
    %1490 = vmatprep.subr.mxu0 0.0
    %1491 = vmatpush1.msra.mxu0 %v1344
    %1492 = vmatprep.subr.mxu0 0.0
    %1493 = vmatpush1.msra.mxu0 %v1345
    %1494 = vmatprep.subr.mxu0 0.0
    %1495 = vmatpush1.msra.mxu0 %v1346
    %1496 = vmatprep.subr.mxu0 0.0
    %1497 = vmatpush1.msra.mxu0 %v1347
    %1498 = vmatprep.subr.mxu0 0.0
    %1499 = vmatpush1.msra.mxu0 %v1348
    %1500 = vmatprep.subr.mxu0 0.0
    %1501 = vmatpush1.msra.mxu0 %v1349
    %1502 = vmatprep.subr.mxu0 0.0
    %1503 = vmatpush1.msra.mxu0 %v1350
    %1504 = vmatprep.subr.mxu0 0.0
    %1505 = vmatpush1.msra.mxu0 %v1351
    %1506 = vmatprep.subr.mxu0 0.0
    %1507 = vmatpush1.msra.mxu0 %v1352
    %1508 = vmatprep.subr.mxu0 0.0
    %1509 = vmatpush1.msra.mxu0 %v1353
    %1510 = vmatprep.subr.mxu0 0.0
    %1511 = vmatpush1.msra.mxu0 %v1354
    %1512 = vmatprep.subr.mxu0 0.0
    %1513 = vmatpush1.msra.mxu0 %v1355
    %1514 = vmatprep.subr.mxu0 0.0
    %1515 = vmatpush1.msra.mxu0 %v1356
    %1516 = vmatprep.subr.mxu0 0.0
    %1517 = vmatpush1.msra.mxu0 %v1357
    %1518 = vmatprep.subr.mxu0 0.0
    %1519 = vmatpush1.msra.mxu0 %v1358
    %1520 = vmatprep.subr.mxu0 0.0
    %1521 = vmatpush1.msra.mxu0 %v1359
    %1522 = vmatprep.subr.mxu0 0.0
    %1523 = vmatpush1.msra.mxu0 %v1360
    %1524 = vmatprep.subr.mxu0 0.0
    %1525 = vmatpush1.msra.mxu0 %v1361
    %1526 = vmatprep.subr.mxu0 0.0
    %1527 = vmatpush1.msra.mxu0 %v1362
    %1528 = vmatprep.subr.mxu0 0.0
    %1529 = vmatpush1.msra.mxu0 %v1363
    %1530 = vmatprep.subr.mxu0 0.0
    %1531 = vmatpush1.msra.mxu0 %v1364
    %1532 = vmatprep.subr.mxu0 0.0
    %1533 = vmatpush1.msra.mxu0 %v1365
    %1534 = vmatprep.subr.mxu0 0.0
    %1535 = vmatpush1.msra.mxu0 %v1366
    %1536 = vmatprep.subr.mxu0 0.0
    %1537 = vmatpush1.msra.mxu0 %v1367
    %1538 = vmatprep.mubr.f32.mxu0 %v1287
    %1539 = vmatmul.mubr.f32.gmra.mrb[0].mxu0 %v1286
    %v1540 = vpop.f32.mrb[0].mxu0
    %v1541 = vadd.f32 %v1456, %v1540
    %v1542 = vpop.f32.mrb[0].mxu0
    %1543 = vmatprep.mubr.f32.mxu0 %v1292
    %1544 = vmatmul.mubr.f32.gmra.mrb[0].mxu0 %v1291
    %v1545 = vpop.f32.mrb[0].mxu0
    %v1546 = vadd.f32 %v1461, %v1545
    %v1547 = vpop.f32.mrb[0].mxu0
    %1548 = vmatprep.mubr.f32.mxu0 %v1297
    %1549 = vmatmul.mubr.f32.gmra.mrb[0].mxu0 %v1296
    %v1550 = vpop.f32.mrb[0].mxu0
    %v1551 = vadd.f32 %v1466, %v1550
    %v1552 = vpop.f32.mrb[0].mxu0
    %1553 = vmatprep.mubr.f32.mxu0 %v1302
    %1554 = vmatmul.mubr.f32.gmra.mrb[0].mxu0 %v1301
    %v1555 = vpop.f32.mrb[0].mxu0
    %v1556 = vadd.f32 %v1471, %v1555
    %v1557 = vpop.f32.mrb[0].mxu0
    %1558 = vdwg.mxu0
    %1559 = vmatprep.subr.mxu0 0.0
    %1560 = vmatpush1.msra.mxu0 %v1368
    %1561 = vmatprep.subr.mxu0 0.0
    %1562 = vmatpush1.msra.mxu0 %v1369
    %1563 = vmatprep.subr.mxu0 0.0
    %1564 = vmatpush1.msra.mxu0 0.0
    %1565 = vmatprep.subr.mxu0 0.0
    %1566 = vmatpush1.msra.mxu0 0.0
    %1567 = vmatprep.subr.mxu0 0.0
    %1568 = vmatpush1.msra.mxu0 0.0
    %1569 = vmatprep.subr.mxu0 0.0
    %1570 = vmatpush1.msra.mxu0 0.0
    %1571 = vmatprep.subr.mxu0 0.0
    %1572 = vmatpush1.msra.mxu0 0.0
    %1573 = vmatprep.subr.mxu0 0.0
    %1574 = vmatpush1.msra.mxu0 0.0
    %1575 = vmatprep.subr.mxu0 0.0
    %1576 = vmatpush1.msra.mxu0 0.0
    %1577 = vmatprep.subr.mxu0 0.0
    %1578 = vmatpush1.msra.mxu0 0.0
    %1579 = vmatprep.subr.mxu0 0.0
    %1580 = vmatpush1.msra.mxu0 0.0
    %1581 = vmatprep.subr.mxu0 0.0
    %1582 = vmatpush1.msra.mxu0 0.0
    %1583 = vmatprep.subr.mxu0 0.0
    %1584 = vmatpush1.msra.mxu0 0.0
    %1585 = vmatprep.subr.mxu0 0.0
    %1586 = vmatpush1.msra.mxu0 0.0
    %1587 = vmatprep.subr.mxu0 0.0
    %1588 = vmatpush1.msra.mxu0 0.0
    %1589 = vmatprep.subr.mxu0 0.0
    %1590 = vmatpush1.msra.mxu0 0.0
    %1591 = vmatprep.subr.mxu0 0.0
    %1592 = vmatpush1.msra.mxu0 0.0
    %1593 = vmatprep.subr.mxu0 0.0
    %1594 = vmatpush1.msra.mxu0 0.0
    %1595 = vmatprep.subr.mxu0 0.0
    %1596 = vmatpush1.msra.mxu0 0.0
    %1597 = vmatprep.subr.mxu0 0.0
    %1598 = vmatpush1.msra.mxu0 0.0
    %1599 = vmatprep.subr.mxu0 0.0
    %1600 = vmatpush1.msra.mxu0 0.0
    %1601 = vmatprep.subr.mxu0 0.0
    %1602 = vmatpush1.msra.mxu0 0.0
    %1603 = vmatprep.subr.mxu0 0.0
    %1604 = vmatpush1.msra.mxu0 0.0
    %1605 = vmatprep.subr.mxu0 0.0
    %1606 = vmatpush1.msra.mxu0 0.0
    %1607 = vmatprep.subr.mxu0 0.0
    %1608 = vmatpush1.msra.mxu0 0.0
    %1609 = vmatprep.subr.mxu0 0.0
    %1610 = vmatpush1.msra.mxu0 0.0
    %1611 = vmatprep.subr.mxu0 0.0
    %1612 = vmatpush1.msra.mxu0 0.0
    %1613 = vmatprep.subr.mxu0 0.0
    %1614 = vmatpush1.msra.mxu0 0.0
    %1615 = vmatprep.subr.mxu0 0.0
    %1616 = vmatpush1.msra.mxu0 0.0
    %1617 = vmatprep.subr.mxu0 0.0
    %1618 = vmatpush1.msra.mxu0 0.0
    %1619 = vmatprep.subr.mxu0 0.0
    %1620 = vmatpush1.msra.mxu0 0.0
    %1621 = vmatprep.subr.mxu0 0.0
    %1622 = vmatpush1.msra.mxu0 0.0
    %1623 = vmatprep.mubr.f32.mxu0 0.0
    %1624 = vmatmul.mubr.f32.gmra.mrb[0].mxu0 %v1378
    %v1625 = vpop.f32.mrb[0].mxu0
    %v1626 = vadd.f32 %v1541, %v1625
    %v1627 = vpop.f32.mrb[0].mxu0
    %1628 = vmatprep.mubr.f32.mxu0 0.0
    %1629 = vmatmul.mubr.f32.gmra.mrb[0].mxu0 %v1381
    %v1630 = vpop.f32.mrb[0].mxu0
    %v1631 = vadd.f32 %v1546, %v1630
    %v1632 = vpop.f32.mrb[0].mxu0
    %1633 = vmatprep.mubr.f32.mxu0 0.0
    %1634 = vmatmul.mubr.f32.gmra.mrb[0].mxu0 %v1384
    %v1635 = vpop.f32.mrb[0].mxu0
    %v1636 = vadd.f32 %v1551, %v1635
    %v1637 = vpop.f32.mrb[0].mxu0
    %1638 = vmatprep.mubr.f32.mxu0 0.0
    %1639 = vmatmul.mubr.f32.gmra.mrb[0].mxu0 %v1387
    %v1640 = vpop.f32.mrb[0].mxu0
    %v1641 = vadd.f32 %v1556, %v1640
    %v1642 = vpop.f32.mrb[0].mxu0
    %1643 = vdwg.mxu0
    %1644 = vst.msk [vmem:[#allocation2 + $0x5] sm:$0xff] %vm323, %v1626
    %1645 = vst.msk [vmem:[#allocation2 + $0xd] sm:$0xff] %vm323, %v1631
    %1646 = vst.msk [vmem:[#allocation2 + $0x1f] sm:$0xff] %vm323, %v1636
    %1647 = vst.msk [vmem:[#allocation2 + $0x27] sm:$0xff] %vm323, %v1641
    %v1648 = vld [vmem:[#allocation2] sm:$0xff]
    %v1649 = vld [vmem:[#allocation2 + $0x8] sm:$0xff]
    %1650 = vst.msk [vmem:[#allocation3] sm:$0xff] %vm323, %v1648
    %1651 = vst.msk [vmem:[#allocation3 + $0x28] sm:$0xff] %vm323, %v1649
    %v1652 = vld [vmem:[#allocation2 + $0x1] sm:$0xff]
    %v1653 = vld [vmem:[#allocation2 + $0x9] sm:$0xff]
    %1656 = vrot.lane.b32.xlu0 %v1652, 48
    %v1657 = vpop.permute.xlu0 %1656
    %1658 = vrot.lane.b32.xlu0 %v1653, 48
    %v1659 = vpop.permute.xlu0 %1658
    %1662 = vst.msk [vmem:[#allocation3] sm:$0xff] %vm439, %v1657
    %1663 = vst.msk [vmem:[#allocation3 + $0x28] sm:$0xff] %vm439, %v1659
    %v1664 = vld [vmem:[#allocation2 + $0x2] sm:$0xff]
    %v1665 = vld [vmem:[#allocation2 + $0xa] sm:$0xff]
    %1668 = vrot.lane.b32.xlu0 %v1664, 96
    %v1669 = vpop.permute.xlu0 %1668
    %1670 = vrot.lane.b32.xlu0 %v1665, 96
    %v1671 = vpop.permute.xlu0 %1670
    %1674 = vst.msk [vmem:[#allocation3] sm:$0xff] %vm452, %v1669
    %1675 = vst.msk [vmem:[#allocation3 + $0x8] sm:$0xff] %vm40, %v1669
    %1676 = vst.msk [vmem:[#allocation3 + $0x28] sm:$0xff] %vm452, %v1671
    %1677 = vst.msk [vmem:[#allocation3 + $0x30] sm:$0xff] %vm40, %v1671
    %v1678 = vld [vmem:[#allocation2 + $0x3] sm:$0xff]
    %v1679 = vld [vmem:[#allocation2 + $0xb] sm:$0xff]
    %1682 = vrot.lane.b32.xlu0 %v1678, 16
    %v1683 = vpop.permute.xlu0 %1682
    %1684 = vrot.lane.b32.xlu0 %v1679, 16
    %v1685 = vpop.permute.xlu0 %1684
    %1688 = vst.msk [vmem:[#allocation3 + $0x8] sm:$0xff] %vm467, %v1683
    %1689 = vst.msk [vmem:[#allocation3 + $0x30] sm:$0xff] %vm467, %v1685
    %v1690 = vld [vmem:[#allocation2 + $0x4] sm:$0xff]
    %v1691 = vld [vmem:[#allocation2 + $0xc] sm:$0xff]
    %1694 = vrot.lane.b32.xlu0 %v1690, 64
    %v1695 = vpop.permute.xlu0 %1694
    %1696 = vrot.lane.b32.xlu0 %v1691, 64
    %v1697 = vpop.permute.xlu0 %1696
    %1700 = vst.msk [vmem:[#allocation3 + $0x8] sm:$0xff] %vm480, %v1695
    %1701 = vst.msk [vmem:[#allocation3 + $0x30] sm:$0xff] %vm480, %v1697
    %v1702 = vld [vmem:[#allocation2 + $0x5] sm:$0xff]
    %v1703 = vld [vmem:[#allocation2 + $0xd] sm:$0xff]
    %1706 = vrot.lane.b32.xlu0 %v1702, 112
    %v1707 = vpop.permute.xlu0 %1706
    %1708 = vrot.lane.b32.xlu0 %v1703, 112
    %v1709 = vpop.permute.xlu0 %1708
    %1712 = vst.msk [vmem:[#allocation3 + $0x8] sm:$0xff] %vm139, %v1707
    %1713 = vst.msk [vmem:[#allocation3 + $0x10] sm:$0xff] %vm494, %v1707
    %1714 = vst.msk [vmem:[#allocation3 + $0x30] sm:$0xff] %vm139, %v1709
    %1715 = vst.msk [vmem:[#allocation3 + $0x38] sm:$0xff] %vm494, %v1709
    %v1716 = vld [vmem:[#allocation2 + $0x6] sm:$0xff]
    %v1717 = vld [vmem:[#allocation2 + $0xe] sm:$0xff]
    %1720 = vrot.lane.b32.xlu0 %v1716, 32
    %v1721 = vpop.permute.xlu0 %1720
    %1722 = vrot.lane.b32.xlu0 %v1717, 32
    %v1723 = vpop.permute.xlu0 %1722
    %1726 = vst.msk [vmem:[#allocation3 + $0x10] sm:$0xff] %vm508, %v1721
    %1727 = vst.msk [vmem:[#allocation3 + $0x38] sm:$0xff] %vm508, %v1723
    %v1728 = vld [vmem:[#allocation2 + $0x7] sm:$0xff]
    %v1729 = vld [vmem:[#allocation2 + $0xf] sm:$0xff]
    %1732 = vrot.lane.b32.xlu0 %v1728, 80
    %v1733 = vpop.permute.xlu0 %1732
    %1734 = vrot.lane.b32.xlu0 %v1729, 80
    %v1735 = vpop.permute.xlu0 %1734
    %1738 = vst.msk [vmem:[#allocation3 + $0x10] sm:$0xff] %vm521, %v1733
    %1739 = vst.msk [vmem:[#allocation3 + $0x38] sm:$0xff] %vm521, %v1735
    %v1740 = vld [vmem:[#allocation2 + $0x8] sm:$0xff]
    %v1741 = vld [vmem:[#allocation2 + $0x10] sm:$0xff]
    %1742 = vst.msk [vmem:[#allocation3 + $0x18] sm:$0xff] %vm323, %v1740
    %1743 = vst.msk [vmem:[#allocation3 + $0x40] sm:$0xff] %vm323, %v1741
    %v1744 = vld [vmem:[#allocation2 + $0x9] sm:$0xff]
    %v1745 = vld [vmem:[#allocation2 + $0x11] sm:$0xff]
    %1748 = vrot.lane.b32.xlu0 %v1744, 48
    %v1749 = vpop.permute.xlu0 %1748
    %1750 = vrot.lane.b32.xlu0 %v1745, 48
    %v1751 = vpop.permute.xlu0 %1750
    %1754 = vst.msk [vmem:[#allocation3 + $0x18] sm:$0xff] %vm439, %v1749
    %1755 = vst.msk [vmem:[#allocation3 + $0x40] sm:$0xff] %vm439, %v1751
    %v1756 = vld [vmem:[#allocation2 + $0xa] sm:$0xff]
    %v1757 = vld [vmem:[#allocation2 + $0x12] sm:$0xff]
    %1760 = vrot.lane.b32.xlu0 %v1756, 96
    %v1761 = vpop.permute.xlu0 %1760
    %1762 = vrot.lane.b32.xlu0 %v1757, 96
    %v1763 = vpop.permute.xlu0 %1762
    %1766 = vst.msk [vmem:[#allocation3 + $0x18] sm:$0xff] %vm452, %v1761
    %1767 = vst.msk [vmem:[#allocation3 + $0x20] sm:$0xff] %vm40, %v1761
    %1768 = vst.msk [vmem:[#allocation3 + $0x40] sm:$0xff] %vm452, %v1763
    %1769 = vst.msk [vmem:[#allocation3 + $0x48] sm:$0xff] %vm40, %v1763
    %v1770 = vld [vmem:[#allocation2 + $0x1a] sm:$0xff]
    %v1771 = vld [vmem:[#allocation2 + $0x22] sm:$0xff]
    %1772 = vst.msk [vmem:[#allocation3 + $0x50] sm:$0xff] %vm323, %v1770
    %1773 = vst.msk [vmem:[#allocation3 + $0x78] sm:$0xff] %vm323, %v1771
    %v1774 = vld [vmem:[#allocation2 + $0x1b] sm:$0xff]
    %v1775 = vld [vmem:[#allocation2 + $0x23] sm:$0xff]
    %1778 = vrot.lane.b32.xlu0 %v1774, 48
    %v1779 = vpop.permute.xlu0 %1778
    %1780 = vrot.lane.b32.xlu0 %v1775, 48
    %v1781 = vpop.permute.xlu0 %1780
    %1784 = vst.msk [vmem:[#allocation3 + $0x50] sm:$0xff] %vm439, %v1779
    %1785 = vst.msk [vmem:[#allocation3 + $0x78] sm:$0xff] %vm439, %v1781
    %v1786 = vld [vmem:[#allocation2 + $0x1c] sm:$0xff]
    %v1787 = vld [vmem:[#allocation2 + $0x24] sm:$0xff]
    %1790 = vrot.lane.b32.xlu0 %v1786, 96
    %v1791 = vpop.permute.xlu0 %1790
    %1792 = vrot.lane.b32.xlu0 %v1787, 96
    %v1793 = vpop.permute.xlu0 %1792
    %1796 = vst.msk [vmem:[#allocation3 + $0x50] sm:$0xff] %vm452, %v1791
    %1797 = vst.msk [vmem:[#allocation3 + $0x58] sm:$0xff] %vm40, %v1791
    %1798 = vst.msk [vmem:[#allocation3 + $0x78] sm:$0xff] %vm452, %v1793
    %1799 = vst.msk [vmem:[#allocation3 + $0x80] sm:$0xff] %vm40, %v1793
    %v1800 = vld [vmem:[#allocation2 + $0x1d] sm:$0xff]
    %v1801 = vld [vmem:[#allocation2 + $0x25] sm:$0xff]
    %1804 = vrot.lane.b32.xlu0 %v1800, 16
    %v1805 = vpop.permute.xlu0 %1804
    %1806 = vrot.lane.b32.xlu0 %v1801, 16
    %v1807 = vpop.permute.xlu0 %1806
    %1810 = vst.msk [vmem:[#allocation3 + $0x58] sm:$0xff] %vm467, %v1805
    %1811 = vst.msk [vmem:[#allocation3 + $0x80] sm:$0xff] %vm467, %v1807
    %v1812 = vld [vmem:[#allocation2 + $0x1e] sm:$0xff]
    %v1813 = vld [vmem:[#allocation2 + $0x26] sm:$0xff]
    %1816 = vrot.lane.b32.xlu0 %v1812, 64
    %v1817 = vpop.permute.xlu0 %1816
    %1818 = vrot.lane.b32.xlu0 %v1813, 64
    %v1819 = vpop.permute.xlu0 %1818
    %1822 = vst.msk [vmem:[#allocation3 + $0x58] sm:$0xff] %vm480, %v1817
    %1823 = vst.msk [vmem:[#allocation3 + $0x80] sm:$0xff] %vm480, %v1819
    %v1824 = vld [vmem:[#allocation2 + $0x1f] sm:$0xff]
    %v1825 = vld [vmem:[#allocation2 + $0x27] sm:$0xff]
    %1828 = vrot.lane.b32.xlu0 %v1824, 112
    %v1829 = vpop.permute.xlu0 %1828
    %1830 = vrot.lane.b32.xlu0 %v1825, 112
    %v1831 = vpop.permute.xlu0 %1830
    %1834 = vst.msk [vmem:[#allocation3 + $0x58] sm:$0xff] %vm139, %v1829
    %1835 = vst.msk [vmem:[#allocation3 + $0x60] sm:$0xff] %vm494, %v1829
    %1836 = vst.msk [vmem:[#allocation3 + $0x80] sm:$0xff] %vm139, %v1831
    %1837 = vst.msk [vmem:[#allocation3 + $0x88] sm:$0xff] %vm494, %v1831
    %v1838 = vld [vmem:[#allocation2 + $0x20] sm:$0xff]
    %v1839 = vld [vmem:[#allocation2 + $0x28] sm:$0xff]
    %1842 = vrot.lane.b32.xlu0 %v1838, 32
    %v1843 = vpop.permute.xlu0 %1842
    %1844 = vrot.lane.b32.xlu0 %v1839, 32
    %v1845 = vpop.permute.xlu0 %1844
    %1848 = vst.msk [vmem:[#allocation3 + $0x60] sm:$0xff] %vm508, %v1843
    %1849 = vst.msk [vmem:[#allocation3 + $0x88] sm:$0xff] %vm508, %v1845
    %v1850 = vld [vmem:[#allocation2 + $0x21] sm:$0xff]
    %v1851 = vld [vmem:[#allocation2 + $0x29] sm:$0xff]
    %1854 = vrot.lane.b32.xlu0 %v1850, 80
    %v1855 = vpop.permute.xlu0 %1854
    %1856 = vrot.lane.b32.xlu0 %v1851, 80
    %v1857 = vpop.permute.xlu0 %1856
    %1860 = vst.msk [vmem:[#allocation3 + $0x60] sm:$0xff] %vm521, %v1855
    %1861 = vst.msk [vmem:[#allocation3 + $0x88] sm:$0xff] %vm521, %v1857
    %v1862 = vld [vmem:[#allocation2 + $0x22] sm:$0xff]
    %v1863 = vld [vmem:[#allocation2 + $0x2a] sm:$0xff]
    %1864 = vst.msk [vmem:[#allocation3 + $0x68] sm:$0xff] %vm323, %v1862
    %1865 = vst.msk [vmem:[#allocation3 + $0x90] sm:$0xff] %vm323, %v1863
    %v1866 = vld [vmem:[#allocation2 + $0x23] sm:$0xff]
    %v1867 = vld [vmem:[#allocation2 + $0x2b] sm:$0xff]
    %1870 = vrot.lane.b32.xlu0 %v1866, 48
    %v1871 = vpop.permute.xlu0 %1870
    %1872 = vrot.lane.b32.xlu0 %v1867, 48
    %v1873 = vpop.permute.xlu0 %1872
    %1876 = vst.msk [vmem:[#allocation3 + $0x68] sm:$0xff] %vm439, %v1871
    %1877 = vst.msk [vmem:[#allocation3 + $0x90] sm:$0xff] %vm439, %v1873
    %v1878 = vld [vmem:[#allocation2 + $0x24] sm:$0xff]
    %v1879 = vld [vmem:[#allocation2 + $0x2c] sm:$0xff]
    %1882 = vrot.lane.b32.xlu0 %v1878, 96
    %v1883 = vpop.permute.xlu0 %1882
    %1884 = vrot.lane.b32.xlu0 %v1879, 96
    %v1885 = vpop.permute.xlu0 %1884
    %1888 = vst.msk [vmem:[#allocation3 + $0x68] sm:$0xff] %vm452, %v1883
    %1889 = vst.msk [vmem:[#allocation3 + $0x70] sm:$0xff] %vm40, %v1883
    %1890 = vst.msk [vmem:[#allocation3 + $0x90] sm:$0xff] %vm452, %v1885
    %1891 = vst.msk [vmem:[#allocation3 + $0x98] sm:$0xff] %vm40, %v1885
    %v1892 = vld [vmem:[#allocation3] sm:$0xff]
    %v1893 = vld [vmem:[#allocation3 + $0x8] sm:$0xff]
    %v1894 = vld [vmem:[#allocation3 + $0x10] sm:$0xff]
    %v1895 = vld [vmem:[#allocation3 + $0x18] sm:$0xff]
    %v1896 = vld [vmem:[#allocation3 + $0x20] sm:$0xff]
    %v1897 = vld [vmem:[#allocation3 + $0x28] sm:$0xff]
    %v1898 = vld [vmem:[#allocation3 + $0x30] sm:$0xff]
    %v1899 = vld [vmem:[#allocation3 + $0x38] sm:$0xff]
    %v1900 = vld [vmem:[#allocation3 + $0x40] sm:$0xff]
    %v1901 = vld [vmem:[#allocation3 + $0x48] sm:$0xff]
    %v1902 = vld [vmem:[#allocation3 + $0x50] sm:$0xff]
    %v1903 = vld [vmem:[#allocation3 + $0x58] sm:$0xff]
    %v1904 = vld [vmem:[#allocation3 + $0x60] sm:$0xff]
    %v1905 = vld [vmem:[#allocation3 + $0x68] sm:$0xff]
    %v1906 = vld [vmem:[#allocation3 + $0x70] sm:$0xff]
    %v1907 = vld [vmem:[#allocation3 + $0x78] sm:$0xff]
    %v1908 = vld [vmem:[#allocation3 + $0x80] sm:$0xff]
    %v1909 = vld [vmem:[#allocation3 + $0x88] sm:$0xff]
    %v1910 = vld [vmem:[#allocation3 + $0x90] sm:$0xff]
    %v1911 = vld [vmem:[#allocation3 + $0x98] sm:$0xff]
    %v1912 = vld [vmem:[%s7] sm:$0xff]
    %v1913 = vld [vmem:[%s7 + $0x8] sm:$0xff]
    %v1914 = vld [vmem:[%s7 + $0x10] sm:$0xff]
    %v1915 = vld [vmem:[%s7 + $0x18] sm:$0xff]
    %v1916 = vld [vmem:[%s7 + $0x20] sm:$0xff]
    %v1917 = vld [vmem:[%s7 + $0x28] sm:$0xff]
    %v1918 = vld [vmem:[%s7 + $0x30] sm:$0xff]
    %v1919 = vld [vmem:[%s7 + $0x38] sm:$0xff]
    %v1920 = vld [vmem:[%s7 + $0x40] sm:$0xff]
    %v1921 = vld [vmem:[%s7 + $0x48] sm:$0xff]
    %v1922 = vld [vmem:[%s7 + $0x50] sm:$0xff]
    %v1923 = vld [vmem:[%s7 + $0x58] sm:$0xff]
    %v1924 = vld [vmem:[%s7 + $0x60] sm:$0xff]
    %v1925 = vld [vmem:[%s7 + $0x68] sm:$0xff]
    %v1926 = vld [vmem:[%s7 + $0x70] sm:$0xff]
    %v1927 = vld [vmem:[%s7 + $0x78] sm:$0xff]
    %v1928 = vld [vmem:[%s7 + $0x80] sm:$0xff]
    %v1929 = vld [vmem:[%s7 + $0x88] sm:$0xff]
    %v1930 = vld [vmem:[%s7 + $0x90] sm:$0xff]
    %v1931 = vld [vmem:[%s7 + $0x98] sm:$0xff]
    %v1932 = vld [vmem:[%s7 + $0xa0] sm:$0xff]
    %v1933 = vld [vmem:[%s7 + $0xa8] sm:$0xff]
    %v1934 = vld [vmem:[%s7 + $0xb0] sm:$0xff]
    %v1935 = vld [vmem:[%s7 + $0xb8] sm:$0xff]
    %v1936 = vld [vmem:[%s7 + $0xc0] sm:$0xff]
    %v1937 = vld [vmem:[%s7 + $0xc8] sm:$0xff]
    %v1938 = vld [vmem:[%s7 + $0xd0] sm:$0xff]
    %v1939 = vld [vmem:[%s7 + $0xd8] sm:$0xff]
    %v1940 = vld [vmem:[%s7 + $0xe0] sm:$0xff]
    %v1941 = vld [vmem:[%s7 + $0xe8] sm:$0xff]
    %v1942 = vld [vmem:[%s7 + $0xf0] sm:$0xff]
    %v1943 = vld [vmem:[%s7 + $0xf8] sm:$0xff]
    %v1944 = vld [vmem:[%s7 + $0x100] sm:$0xff]
    %v1945 = vld [vmem:[%s7 + $0x108] sm:$0xff]
    %v1946 = vld [vmem:[%s7 + $0x110] sm:$0xff]
    %v1947 = vld [vmem:[%s7 + $0x118] sm:$0xff]
    %v1948 = vld [vmem:[%s7 + $0x120] sm:$0xff]
    %v1949 = vld [vmem:[%s7 + $0x128] sm:$0xff]
    %v1950 = vld [vmem:[%s7 + $0x130] sm:$0xff]
    %v1951 = vld [vmem:[%s7 + $0x138] sm:$0xff]
    %v1952 = vld [vmem:[%s7 + $0x140] sm:$0xff]
    %v1953 = vld [vmem:[%s7 + $0x148] sm:$0xff]
    %v1954 = vld [vmem:[%s7 + $0x150] sm:$0xff]
    %v1955 = vld [vmem:[%s7 + $0x158] sm:$0xff]
    %v1956 = vld [vmem:[%s7 + $0x160] sm:$0xff]
    %v1957 = vld [vmem:[%s7 + $0x168] sm:$0xff]
    %v1958 = vld [vmem:[%s7 + $0x170] sm:$0xff]
    %v1959 = vld [vmem:[%s7 + $0x178] sm:$0xff]
    %v1960 = vld [vmem:[%s7 + $0x180] sm:$0xff]
    %v1961 = vld [vmem:[%s7 + $0x188] sm:$0xff]
    %v1962 = vld [vmem:[%s7 + $0x190] sm:$0xff]
    %v1963 = vld [vmem:[%s7 + $0x198] sm:$0xff]
    %v1964 = vld [vmem:[%s7 + $0x1a0] sm:$0xff]
    %v1965 = vld [vmem:[%s7 + $0x1a8] sm:$0xff]
    %v1966 = vld [vmem:[%s7 + $0x1b0] sm:$0xff]
    %v1967 = vld [vmem:[%s7 + $0x1b8] sm:$0xff]
    %v1968 = vld [vmem:[%s7 + $0x1c0] sm:$0xff]
    %v1969 = vld [vmem:[%s7 + $0x1c8] sm:$0xff]
    %v1970 = vld [vmem:[%s7 + $0x1d0] sm:$0xff]
    %v1971 = vld [vmem:[%s7 + $0x1d8] sm:$0xff]
    %v1972 = vld [vmem:[%s7 + $0x1e0] sm:$0xff]
    %v1973 = vld [vmem:[%s7 + $0x1e8] sm:$0xff]
    %v1974 = vld [vmem:[%s7 + $0x1f0] sm:$0xff]
    %v1975 = vld [vmem:[%s7 + $0x1f8] sm:$0xff]
    %v1976 = vld [vmem:[%s7 + $0x200] sm:$0xff]
    %v1977 = vld [vmem:[%s7 + $0x208] sm:$0xff]
    %v1978 = vld [vmem:[%s8] sm:$0x1]
    %v1980 = vlaneseq
    %v1981 = vshrl.u32 %v1980, 7
    %v1982 = vsub.s32 0, %v1981
    %v1983 = vrot.slane %v1978, %v1982
    %v1986 = vsel %vm40, %v1896, 0
    %v1989 = vsel %vm40, %v1901, 0
    %v1992 = vsel %vm40, %v1906, 0
    %v1995 = vsel %vm40, %v1911, 0
    %1997 = vmatprep.subr.mxu0 0.0
    %1998 = vmatpush1.msra.mxu0 %v1912
    %1999 = vmatprep.subr.mxu0 0.0
    %2000 = vmatpush1.msra.mxu0 %v1913
    %2001 = vmatprep.subr.mxu0 0.0
    %2002 = vmatpush1.msra.mxu0 %v1914
    %2003 = vmatprep.subr.mxu0 0.0
    %2004 = vmatpush1.msra.mxu0 %v1915
    %2005 = vmatprep.subr.mxu0 0.0
    %2006 = vmatpush1.msra.mxu0 %v1916
    %2007 = vmatprep.subr.mxu0 0.0
    %2008 = vmatpush1.msra.mxu0 %v1917
    %2009 = vmatprep.subr.mxu0 0.0
    %2010 = vmatpush1.msra.mxu0 %v1918
    %2011 = vmatprep.subr.mxu0 0.0
    %2012 = vmatpush1.msra.mxu0 %v1919
    %2013 = vmatprep.subr.mxu0 0.0
    %2014 = vmatpush1.msra.mxu0 %v1920
    %2015 = vmatprep.subr.mxu0 0.0
    %2016 = vmatpush1.msra.mxu0 %v1921
    %2017 = vmatprep.subr.mxu0 0.0
    %2018 = vmatpush1.msra.mxu0 %v1922
    %2019 = vmatprep.subr.mxu0 0.0
    %2020 = vmatpush1.msra.mxu0 %v1923
    %2021 = vmatprep.subr.mxu0 0.0
    %2022 = vmatpush1.msra.mxu0 %v1924
    %2023 = vmatprep.subr.mxu0 0.0
    %2024 = vmatpush1.msra.mxu0 %v1925
    %2025 = vmatprep.subr.mxu0 0.0
    %2026 = vmatpush1.msra.mxu0 %v1926
    %2027 = vmatprep.subr.mxu0 0.0
    %2028 = vmatpush1.msra.mxu0 %v1927
    %2029 = vmatprep.subr.mxu0 0.0
    %2030 = vmatpush1.msra.mxu0 %v1928
    %2031 = vmatprep.subr.mxu0 0.0
    %2032 = vmatpush1.msra.mxu0 %v1929
    %2033 = vmatprep.subr.mxu0 0.0
    %2034 = vmatpush1.msra.mxu0 %v1930
    %2035 = vmatprep.subr.mxu0 0.0
    %2036 = vmatpush1.msra.mxu0 %v1931
    %2037 = vmatprep.subr.mxu0 0.0
    %2038 = vmatpush1.msra.mxu0 %v1932
    %2039 = vmatprep.subr.mxu0 0.0
    %2040 = vmatpush1.msra.mxu0 %v1933
    %2041 = vmatprep.subr.mxu0 0.0
    %2042 = vmatpush1.msra.mxu0 %v1934
    %2043 = vmatprep.subr.mxu0 0.0
    %2044 = vmatpush1.msra.mxu0 %v1935
    %2045 = vmatprep.subr.mxu0 0.0
    %2046 = vmatpush1.msra.mxu0 %v1936
    %2047 = vmatprep.subr.mxu0 0.0
    %2048 = vmatpush1.msra.mxu0 %v1937
    %2049 = vmatprep.subr.mxu0 0.0
    %2050 = vmatpush1.msra.mxu0 %v1938
    %2051 = vmatprep.subr.mxu0 0.0
    %2052 = vmatpush1.msra.mxu0 %v1939
    %2053 = vmatprep.subr.mxu0 0.0
    %2054 = vmatpush1.msra.mxu0 %v1940
    %2055 = vmatprep.subr.mxu0 0.0
    %2056 = vmatpush1.msra.mxu0 %v1941
    %2057 = vmatprep.subr.mxu0 0.0
    %2058 = vmatpush1.msra.mxu0 %v1942
    %2059 = vmatprep.subr.mxu0 0.0
    %2060 = vmatpush1.msra.mxu0 %v1943
    %2061 = vmatprep.mubr.f32.mxu0 %v1893
    %2062 = vmatmul.mubr.f32.gmra.mrb[0].mxu0 %v1892
    %v2063 = vpop.f32.mrb[0].mxu0
    %v2064 = vadd.f32 %v1983, %v2063
    %v2065 = vpop.f32.mrb[0].mxu0
    %2066 = vmatprep.mubr.f32.mxu0 %v1898
    %2067 = vmatmul.mubr.f32.gmra.mrb[0].mxu0 %v1897
    %v2068 = vpop.f32.mrb[0].mxu0
    %v2069 = vadd.f32 %v1983, %v2068
    %v2070 = vpop.f32.mrb[0].mxu0
    %2071 = vmatprep.mubr.f32.mxu0 %v1903
    %2072 = vmatmul.mubr.f32.gmra.mrb[0].mxu0 %v1902
    %v2073 = vpop.f32.mrb[0].mxu0
    %v2074 = vadd.f32 %v1983, %v2073
    %v2075 = vpop.f32.mrb[0].mxu0
    %2076 = vmatprep.mubr.f32.mxu0 %v1908
    %2077 = vmatmul.mubr.f32.gmra.mrb[0].mxu0 %v1907
    %v2078 = vpop.f32.mrb[0].mxu0
    %v2079 = vadd.f32 %v1983, %v2078
    %v2080 = vpop.f32.mrb[0].mxu0
    %2081 = vdwg.mxu0
    %2082 = vmatprep.subr.mxu0 0.0
    %2083 = vmatpush1.msra.mxu0 %v1944
    %2084 = vmatprep.subr.mxu0 0.0
    %2085 = vmatpush1.msra.mxu0 %v1945
    %2086 = vmatprep.subr.mxu0 0.0
    %2087 = vmatpush1.msra.mxu0 %v1946
    %2088 = vmatprep.subr.mxu0 0.0
    %2089 = vmatpush1.msra.mxu0 %v1947
    %2090 = vmatprep.subr.mxu0 0.0
    %2091 = vmatpush1.msra.mxu0 %v1948
    %2092 = vmatprep.subr.mxu0 0.0
    %2093 = vmatpush1.msra.mxu0 %v1949
    %2094 = vmatprep.subr.mxu0 0.0
    %2095 = vmatpush1.msra.mxu0 %v1950
    %2096 = vmatprep.subr.mxu0 0.0
    %2097 = vmatpush1.msra.mxu0 %v1951
    %2098 = vmatprep.subr.mxu0 0.0
    %2099 = vmatpush1.msra.mxu0 %v1952
    %2100 = vmatprep.subr.mxu0 0.0
    %2101 = vmatpush1.msra.mxu0 %v1953
    %2102 = vmatprep.subr.mxu0 0.0
    %2103 = vmatpush1.msra.mxu0 %v1954
    %2104 = vmatprep.subr.mxu0 0.0
    %2105 = vmatpush1.msra.mxu0 %v1955
    %2106 = vmatprep.subr.mxu0 0.0
    %2107 = vmatpush1.msra.mxu0 %v1956
    %2108 = vmatprep.subr.mxu0 0.0
    %2109 = vmatpush1.msra.mxu0 %v1957
    %2110 = vmatprep.subr.mxu0 0.0
    %2111 = vmatpush1.msra.mxu0 %v1958
    %2112 = vmatprep.subr.mxu0 0.0
    %2113 = vmatpush1.msra.mxu0 %v1959
    %2114 = vmatprep.subr.mxu0 0.0
    %2115 = vmatpush1.msra.mxu0 %v1960
    %2116 = vmatprep.subr.mxu0 0.0
    %2117 = vmatpush1.msra.mxu0 %v1961
    %2118 = vmatprep.subr.mxu0 0.0
    %2119 = vmatpush1.msra.mxu0 %v1962
    %2120 = vmatprep.subr.mxu0 0.0
    %2121 = vmatpush1.msra.mxu0 %v1963
    %2122 = vmatprep.subr.mxu0 0.0
    %2123 = vmatpush1.msra.mxu0 %v1964
    %2124 = vmatprep.subr.mxu0 0.0
    %2125 = vmatpush1.msra.mxu0 %v1965
    %2126 = vmatprep.subr.mxu0 0.0
    %2127 = vmatpush1.msra.mxu0 %v1966
    %2128 = vmatprep.subr.mxu0 0.0
    %2129 = vmatpush1.msra.mxu0 %v1967
    %2130 = vmatprep.subr.mxu0 0.0
    %2131 = vmatpush1.msra.mxu0 %v1968
    %2132 = vmatprep.subr.mxu0 0.0
    %2133 = vmatpush1.msra.mxu0 %v1969
    %2134 = vmatprep.subr.mxu0 0.0
    %2135 = vmatpush1.msra.mxu0 %v1970
    %2136 = vmatprep.subr.mxu0 0.0
    %2137 = vmatpush1.msra.mxu0 %v1971
    %2138 = vmatprep.subr.mxu0 0.0
    %2139 = vmatpush1.msra.mxu0 %v1972
    %2140 = vmatprep.subr.mxu0 0.0
    %2141 = vmatpush1.msra.mxu0 %v1973
    %2142 = vmatprep.subr.mxu0 0.0
    %2143 = vmatpush1.msra.mxu0 %v1974
    %2144 = vmatprep.subr.mxu0 0.0
    %2145 = vmatpush1.msra.mxu0 %v1975
    %2146 = vmatprep.mubr.f32.mxu0 %v1895
    %2147 = vmatmul.mubr.f32.gmra.mrb[0].mxu0 %v1894
    %v2148 = vpop.f32.mrb[0].mxu0
    %v2149 = vadd.f32 %v2064, %v2148
    %v2150 = vpop.f32.mrb[0].mxu0
    %2151 = vmatprep.mubr.f32.mxu0 %v1900
    %2152 = vmatmul.mubr.f32.gmra.mrb[0].mxu0 %v1899
    %v2153 = vpop.f32.mrb[0].mxu0
    %v2154 = vadd.f32 %v2069, %v2153
    %v2155 = vpop.f32.mrb[0].mxu0
    %2156 = vmatprep.mubr.f32.mxu0 %v1905
    %2157 = vmatmul.mubr.f32.gmra.mrb[0].mxu0 %v1904
    %v2158 = vpop.f32.mrb[0].mxu0
    %v2159 = vadd.f32 %v2074, %v2158
    %v2160 = vpop.f32.mrb[0].mxu0
    %2161 = vmatprep.mubr.f32.mxu0 %v1910
    %2162 = vmatmul.mubr.f32.gmra.mrb[0].mxu0 %v1909
    %v2163 = vpop.f32.mrb[0].mxu0
    %v2164 = vadd.f32 %v2079, %v2163
    %v2165 = vpop.f32.mrb[0].mxu0
    %2166 = vdwg.mxu0
    %2167 = vmatprep.subr.mxu0 0.0
    %2168 = vmatpush1.msra.mxu0 %v1976
    %2169 = vmatprep.subr.mxu0 0.0
    %2170 = vmatpush1.msra.mxu0 %v1977
    %2171 = vmatprep.subr.mxu0 0.0
    %2172 = vmatpush1.msra.mxu0 0.0
    %2173 = vmatprep.subr.mxu0 0.0
    %2174 = vmatpush1.msra.mxu0 0.0
    %2175 = vmatprep.subr.mxu0 0.0
    %2176 = vmatpush1.msra.mxu0 0.0
    %2177 = vmatprep.subr.mxu0 0.0
    %2178 = vmatpush1.msra.mxu0 0.0
    %2179 = vmatprep.subr.mxu0 0.0
    %2180 = vmatpush1.msra.mxu0 0.0
    %2181 = vmatprep.subr.mxu0 0.0
    %2182 = vmatpush1.msra.mxu0 0.0
    %2183 = vmatprep.subr.mxu0 0.0
    %2184 = vmatpush1.msra.mxu0 0.0
    %2185 = vmatprep.subr.mxu0 0.0
    %2186 = vmatpush1.msra.mxu0 0.0
    %2187 = vmatprep.subr.mxu0 0.0
    %2188 = vmatpush1.msra.mxu0 0.0
    %2189 = vmatprep.subr.mxu0 0.0
    %2190 = vmatpush1.msra.mxu0 0.0
    %2191 = vmatprep.subr.mxu0 0.0
    %2192 = vmatpush1.msra.mxu0 0.0
    %2193 = vmatprep.subr.mxu0 0.0
    %2194 = vmatpush1.msra.mxu0 0.0
    %2195 = vmatprep.subr.mxu0 0.0
    %2196 = vmatpush1.msra.mxu0 0.0
    %2197 = vmatprep.subr.mxu0 0.0
    %2198 = vmatpush1.msra.mxu0 0.0
    %2199 = vmatprep.subr.mxu0 0.0
    %2200 = vmatpush1.msra.mxu0 0.0
    %2201 = vmatprep.subr.mxu0 0.0
    %2202 = vmatpush1.msra.mxu0 0.0
    %2203 = vmatprep.subr.mxu0 0.0
    %2204 = vmatpush1.msra.mxu0 0.0
    %2205 = vmatprep.subr.mxu0 0.0
    %2206 = vmatpush1.msra.mxu0 0.0
    %2207 = vmatprep.subr.mxu0 0.0
    %2208 = vmatpush1.msra.mxu0 0.0
    %2209 = vmatprep.subr.mxu0 0.0
    %2210 = vmatpush1.msra.mxu0 0.0
    %2211 = vmatprep.subr.mxu0 0.0
    %2212 = vmatpush1.msra.mxu0 0.0
    %2213 = vmatprep.subr.mxu0 0.0
    %2214 = vmatpush1.msra.mxu0 0.0
    %2215 = vmatprep.subr.mxu0 0.0
    %2216 = vmatpush1.msra.mxu0 0.0
    %2217 = vmatprep.subr.mxu0 0.0
    %2218 = vmatpush1.msra.mxu0 0.0
    %2219 = vmatprep.subr.mxu0 0.0
    %2220 = vmatpush1.msra.mxu0 0.0
    %2221 = vmatprep.subr.mxu0 0.0
    %2222 = vmatpush1.msra.mxu0 0.0
    %2223 = vmatprep.subr.mxu0 0.0
    %2224 = vmatpush1.msra.mxu0 0.0
    %2225 = vmatprep.subr.mxu0 0.0
    %2226 = vmatpush1.msra.mxu0 0.0
    %2227 = vmatprep.subr.mxu0 0.0
    %2228 = vmatpush1.msra.mxu0 0.0
    %2229 = vmatprep.subr.mxu0 0.0
    %2230 = vmatpush1.msra.mxu0 0.0
    %2231 = vmatprep.mubr.f32.mxu0 0.0
    %2232 = vmatmul.mubr.f32.gmra.mrb[0].mxu0 %v1986
    %v2233 = vpop.f32.mrb[0].mxu0
    %v2234 = vadd.f32 %v2149, %v2233
    %v2235 = vpop.f32.mrb[0].mxu0
    %2236 = vmatprep.mubr.f32.mxu0 0.0
    %2237 = vmatmul.mubr.f32.gmra.mrb[0].mxu0 %v1989
    %v2238 = vpop.f32.mrb[0].mxu0
    %v2239 = vadd.f32 %v2154, %v2238
    %v2240 = vpop.f32.mrb[0].mxu0
    %2241 = vmatprep.mubr.f32.mxu0 0.0
    %2242 = vmatmul.mubr.f32.gmra.mrb[0].mxu0 %v1992
    %v2243 = vpop.f32.mrb[0].mxu0
    %v2244 = vadd.f32 %v2159, %v2243
    %v2245 = vpop.f32.mrb[0].mxu0
    %2246 = vmatprep.mubr.f32.mxu0 0.0
    %2247 = vmatmul.mubr.f32.gmra.mrb[0].mxu0 %v1995
    %v2248 = vpop.f32.mrb[0].mxu0
    %v2249 = vadd.f32 %v2164, %v2248
    %v2250 = vpop.f32.mrb[0].mxu0
    %2251 = vdwg.mxu0
    %2252 = vst.msk [vmem:[#allocation4] sm:$0xff] %vm494, %v2234
    %2253 = vst.msk [vmem:[#allocation4 + $0x8] sm:$0xff] %vm494, %v2239
    %2254 = vst.msk [vmem:[#allocation4 + $0x10] sm:$0xff] %vm494, %v2244
    %2255 = vst.msk [vmem:[#allocation4 + $0x18] sm:$0xff] %vm494, %v2249
    // Predicated region
    $region38: #{tpu_custom_call.1} parent=1 // pred_check
      _
    $region39: #{tpu_custom_call.1} parent=1 // pred_check_branch
      %2257 = sbr.rel (0) target = $region41
    $region40: #{tpu_custom_call.1} parent=1 // pred_region
      %s2259 = ssub.s32 512, 512
      %2260 = vsyncadd [#allocation5], %s2259
      %s2261 = sshll.u32 [#allocation4], 4
      %s2262 = int_to_ptr.vmem [resolvable:$true] %s2261
      %2267 = dma.vmem_to_hbm [thread:$0]  %s2262, 512, %s9, [#allocation5], 128, 128, 8
    $region41: #{tpu_custom_call.1} parent=1 // pred_fallthru
      _
    // Predicated region
    $region42: #{tpu_custom_call.1} parent=1 // pred_check
      _
    $region43: #{tpu_custom_call.1} parent=1 // pred_check_branch
      %2269 = sbr.rel (0) target = $region45
    $region44: #{tpu_custom_call.1} parent=1 // pred_region
      %2270 = dma.done [#allocation5], 512
    $region45: #{tpu_custom_call.1} parent=1 // pred_fallthru
      _
    %2271 = vsyncpa [#allocation5], 1

</llo_original>
